<compile_context>
chip_gen: v6e
topology: v6e:2x2x1
jax: 0.10.0
libtpu: 0.0.40
codegen_flags: <defaults>
</compile_context>

<pallas_src>
import functools

import jax
import jax.numpy as jnp
from jax import lax
from jax.experimental import pallas as pl
from jax.experimental.pallas import tpu as pltpu

ENC_LAYER = 2  # output of the 3rd Linear+Sigmoid is `encoded`


def _round_up(x, m):
    return ((x + m - 1) // m) * m


# --------------------------------------------------------------------------
# Kernel
# --------------------------------------------------------------------------
def _make_kernel(num_layers, enc_layer, compute_dtype):
    def kernel(*refs):
        x_ref = refs[0]                                   # (TB, F_in) batch-major tile
        w_refs = refs[1:1 + num_layers]                   # per-layer (out_i, in_i)
        b_refs = refs[1 + num_layers:1 + 2 * num_layers]  # per-layer (out_i, 1)
        dec_ref = refs[1 + 2 * num_layers]                # (F_out, TB)
        enc_ref = refs[2 + 2 * num_layers]                # (H3, TB)

        # Layer 0: "NT" contraction (both contracting dims minor) consumes the
        # batch-major x tile directly; the implicit transpose of the x tile is
        # handled on the XLU (free slot here).  Result is feature-major
        # (out0, TB): features on sublanes, batch on the 128-wide lane axis,
        # so every later matmul / sigmoid / store is lane-dense.
        z = lax.dot_general(
            w_refs[0][...], x_ref[...],
            dimension_numbers=(((1,), (1,)), ((), ())),
            precision=lax.Precision.HIGHEST,
            preferred_element_type=jnp.float32)
        h = jax.nn.sigmoid(z + b_refs[0][...])            # f32 logistic on EUP

        for i in range(1, num_layers):                    # static unroll (6 layers)
            z = jnp.dot(w_refs[i][...], h.astype(compute_dtype),
                        precision=lax.Precision.HIGHEST,
                        preferred_element_type=jnp.float32)
            h = jax.nn.sigmoid(z + b_refs[i][...])        # exact (out_i, TB): no
            if i == enc_layer:                            # padded-row EUP waste
                enc_ref[...] = h.astype(enc_ref.dtype)

        dec_ref[...] = h.astype(dec_ref.dtype)

    return kernel


# --------------------------------------------------------------------------
# Parameter packing (once per model, off the per-batch hot path)
# --------------------------------------------------------------------------
def pack_params(params, compute_dtype=jnp.float32):
    """PyTorch-layout params (W:(out,in), b:(out,)) -> kernel inputs.

    One exact-shape array per layer (no uniform (L, Pmax, Pmax) slab), biases
    as (out, 1) columns so they broadcast over the lane (batch) axis of the
    feature-major activation tiles.  compute_dtype=bfloat16 is supported for
    v6e/v7x HBM savings (accumulation stays f32); the tight tolerances in the
    demo assume float32.
    """
    weights = tuple(jnp.asarray(w, compute_dtype) for (w, _) in params)
    biases = tuple(jnp.asarray(b, jnp.float32).reshape(-1, 1) for (_, b) in params)
    return weights, biases


# --------------------------------------------------------------------------
# Forward wrapper
# --------------------------------------------------------------------------
@functools.partial(jax.jit, static_argnames=("batch_tile",))
def autoencoder_forward(x, weights, biases, *, batch_tile=2048):
    """x: (B, F) float.  Returns (decoded, encoded) as float32 arrays of shape
    (B, F) and (B, F//8), matching the PyTorch module's forward."""
    num_layers = len(weights)
    f_in = weights[0].shape[1]
    h3 = weights[ENC_LAYER].shape[0]
    f_out = weights[-1].shape[0]
    compute_dtype = weights[0].dtype

    b_sz = x.shape[0]
    assert x.shape[1] == f_in

    # --- batch tile selection ---------------------------------------------
    # Large lane-dense tiles amortize the ~0.35 us per-grid-step overhead;
    # keep >= 2 tiles when the batch allows so v7x's second TensorCore gets
    # work; collapse to a single step for small batches (single-TC chips).
    b128 = _round_up(max(b_sz, 1), 128)
    if b128 <= 128:
        tb = 128
    else:
        tb = min(batch_tile, _round_up(pl.cdiv(b128, 2), 128))
    n_tiles = pl.cdiv(b_sz, tb)
    b_pad = n_tiles * tb

    # Pad the batch only when ragged (zero extra HBM traffic for aligned
    # batches); the old transposed + zero-padded x_t pre-pass is gone.
    x = x.astype(compute_dtype)
    if b_pad != b_sz:
        x = jnp.pad(x, ((0, b_pad - b_sz), (0, 0)))

    kernel = _make_kernel(num_layers, ENC_LAYER, compute_dtype)

    resident = lambda i: (0, 0)  # constant index map -> block stays VMEM-resident
    in_specs = (
        [pl.BlockSpec((tb, f_in), lambda i: (i, 0))]           # x tile per step
        + [pl.BlockSpec(w.shape, resident) for w in weights]   # weights resident
        + [pl.BlockSpec(b.shape, resident) for b in biases]    # biases resident
    )

    dec_t, enc_t = pl.pallas_call(
        kernel,
        out_shape=(
            jax.ShapeDtypeStruct((f_out, b_pad), jnp.float32),  # decoded^T
            jax.ShapeDtypeStruct((h3, b_pad), jnp.float32),     # encoded^T
        ),
        grid=(n_tiles,),
        in_specs=in_specs,
        out_specs=(
            pl.BlockSpec((f_out, tb), lambda i: (0, i)),
            pl.BlockSpec((h3, tb), lambda i: (0, i)),
        ),
        compiler_params=pltpu.CompilerParams(
            dimension_semantics=("parallel",),   # megacore batch split on v7x
        ),
    )(x, *weights, *biases)

    # Feature-major, lane-dense stores in the kernel; the slice + transpose
    # back to (B, F) happens here, inside the same jit.
    decoded = dec_t[:, :b_sz].T
    encoded = enc_t[:, :b_sz].T
    return decoded, encoded


# --------------------------------------------------------------------------
# Parameter init + pure-JAX reference (mirror of the PyTorch module)
# --------------------------------------------------------------------------
def init_params(key, input_features):
    """nn.Linear-style init: U(-1/sqrt(fan_in), 1/sqrt(fan_in)); W:(out,in)."""
    h1 = input_features // 2
    h2 = input_features // 4
    h3 = input_features // 8
    dims = [
        (input_features, h1), (h1, h2), (h2, h3),    # encoder
        (h3, h2), (h2, h1), (h1, input_features),    # decoder
    ]
    params = []
    for fan_in, fan_out in dims:
        key, kw, kb = jax.random.split(key, 3)
        bound = 1.0 / (fan_in ** 0.5)
        w = jax.random.uniform(kw, (fan_out, fan_in), jnp.float32, -bound, bound)
        b = jax.random.uniform(kb, (fan_out,), jnp.float32, -bound, bound)
        params.append((w, b))
    return params


def reference_forward(x, params):
    h = x
    outs = []
    for (w, b) in params:
        z = jnp.dot(h, w.T, precision=lax.Precision.HIGHEST) + b
        h = jax.nn.sigmoid(z)
        outs.append(h)
    return outs[5], outs[2]   # decoded, encoded


# --------------------------------------------------------------------------
if __name__ == "__main__":
    key = jax.random.PRNGKey(0)
    input_features = 64          # -> hidden layers 32, 16, 8

    key, kp = jax.random.split(key)
    params = init_params(kp, input_features)
    weights, biases = pack_params(params)        # packed once, off hot path

    # --- small batch: single grid step ------------------------------------
    key, kx = jax.random.split(key)
    x_small = jax.random.uniform(kx, (8, input_features), jnp.float32)
    dec, enc = autoencoder_forward(x_small, weights, biases)
    dec, enc = jax.block_until_ready((dec, enc))

    dec_ref, enc_ref = reference_forward(x_small, params)
    assert dec.shape == (8, input_features)
    assert enc.shape == (8, input_features // 8)
    assert jnp.allclose(dec, dec_ref, atol=2e-5, rtol=2e-5), \
        float(jnp.abs(dec - dec_ref).max())
    assert jnp.allclose(enc, enc_ref, atol=2e-5, rtol=2e-5), \
        float(jnp.abs(enc - enc_ref).max())

    # --- ragged batch: exercises >=2 parallel tiles + zero-padded tail -----
    key, kx2 = jax.random.split(key)
    x_big = jax.random.uniform(kx2, (300, input_features), jnp.float32)
    dec_b, enc_b = autoencoder_forward(x_big, weights, biases)
    dec_b, enc_b = jax.block_until_ready((dec_b, enc_b))

    dec_ref_b, enc_ref_b = reference_forward(x_big, params)
    assert dec_b.shape == (300, input_features)
    assert enc_b.shape == (300, input_features // 8)
    assert jnp.allclose(dec_b, dec_ref_b, atol=2e-5, rtol=2e-5), \
        float(jnp.abs(dec_b - dec_ref_b).max())
    assert jnp.allclose(enc_b, enc_ref_b, atol=2e-5, rtol=2e-5), \
        float(jnp.abs(enc_b - enc_ref_b).max())

    print("KERNEL_OK")
</pallas_src>

<mosaic_0001>
module attributes {stable_mosaic.version = 11 : i64} {
  func.func @kernel(%arg0: i32, %arg1: memref<128x64xf32, #tpu.memory_space<vmem>>, %arg2: memref<32x64xf32, #tpu.memory_space<vmem>>, %arg3: memref<16x32xf32, #tpu.memory_space<vmem>>, %arg4: memref<8x16xf32, #tpu.memory_space<vmem>>, %arg5: memref<16x8xf32, #tpu.memory_space<vmem>>, %arg6: memref<32x16xf32, #tpu.memory_space<vmem>>, %arg7: memref<64x32xf32, #tpu.memory_space<vmem>>, %arg8: memref<32x1xf32, #tpu.memory_space<vmem>>, %arg9: memref<16x1xf32, #tpu.memory_space<vmem>>, %arg10: memref<8x1xf32, #tpu.memory_space<vmem>>, %arg11: memref<16x1xf32, #tpu.memory_space<vmem>>, %arg12: memref<32x1xf32, #tpu.memory_space<vmem>>, %arg13: memref<64x1xf32, #tpu.memory_space<vmem>>, %arg14: memref<64x128xf32, #tpu.memory_space<vmem>>, %arg15: memref<8x128xf32, #tpu.memory_space<vmem>>) attributes {dimension_semantics = [#tpu.dimension_semantics<parallel>], iteration_bounds = array<i64: 1>, scalar_prefetch = 0 : i64, scratch_operands = 0 : i64, tpu.core_type = #tpu.core_type<tc>, window_params = [{transform_indices = @transform_0, window_bounds = array<i64: 128, 64>}, {pipeline_mode = #tpu.pipeline_mode<synchronous>, transform_indices = @transform_1, window_bounds = array<i64: 32, 64>}, {pipeline_mode = #tpu.pipeline_mode<synchronous>, transform_indices = @transform_2, window_bounds = array<i64: 16, 32>}, {pipeline_mode = #tpu.pipeline_mode<synchronous>, transform_indices = @transform_3, window_bounds = array<i64: 8, 16>}, {pipeline_mode = #tpu.pipeline_mode<synchronous>, transform_indices = @transform_4, window_bounds = array<i64: 16, 8>}, {pipeline_mode = #tpu.pipeline_mode<synchronous>, transform_indices = @transform_5, window_bounds = array<i64: 32, 16>}, {pipeline_mode = #tpu.pipeline_mode<synchronous>, transform_indices = @transform_6, window_bounds = array<i64: 64, 32>}, {pipeline_mode = #tpu.pipeline_mode<synchronous>, transform_indices = @transform_7, window_bounds = array<i64: 32, 1>}, {pipeline_mode = #tpu.pipeline_mode<synchronous>, transform_indices = @transform_8, window_bounds = array<i64: 16, 1>}, {pipeline_mode = #tpu.pipeline_mode<synchronous>, transform_indices = @transform_9, window_bounds = array<i64: 8, 1>}, {pipeline_mode = #tpu.pipeline_mode<synchronous>, transform_indices = @transform_10, window_bounds = array<i64: 16, 1>}, {pipeline_mode = #tpu.pipeline_mode<synchronous>, transform_indices = @transform_11, window_bounds = array<i64: 32, 1>}, {pipeline_mode = #tpu.pipeline_mode<synchronous>, transform_indices = @transform_12, window_bounds = array<i64: 64, 1>}, {transform_indices = @transform_13, window_bounds = array<i64: 64, 128>}, {transform_indices = @transform_14, window_bounds = array<i64: 8, 128>}]} {
    %c0 = arith.constant 0 : index
    %c0_0 = arith.constant 0 : index
    %0 = vector.load %arg2[%c0, %c0_0] : memref<32x64xf32, #tpu.memory_space<vmem>>, vector<32x64xf32>
    %c0_1 = arith.constant 0 : index
    %c0_2 = arith.constant 0 : index
    %1 = vector.load %arg1[%c0_1, %c0_2] : memref<128x64xf32, #tpu.memory_space<vmem>>, vector<128x64xf32>
    %cst = arith.constant dense<0.000000e+00> : vector<32x128xf32>
    %2 = tpu.matmul %0, %1, %cst {dimension_numbers = #tpu.dot_dimension_numbers<[1], [1], [0], [0], [0, 0, 1, 0], [], []>, precision = #tpu.contract_precision<fp32>} : vector<32x64xf32>, vector<128x64xf32>, vector<32x128xf32> -> vector<32x128xf32>
    %c0_3 = arith.constant 0 : index
    %c0_4 = arith.constant 0 : index
    %3 = vector.load %arg8[%c0_3, %c0_4] : memref<32x1xf32, #tpu.memory_space<vmem>>, vector<32x1xf32>
    %4 = vector.broadcast %3 : vector<32x1xf32> to vector<32x128xf32>
    %5 = arith.addf %2, %4 : vector<32x128xf32>
    %6 = arith.negf %5 : vector<32x128xf32>
    %7 = math.exp %6 : vector<32x128xf32>
    %cst_5 = arith.constant 1.000000e+00 : f32
    %8 = vector.broadcast %cst_5 : f32 to vector<32x128xf32>
    %9 = arith.addf %8, %7 : vector<32x128xf32>
    %10 = arith.divf %8, %9 : vector<32x128xf32>
    %c0_6 = arith.constant 0 : index
    %c0_7 = arith.constant 0 : index
    %11 = vector.load %arg3[%c0_6, %c0_7] : memref<16x32xf32, #tpu.memory_space<vmem>>, vector<16x32xf32>
    %cst_8 = arith.constant dense<0.000000e+00> : vector<16x128xf32>
    %12 = tpu.matmul %11, %10, %cst_8 {dimension_numbers = #tpu.dot_dimension_numbers<[1], [0], [0], [1], [0, 0, 1, 1], [], []>, precision = #tpu.contract_precision<fp32>} : vector<16x32xf32>, vector<32x128xf32>, vector<16x128xf32> -> vector<16x128xf32>
    %c0_9 = arith.constant 0 : index
    %c0_10 = arith.constant 0 : index
    %13 = vector.load %arg9[%c0_9, %c0_10] : memref<16x1xf32, #tpu.memory_space<vmem>>, vector<16x1xf32>
    %14 = vector.broadcast %13 : vector<16x1xf32> to vector<16x128xf32>
    %15 = arith.addf %12, %14 : vector<16x128xf32>
    %16 = arith.negf %15 : vector<16x128xf32>
    %17 = math.exp %16 : vector<16x128xf32>
    %cst_11 = arith.constant 1.000000e+00 : f32
    %18 = vector.broadcast %cst_11 : f32 to vector<16x128xf32>
    %19 = arith.addf %18, %17 : vector<16x128xf32>
    %20 = arith.divf %18, %19 : vector<16x128xf32>
    %c0_12 = arith.constant 0 : index
    %c0_13 = arith.constant 0 : index
    %21 = vector.load %arg4[%c0_12, %c0_13] : memref<8x16xf32, #tpu.memory_space<vmem>>, vector<8x16xf32>
    %cst_14 = arith.constant dense<0.000000e+00> : vector<8x128xf32>
    %22 = tpu.matmul %21, %20, %cst_14 {dimension_numbers = #tpu.dot_dimension_numbers<[1], [0], [0], [1], [0, 0, 1, 1], [], []>, precision = #tpu.contract_precision<fp32>} : vector<8x16xf32>, vector<16x128xf32>, vector<8x128xf32> -> vector<8x128xf32>
    %c0_15 = arith.constant 0 : index
    %c0_16 = arith.constant 0 : index
    %23 = vector.load %arg10[%c0_15, %c0_16] : memref<8x1xf32, #tpu.memory_space<vmem>>, vector<8x1xf32>
    %24 = vector.broadcast %23 : vector<8x1xf32> to vector<8x128xf32>
    %25 = arith.addf %22, %24 : vector<8x128xf32>
    %26 = arith.negf %25 : vector<8x128xf32>
    %27 = math.exp %26 : vector<8x128xf32>
    %cst_17 = arith.constant 1.000000e+00 : f32
    %28 = vector.broadcast %cst_17 : f32 to vector<8x128xf32>
    %29 = arith.addf %28, %27 : vector<8x128xf32>
    %30 = arith.divf %28, %29 : vector<8x128xf32>
    %c0_18 = arith.constant 0 : index
    %c0_19 = arith.constant 0 : index
    %31 = vector.load %arg15[%c0_18, %c0_19] : memref<8x128xf32, #tpu.memory_space<vmem>>, vector<8x128xf32>
    tpu.vector_store %arg15[%c0_18, %c0_19], %30 {strides = array<i32>} : memref<8x128xf32, #tpu.memory_space<vmem>>, vector<8x128xf32>,
    %c0_20 = arith.constant 0 : index
    %c0_21 = arith.constant 0 : index
    %32 = vector.load %arg5[%c0_20, %c0_21] : memref<16x8xf32, #tpu.memory_space<vmem>>, vector<16x8xf32>
    %cst_22 = arith.constant dense<0.000000e+00> : vector<16x128xf32>
    %33 = tpu.matmul %32, %30, %cst_22 {dimension_numbers = #tpu.dot_dimension_numbers<[1], [0], [0], [1], [0, 0, 1, 1], [], []>, precision = #tpu.contract_precision<fp32>} : vector<16x8xf32>, vector<8x128xf32>, vector<16x128xf32> -> vector<16x128xf32>
    %c0_23 = arith.constant 0 : index
    %c0_24 = arith.constant 0 : index
    %34 = vector.load %arg11[%c0_23, %c0_24] : memref<16x1xf32, #tpu.memory_space<vmem>>, vector<16x1xf32>
    %35 = vector.broadcast %34 : vector<16x1xf32> to vector<16x128xf32>
    %36 = arith.addf %33, %35 : vector<16x128xf32>
    %37 = arith.negf %36 : vector<16x128xf32>
    %38 = math.exp %37 : vector<16x128xf32>
    %cst_25 = arith.constant 1.000000e+00 : f32
    %39 = vector.broadcast %cst_25 : f32 to vector<16x128xf32>
    %40 = arith.addf %39, %38 : vector<16x128xf32>
    %41 = arith.divf %39, %40 : vector<16x128xf32>
    %c0_26 = arith.constant 0 : index
    %c0_27 = arith.constant 0 : index
    %42 = vector.load %arg6[%c0_26, %c0_27] : memref<32x16xf32, #tpu.memory_space<vmem>>, vector<32x16xf32>
    %cst_28 = arith.constant dense<0.000000e+00> : vector<32x128xf32>
    %43 = tpu.matmul %42, %41, %cst_28 {dimension_numbers = #tpu.dot_dimension_numbers<[1], [0], [0], [1], [0, 0, 1, 1], [], []>, precision = #tpu.contract_precision<fp32>} : vector<32x16xf32>, vector<16x128xf32>, vector<32x128xf32> -> vector<32x128xf32>
    %c0_29 = arith.constant 0 : index
    %c0_30 = arith.constant 0 : index
    %44 = vector.load %arg12[%c0_29, %c0_30] : memref<32x1xf32, #tpu.memory_space<vmem>>, vector<32x1xf32>
    %45 = vector.broadcast %44 : vector<32x1xf32> to vector<32x128xf32>
    %46 = arith.addf %43, %45 : vector<32x128xf32>
    %47 = arith.negf %46 : vector<32x128xf32>
    %48 = math.exp %47 : vector<32x128xf32>
    %cst_31 = arith.constant 1.000000e+00 : f32
    %49 = vector.broadcast %cst_31 : f32 to vector<32x128xf32>
    %50 = arith.addf %49, %48 : vector<32x128xf32>
    %51 = arith.divf %49, %50 : vector<32x128xf32>
    %c0_32 = arith.constant 0 : index
    %c0_33 = arith.constant 0 : index
    %52 = vector.load %arg7[%c0_32, %c0_33] : memref<64x32xf32, #tpu.memory_space<vmem>>, vector<64x32xf32>
    %cst_34 = arith.constant dense<0.000000e+00> : vector<64x128xf32>
    %53 = tpu.matmul %52, %51, %cst_34 {dimension_numbers = #tpu.dot_dimension_numbers<[1], [0], [0], [1], [0, 0, 1, 1], [], []>, precision = #tpu.contract_precision<fp32>} : vector<64x32xf32>, vector<32x128xf32>, vector<64x128xf32> -> vector<64x128xf32>
    %c0_35 = arith.constant 0 : index
    %c0_36 = arith.constant 0 : index
    %54 = vector.load %arg13[%c0_35, %c0_36] : memref<64x1xf32, #tpu.memory_space<vmem>>, vector<64x1xf32>
    %55 = vector.broadcast %54 : vector<64x1xf32> to vector<64x128xf32>
    %56 = arith.addf %53, %55 : vector<64x128xf32>
    %57 = arith.negf %56 : vector<64x128xf32>
    %58 = math.exp %57 : vector<64x128xf32>
    %cst_37 = arith.constant 1.000000e+00 : f32
    %59 = vector.broadcast %cst_37 : f32 to vector<64x128xf32>
    %60 = arith.addf %59, %58 : vector<64x128xf32>
    %61 = arith.divf %59, %60 : vector<64x128xf32>
    %c0_38 = arith.constant 0 : index
    %c0_39 = arith.constant 0 : index
    %62 = vector.load %arg14[%c0_38, %c0_39] : memref<64x128xf32, #tpu.memory_space<vmem>>, vector<64x128xf32>
    tpu.vector_store %arg14[%c0_38, %c0_39], %61 {strides = array<i32>} : memref<64x128xf32, #tpu.memory_space<vmem>>, vector<64x128xf32>,
    return
  }
  func.func @transform_0(%arg0: i32) -> (i32, i32) {
    %c0_i32 = arith.constant 0 : i32
    %c0_i32_0 = arith.constant 0 : i32
    return %arg0, %c0_i32 : i32, i32
  }
  func.func @transform_1(%arg0: i32) -> (i32, i32) {
    %c0_i32 = arith.constant 0 : i32
    %c0_i32_0 = arith.constant 0 : i32
    %c0_i32_1 = arith.constant 0 : i32
    return %c0_i32, %c0_i32_0 : i32, i32
  }
  func.func @transform_2(%arg0: i32) -> (i32, i32) {
    %c0_i32 = arith.constant 0 : i32
    %c0_i32_0 = arith.constant 0 : i32
    %c0_i32_1 = arith.constant 0 : i32
    return %c0_i32, %c0_i32_0 : i32, i32
  }
  func.func @transform_3(%arg0: i32) -> (i32, i32) {
    %c0_i32 = arith.constant 0 : i32
    %c0_i32_0 = arith.constant 0 : i32
    %c0_i32_1 = arith.constant 0 : i32
    return %c0_i32, %c0_i32_0 : i32, i32
  }
  func.func @transform_4(%arg0: i32) -> (i32, i32) {
    %c0_i32 = arith.constant 0 : i32
    %c0_i32_0 = arith.constant 0 : i32
    %c0_i32_1 = arith.constant 0 : i32
    return %c0_i32, %c0_i32_0 : i32, i32
  }
  func.func @transform_5(%arg0: i32) -> (i32, i32) {
    %c0_i32 = arith.constant 0 : i32
    %c0_i32_0 = arith.constant 0 : i32
    %c0_i32_1 = arith.constant 0 : i32
    return %c0_i32, %c0_i32_0 : i32, i32
  }
  func.func @transform_6(%arg0: i32) -> (i32, i32) {
    %c0_i32 = arith.constant 0 : i32
    %c0_i32_0 = arith.constant 0 : i32
    %c0_i32_1 = arith.constant 0 : i32
    return %c0_i32, %c0_i32_0 : i32, i32
  }
  func.func @transform_7(%arg0: i32) -> (i32, i32) {
    %c0_i32 = arith.constant 0 : i32
    %c0_i32_0 = arith.constant 0 : i32
    %c0_i32_1 = arith.constant 0 : i32
    return %c0_i32, %c0_i32_0 : i32, i32
  }
  func.func @transform_8(%arg0: i32) -> (i32, i32) {
    %c0_i32 = arith.constant 0 : i32
    %c0_i32_0 = arith.constant 0 : i32
    %c0_i32_1 = arith.constant 0 : i32
    return %c0_i32, %c0_i32_0 : i32, i32
  }
  func.func @transform_9(%arg0: i32) -> (i32, i32) {
    %c0_i32 = arith.constant 0 : i32
    %c0_i32_0 = arith.constant 0 : i32
    %c0_i32_1 = arith.constant 0 : i32
    return %c0_i32, %c0_i32_0 : i32, i32
  }
  func.func @transform_10(%arg0: i32) -> (i32, i32) {
    %c0_i32 = arith.constant 0 : i32
    %c0_i32_0 = arith.constant 0 : i32
    %c0_i32_1 = arith.constant 0 : i32
    return %c0_i32, %c0_i32_0 : i32, i32
  }
  func.func @transform_11(%arg0: i32) -> (i32, i32) {
    %c0_i32 = arith.constant 0 : i32
    %c0_i32_0 = arith.constant 0 : i32
    %c0_i32_1 = arith.constant 0 : i32
    return %c0_i32, %c0_i32_0 : i32, i32
  }
  func.func @transform_12(%arg0: i32) -> (i32, i32) {
    %c0_i32 = arith.constant 0 : i32
    %c0_i32_0 = arith.constant 0 : i32
    %c0_i32_1 = arith.constant 0 : i32
    return %c0_i32, %c0_i32_0 : i32, i32
  }
  func.func @transform_13(%arg0: i32) -> (i32, i32) {
    %c0_i32 = arith.constant 0 : i32
    %c0_i32_0 = arith.constant 0 : i32
    return %c0_i32, %arg0 : i32, i32
  }
  func.func @transform_14(%arg0: i32) -> (i32, i32) {
    %c0_i32 = arith.constant 0 : i32
    %c0_i32_0 = arith.constant 0 : i32
    return %c0_i32, %arg0 : i32, i32
  }
}

</mosaic_0001>

<llo_original>
// kernel: autoencoder_forward.1
$region0: #{autoencoder_forward.1}
  #allocation0 [shape = 'u32[]', space=smem, size = 0x4, offset = 0x4, fixed_abs, tag = 'smem constant byte address 0x4 - core index']
  #allocation1 [shape = 'u32[144,128]{1,0:T(1,128)}', space=vmem, size = 0x12000, scoped, tag = 'internal scratch']
  %s0 = inlined_call_operand.vmem [shape: f32[128,64], index: 0, kind: input, shape index: {}]
  %s1 = inlined_call_operand.vmem [shape: f32[32,64], index: 1, kind: input, shape index: {}]
  %s2 = inlined_call_operand.vmem [shape: f32[16,32], index: 2, kind: input, shape index: {}]
  %s3 = inlined_call_operand.vmem [shape: f32[8,16], index: 3, kind: input, shape index: {}]
  %s4 = inlined_call_operand.vmem [shape: f32[16,8], index: 4, kind: input, shape index: {}]
  %s5 = inlined_call_operand.vmem [shape: f32[32,16], index: 5, kind: input, shape index: {}]
  %s6 = inlined_call_operand.vmem [shape: f32[64,32], index: 6, kind: input, shape index: {}]
  %s7 = inlined_call_operand.vmem [shape: f32[32,1], index: 7, kind: input, shape index: {}]
  %s8 = inlined_call_operand.vmem [shape: f32[16,1], index: 8, kind: input, shape index: {}]
  %s9 = inlined_call_operand.vmem [shape: f32[8,1], index: 9, kind: input, shape index: {}]
  %s10 = inlined_call_operand.vmem [shape: f32[16,1], index: 10, kind: input, shape index: {}]
  %s11 = inlined_call_operand.vmem [shape: f32[32,1], index: 11, kind: input, shape index: {}]
  %s12 = inlined_call_operand.vmem [shape: f32[64,1], index: 12, kind: input, shape index: {}]
  %s13 = inlined_call_operand.vmem [shape: f32[64,128], index: 13, kind: output, shape index: {0}]
  %s14 = inlined_call_operand.vmem [shape: f32[8,128], index: 14, kind: output, shape index: {1}]
  %15 = xla_tuple %s13, %s14
  %s16 = sld [smem:[#allocation0]]
  $region70: #{autoencoder_forward.1} parent=0
    _
  %s18 = ssub.s32 1, %s16
  %s19 = scalar_select 0, %s18, %s16
  // Predicated region
  $region2: #{autoencoder_forward.1} parent=0 // pred_check
    _
  $region3: #{autoencoder_forward.1} parent=0 // pred_check_branch
    %21 = sbr.rel (0) target = $region5
  $region4: #{autoencoder_forward.1} parent=0 // pred_region
    _
  $region5: #{autoencoder_forward.1} parent=0 // pred_fallthru
    _
  // Predicated region
  $region6: #{autoencoder_forward.1} parent=0 // pred_check
    _
  $region7: #{autoencoder_forward.1} parent=0 // pred_check_branch
    %23 = sbr.rel (0) target = $region9
  $region8: #{autoencoder_forward.1} parent=0 // pred_region
    _
  $region9: #{autoencoder_forward.1} parent=0 // pred_fallthru
    _
  // Predicated region
  $region10: #{autoencoder_forward.1} parent=0 // pred_check
    _
  $region11: #{autoencoder_forward.1} parent=0 // pred_check_branch
    %25 = sbr.rel (0) target = $region13
  $region12: #{autoencoder_forward.1} parent=0 // pred_region
    _
  $region13: #{autoencoder_forward.1} parent=0 // pred_fallthru
    _
  // Predicated region
  $region14: #{autoencoder_forward.1} parent=0 // pred_check
    _
  $region15: #{autoencoder_forward.1} parent=0 // pred_check_branch
    %27 = sbr.rel (0) target = $region17
  $region16: #{autoencoder_forward.1} parent=0 // pred_region
    _
  $region17: #{autoencoder_forward.1} parent=0 // pred_fallthru
    _
  // Predicated region
  $region18: #{autoencoder_forward.1} parent=0 // pred_check
    _
  $region19: #{autoencoder_forward.1} parent=0 // pred_check_branch
    %29 = sbr.rel (0) target = $region21
  $region20: #{autoencoder_forward.1} parent=0 // pred_region
    _
  $region21: #{autoencoder_forward.1} parent=0 // pred_fallthru
    _
  // Predicated region
  $region22: #{autoencoder_forward.1} parent=0 // pred_check
    _
  $region23: #{autoencoder_forward.1} parent=0 // pred_check_branch
    %31 = sbr.rel (0) target = $region25
  $region24: #{autoencoder_forward.1} parent=0 // pred_region
    _
  $region25: #{autoencoder_forward.1} parent=0 // pred_fallthru
    _
  // Predicated region
  $region26: #{autoencoder_forward.1} parent=0 // pred_check
    _
  $region27: #{autoencoder_forward.1} parent=0 // pred_check_branch
    %33 = sbr.rel (0) target = $region29
  $region28: #{autoencoder_forward.1} parent=0 // pred_region
    _
  $region29: #{autoencoder_forward.1} parent=0 // pred_fallthru
    _
  // Predicated region
  $region30: #{autoencoder_forward.1} parent=0 // pred_check
    _
  $region31: #{autoencoder_forward.1} parent=0 // pred_check_branch
    %35 = sbr.rel (0) target = $region33
  $region32: #{autoencoder_forward.1} parent=0 // pred_region
    _
  $region33: #{autoencoder_forward.1} parent=0 // pred_fallthru
    _
  // Predicated region
  $region34: #{autoencoder_forward.1} parent=0 // pred_check
    _
  $region35: #{autoencoder_forward.1} parent=0 // pred_check_branch
    %37 = sbr.rel (0) target = $region37
  $region36: #{autoencoder_forward.1} parent=0 // pred_region
    _
  $region37: #{autoencoder_forward.1} parent=0 // pred_fallthru
    _
  // Predicated region
  $region38: #{autoencoder_forward.1} parent=0 // pred_check
    _
  $region39: #{autoencoder_forward.1} parent=0 // pred_check_branch
    %39 = sbr.rel (0) target = $region41
  $region40: #{autoencoder_forward.1} parent=0 // pred_region
    _
  $region41: #{autoencoder_forward.1} parent=0 // pred_fallthru
    _
  // Predicated region
  $region42: #{autoencoder_forward.1} parent=0 // pred_check
    _
  $region43: #{autoencoder_forward.1} parent=0 // pred_check_branch
    %41 = sbr.rel (0) target = $region45
  $region44: #{autoencoder_forward.1} parent=0 // pred_region
    _
  $region45: #{autoencoder_forward.1} parent=0 // pred_fallthru
    _
  // Predicated region
  $region46: #{autoencoder_forward.1} parent=0 // pred_check
    _
  $region47: #{autoencoder_forward.1} parent=0 // pred_check_branch
    %43 = sbr.rel (0) target = $region49
  $region48: #{autoencoder_forward.1} parent=0 // pred_region
    _
  $region49: #{autoencoder_forward.1} parent=0 // pred_fallthru
    _
  // Predicated region
  $region50: #{autoencoder_forward.1} parent=0 // pred_check
    _
  $region51: #{autoencoder_forward.1} parent=0 // pred_check_branch
    %45 = sbr.rel (0) target = $region53
  $region52: #{autoencoder_forward.1} parent=0 // pred_region
    _
  $region53: #{autoencoder_forward.1} parent=0 // pred_fallthru
    _
  %v46 = vld [vmem:[%s1] sm:$0xff]
  %v47 = vld [vmem:[%s1 + $0x8] sm:$0xff]
  %v48 = vld [vmem:[%s1 + $0x10] sm:$0xff]
  %v49 = vld [vmem:[%s1 + $0x18] sm:$0xff]
  %v50 = vld [vmem:[%s0] sm:$0xff]
  %v51 = vld [vmem:[%s0 + $0x8] sm:$0xff]
  %v52 = vld [vmem:[%s0 + $0x10] sm:$0xff]
  %v53 = vld [vmem:[%s0 + $0x18] sm:$0xff]
  %v54 = vld [vmem:[%s0 + $0x20] sm:$0xff]
  %v55 = vld [vmem:[%s0 + $0x28] sm:$0xff]
  %v56 = vld [vmem:[%s0 + $0x30] sm:$0xff]
  %v57 = vld [vmem:[%s0 + $0x38] sm:$0xff]
  %v58 = vld [vmem:[%s0 + $0x40] sm:$0xff]
  %v59 = vld [vmem:[%s0 + $0x48] sm:$0xff]
  %v60 = vld [vmem:[%s0 + $0x50] sm:$0xff]
  %v61 = vld [vmem:[%s0 + $0x58] sm:$0xff]
  %v62 = vld [vmem:[%s0 + $0x60] sm:$0xff]
  %v63 = vld [vmem:[%s0 + $0x68] sm:$0xff]
  %v64 = vld [vmem:[%s0 + $0x70] sm:$0xff]
  %v65 = vld [vmem:[%s0 + $0x78] sm:$0xff]
  %v66 = vld [vmem:[%s7] sm:$0xff]
  %v67 = vld [vmem:[%s7 + $0x8] sm:$0xff]
  %v68 = vld [vmem:[%s7 + $0x10] sm:$0xff]
  %v69 = vld [vmem:[%s7 + $0x18] sm:$0xff]
  %71 = vset.pattern.permute.xlu0 0
  %72 = vperm.xlu0 %71, %v66
  %v73 = vpop.permute.xlu0 %72
  %76 = vset.pattern.permute.xlu0 0
  %77 = vperm.xlu0 %76, %v67
  %v78 = vpop.permute.xlu0 %77
  %81 = vset.pattern.permute.xlu0 0
  %82 = vperm.xlu0 %81, %v68
  %v83 = vpop.permute.xlu0 %82
  %86 = vset.pattern.permute.xlu0 0
  %87 = vperm.xlu0 %86, %v69
  %v88 = vpop.permute.xlu0 %87
  %vm90 = vcmask 523264
  %v92 = vsel %vm90, %v46, 0
  %v95 = vsel %vm90, %v47, 0
  %v98 = vsel %vm90, %v48, 0
  %v101 = vsel %vm90, %v49, 0
  %v104 = vsel %vm90, %v50, 0
  %v107 = vsel %vm90, %v51, 0
  %v110 = vsel %vm90, %v52, 0
  %v113 = vsel %vm90, %v53, 0
  %v116 = vsel %vm90, %v54, 0
  %v119 = vsel %vm90, %v55, 0
  %v122 = vsel %vm90, %v56, 0
  %v125 = vsel %vm90, %v57, 0
  %v128 = vsel %vm90, %v58, 0
  %v131 = vsel %vm90, %v59, 0
  %v134 = vsel %vm90, %v60, 0
  %v137 = vsel %vm90, %v61, 0
  %v140 = vsel %vm90, %v62, 0
  %v143 = vsel %vm90, %v63, 0
  %v146 = vsel %vm90, %v64, 0
  %v149 = vsel %vm90, %v65, 0
  %151 = vmatprep.subr.mxu0 0.0
  %v152 = vand.u32 %v149, 4294901760
  %153 = vmatpush1.xpose.msra.mxu0 %v152
  %154 = vmatprep.subr.mxu0 0.0
  %v155 = vand.u32 %v146, 4294901760
  %156 = vmatpush1.xpose.msra.mxu0 %v155
  %157 = vmatprep.subr.mxu0 0.0
  %v158 = vand.u32 %v143, 4294901760
  %159 = vmatpush1.xpose.msra.mxu0 %v158
  %160 = vmatprep.subr.mxu0 0.0
  %v161 = vand.u32 %v140, 4294901760
  %162 = vmatpush1.xpose.msra.mxu0 %v161
  %163 = vmatprep.subr.mxu0 0.0
  %v164 = vand.u32 %v137, 4294901760
  %165 = vmatpush1.xpose.msra.mxu0 %v164
  %166 = vmatprep.subr.mxu0 0.0
  %v167 = vand.u32 %v134, 4294901760
  %168 = vmatpush1.xpose.msra.mxu0 %v167
  %169 = vmatprep.subr.mxu0 0.0
  %v170 = vand.u32 %v131, 4294901760
  %171 = vmatpush1.xpose.msra.mxu0 %v170
  %172 = vmatprep.subr.mxu0 0.0
  %v173 = vand.u32 %v128, 4294901760
  %174 = vmatpush1.xpose.msra.mxu0 %v173
  %175 = vmatprep.subr.mxu0 0.0
  %v176 = vand.u32 %v125, 4294901760
  %177 = vmatpush1.xpose.msra.mxu0 %v176
  %178 = vmatprep.subr.mxu0 0.0
  %v179 = vand.u32 %v122, 4294901760
  %180 = vmatpush1.xpose.msra.mxu0 %v179
  %181 = vmatprep.subr.mxu0 0.0
  %v182 = vand.u32 %v119, 4294901760
  %183 = vmatpush1.xpose.msra.mxu0 %v182
  %184 = vmatprep.subr.mxu0 0.0
  %v185 = vand.u32 %v116, 4294901760
  %186 = vmatpush1.xpose.msra.mxu0 %v185
  %187 = vmatprep.subr.mxu0 0.0
  %v188 = vand.u32 %v113, 4294901760
  %189 = vmatpush1.xpose.msra.mxu0 %v188
  %190 = vmatprep.subr.mxu0 0.0
  %v191 = vand.u32 %v110, 4294901760
  %192 = vmatpush1.xpose.msra.mxu0 %v191
  %193 = vmatprep.subr.mxu0 0.0
  %v194 = vand.u32 %v107, 4294901760
  %195 = vmatpush1.xpose.msra.mxu0 %v194
  %196 = vmatprep.subr.mxu0 0.0
  %v197 = vand.u32 %v104, 4294901760
  %198 = vmatpush1.xpose.msra.mxu0 %v197
  %199 = vmatprep.subr.mxu0 0.0
  %200 = vmatpush2.xpose.msra.mxu0 0.0
  %201 = vmatprep.subr.mxu0 0.0
  %202 = vmatpush2.xpose.msra.mxu0 0.0
  %203 = vmatprep.subr.mxu0 0.0
  %204 = vmatpush2.xpose.msra.mxu0 0.0
  %205 = vmatprep.subr.mxu0 0.0
  %206 = vmatpush2.xpose.msra.mxu0 0.0
  %207 = vmatprep.subr.mxu0 0.0
  %208 = vmatpush2.xpose.msra.mxu0 0.0
  %209 = vmatprep.subr.mxu0 0.0
  %210 = vmatpush2.xpose.msra.mxu0 0.0
  %211 = vmatprep.subr.mxu0 0.0
  %212 = vmatpush2.xpose.msra.mxu0 0.0
  %213 = vmatprep.subr.mxu0 0.0
  %214 = vmatpush2.xpose.msra.mxu0 0.0
  %215 = vmatprep.subr.mxu0 0.0
  %216 = vmatpush2.xpose.msra.mxu0 0.0
  %217 = vmatprep.subr.mxu0 0.0
  %218 = vmatpush2.xpose.msra.mxu0 0.0
  %219 = vmatprep.subr.mxu0 0.0
  %220 = vmatpush2.xpose.msra.mxu0 0.0
  %221 = vmatprep.subr.mxu0 0.0
  %222 = vmatpush2.xpose.msra.mxu0 0.0
  %223 = vmatprep.subr.mxu0 0.0
  %224 = vmatpush2.xpose.msra.mxu0 0.0
  %225 = vmatprep.subr.mxu0 0.0
  %226 = vmatpush2.xpose.msra.mxu0 0.0
  %227 = vmatprep.subr.mxu0 0.0
  %228 = vmatpush2.xpose.msra.mxu0 0.0
  %229 = vmatprep.subr.mxu0 0.0
  %230 = vmatpush2.xpose.msra.mxu0 0.0
  %231 = vmatprep.mubr.f32.mxu0 0.0
  %v232 = vand.u32 %v92, 4294901760
  %v233 = vsub.f32 %v92, %v232
  %v234 = vand.u32 %v233, 4294901760
  %v235 = vsub.f32 %v233, %v234
  %v236 = vand.u32 %v235, 4294901760
  %237 = vmatmul.mubr.f32.gmra.mxu0 %v236
  %v238 = vpop.f32.mrf.mxu0
  %v239 = vadd.f32 %v73, %v238
  %v240 = vpop.f32.mrf.mxu0
  %241 = vmatprep.mubr.f32.mxu0 0.0
  %v242 = vand.u32 %v95, 4294901760
  %v243 = vsub.f32 %v95, %v242
  %v244 = vand.u32 %v243, 4294901760
  %v245 = vsub.f32 %v243, %v244
  %v246 = vand.u32 %v245, 4294901760
  %247 = vmatmul.mubr.f32.gmra.mxu0 %v246
  %v248 = vpop.f32.mrf.mxu0
  %v249 = vadd.f32 %v78, %v248
  %v250 = vpop.f32.mrf.mxu0
  %251 = vmatprep.mubr.f32.mxu0 0.0
  %v252 = vand.u32 %v98, 4294901760
  %v253 = vsub.f32 %v98, %v252
  %v254 = vand.u32 %v253, 4294901760
  %v255 = vsub.f32 %v253, %v254
  %v256 = vand.u32 %v255, 4294901760
  %257 = vmatmul.mubr.f32.gmra.mxu0 %v256
  %v258 = vpop.f32.mrf.mxu0
  %v259 = vadd.f32 %v83, %v258
  %v260 = vpop.f32.mrf.mxu0
  %261 = vmatprep.mubr.f32.mxu0 0.0
  %v262 = vand.u32 %v101, 4294901760
  %v263 = vsub.f32 %v101, %v262
  %v264 = vand.u32 %v263, 4294901760
  %v265 = vsub.f32 %v263, %v264
  %v266 = vand.u32 %v265, 4294901760
  %267 = vmatmul.mubr.f32.gmra.mxu0 %v266
  %v268 = vpop.f32.mrf.mxu0
  %v269 = vadd.f32 %v88, %v268
  %v270 = vpop.f32.mrf.mxu0
  %271 = vdwg.mxu0
  %272 = vmatprep.subr.mxu0 0.0
  %v273 = vand.u32 %v149, 4294901760
  %v274 = vsub.f32 %v149, %v273
  %v275 = vand.u32 %v274, 4294901760
  %v276 = vsub.f32 %v274, %v275
  %v277 = vand.u32 %v276, 4294901760
  %278 = vmatpush1.xpose.msra.mxu0 %v277
  %279 = vmatprep.subr.mxu0 0.0
  %v280 = vand.u32 %v146, 4294901760
  %v281 = vsub.f32 %v146, %v280
  %v282 = vand.u32 %v281, 4294901760
  %v283 = vsub.f32 %v281, %v282
  %v284 = vand.u32 %v283, 4294901760
  %285 = vmatpush1.xpose.msra.mxu0 %v284
  %286 = vmatprep.subr.mxu0 0.0
  %v287 = vand.u32 %v143, 4294901760
  %v288 = vsub.f32 %v143, %v287
  %v289 = vand.u32 %v288, 4294901760
  %v290 = vsub.f32 %v288, %v289
  %v291 = vand.u32 %v290, 4294901760
  %292 = vmatpush1.xpose.msra.mxu0 %v291
  %293 = vmatprep.subr.mxu0 0.0
  %v294 = vand.u32 %v140, 4294901760
  %v295 = vsub.f32 %v140, %v294
  %v296 = vand.u32 %v295, 4294901760
  %v297 = vsub.f32 %v295, %v296
  %v298 = vand.u32 %v297, 4294901760
  %299 = vmatpush1.xpose.msra.mxu0 %v298
  %300 = vmatprep.subr.mxu0 0.0
  %v301 = vand.u32 %v137, 4294901760
  %v302 = vsub.f32 %v137, %v301
  %v303 = vand.u32 %v302, 4294901760
  %v304 = vsub.f32 %v302, %v303
  %v305 = vand.u32 %v304, 4294901760
  %306 = vmatpush1.xpose.msra.mxu0 %v305
  %307 = vmatprep.subr.mxu0 0.0
  %v308 = vand.u32 %v134, 4294901760
  %v309 = vsub.f32 %v134, %v308
  %v310 = vand.u32 %v309, 4294901760
  %v311 = vsub.f32 %v309, %v310
  %v312 = vand.u32 %v311, 4294901760
  %313 = vmatpush1.xpose.msra.mxu0 %v312
  %314 = vmatprep.subr.mxu0 0.0
  %v315 = vand.u32 %v131, 4294901760
  %v316 = vsub.f32 %v131, %v315
  %v317 = vand.u32 %v316, 4294901760
  %v318 = vsub.f32 %v316, %v317
  %v319 = vand.u32 %v318, 4294901760
  %320 = vmatpush1.xpose.msra.mxu0 %v319
  %321 = vmatprep.subr.mxu0 0.0
  %v322 = vand.u32 %v128, 4294901760
  %v323 = vsub.f32 %v128, %v322
  %v324 = vand.u32 %v323, 4294901760
  %v325 = vsub.f32 %v323, %v324
  %v326 = vand.u32 %v325, 4294901760
  %327 = vmatpush1.xpose.msra.mxu0 %v326
  %328 = vmatprep.subr.mxu0 0.0
  %v329 = vand.u32 %v125, 4294901760
  %v330 = vsub.f32 %v125, %v329
  %v331 = vand.u32 %v330, 4294901760
  %v332 = vsub.f32 %v330, %v331
  %v333 = vand.u32 %v332, 4294901760
  %334 = vmatpush1.xpose.msra.mxu0 %v333
  %335 = vmatprep.subr.mxu0 0.0
  %v336 = vand.u32 %v122, 4294901760
  %v337 = vsub.f32 %v122, %v336
  %v338 = vand.u32 %v337, 4294901760
  %v339 = vsub.f32 %v337, %v338
  %v340 = vand.u32 %v339, 4294901760
  %341 = vmatpush1.xpose.msra.mxu0 %v340
  %342 = vmatprep.subr.mxu0 0.0
  %v343 = vand.u32 %v119, 4294901760
  %v344 = vsub.f32 %v119, %v343
  %v345 = vand.u32 %v344, 4294901760
  %v346 = vsub.f32 %v344, %v345
  %v347 = vand.u32 %v346, 4294901760
  %348 = vmatpush1.xpose.msra.mxu0 %v347
  %349 = vmatprep.subr.mxu0 0.0
  %v350 = vand.u32 %v116, 4294901760
  %v351 = vsub.f32 %v116, %v350
  %v352 = vand.u32 %v351, 4294901760
  %v353 = vsub.f32 %v351, %v352
  %v354 = vand.u32 %v353, 4294901760
  %355 = vmatpush1.xpose.msra.mxu0 %v354
  %356 = vmatprep.subr.mxu0 0.0
  %v357 = vand.u32 %v113, 4294901760
  %v358 = vsub.f32 %v113, %v357
  %v359 = vand.u32 %v358, 4294901760
  %v360 = vsub.f32 %v358, %v359
  %v361 = vand.u32 %v360, 4294901760
  %362 = vmatpush1.xpose.msra.mxu0 %v361
  %363 = vmatprep.subr.mxu0 0.0
  %v364 = vand.u32 %v110, 4294901760
  %v365 = vsub.f32 %v110, %v364
  %v366 = vand.u32 %v365, 4294901760
  %v367 = vsub.f32 %v365, %v366
  %v368 = vand.u32 %v367, 4294901760
  %369 = vmatpush1.xpose.msra.mxu0 %v368
  %370 = vmatprep.subr.mxu0 0.0
  %v371 = vand.u32 %v107, 4294901760
  %v372 = vsub.f32 %v107, %v371
  %v373 = vand.u32 %v372, 4294901760
  %v374 = vsub.f32 %v372, %v373
  %v375 = vand.u32 %v374, 4294901760
  %376 = vmatpush1.xpose.msra.mxu0 %v375
  %377 = vmatprep.subr.mxu0 0.0
  %v378 = vand.u32 %v104, 4294901760
  %v379 = vsub.f32 %v104, %v378
  %v380 = vand.u32 %v379, 4294901760
  %v381 = vsub.f32 %v379, %v380
  %v382 = vand.u32 %v381, 4294901760
  %383 = vmatpush1.xpose.msra.mxu0 %v382
  %384 = vmatprep.subr.mxu0 0.0
  %385 = vmatpush2.xpose.msra.mxu0 0.0
  %386 = vmatprep.subr.mxu0 0.0
  %387 = vmatpush2.xpose.msra.mxu0 0.0
  %388 = vmatprep.subr.mxu0 0.0
  %389 = vmatpush2.xpose.msra.mxu0 0.0
  %390 = vmatprep.subr.mxu0 0.0
  %391 = vmatpush2.xpose.msra.mxu0 0.0
  %392 = vmatprep.subr.mxu0 0.0
  %393 = vmatpush2.xpose.msra.mxu0 0.0
  %394 = vmatprep.subr.mxu0 0.0
  %395 = vmatpush2.xpose.msra.mxu0 0.0
  %396 = vmatprep.subr.mxu0 0.0
  %397 = vmatpush2.xpose.msra.mxu0 0.0
  %398 = vmatprep.subr.mxu0 0.0
  %399 = vmatpush2.xpose.msra.mxu0 0.0
  %400 = vmatprep.subr.mxu0 0.0
  %401 = vmatpush2.xpose.msra.mxu0 0.0
  %402 = vmatprep.subr.mxu0 0.0
  %403 = vmatpush2.xpose.msra.mxu0 0.0
  %404 = vmatprep.subr.mxu0 0.0
  %405 = vmatpush2.xpose.msra.mxu0 0.0
  %406 = vmatprep.subr.mxu0 0.0
  %407 = vmatpush2.xpose.msra.mxu0 0.0
  %408 = vmatprep.subr.mxu0 0.0
  %409 = vmatpush2.xpose.msra.mxu0 0.0
  %410 = vmatprep.subr.mxu0 0.0
  %411 = vmatpush2.xpose.msra.mxu0 0.0
  %412 = vmatprep.subr.mxu0 0.0
  %413 = vmatpush2.xpose.msra.mxu0 0.0
  %414 = vmatprep.subr.mxu0 0.0
  %415 = vmatpush2.xpose.msra.mxu0 0.0
  %416 = vmatprep.mubr.f32.mxu0 0.0
  %v417 = vand.u32 %v92, 4294901760
  %418 = vmatmul.mubr.f32.gmra.mxu0 %v417
  %v419 = vpop.f32.mrf.mxu0
  %v420 = vadd.f32 %v239, %v419
  %v421 = vpop.f32.mrf.mxu0
  %422 = vmatprep.mubr.f32.mxu0 0.0
  %v423 = vand.u32 %v95, 4294901760
  %424 = vmatmul.mubr.f32.gmra.mxu0 %v423
  %v425 = vpop.f32.mrf.mxu0
  %v426 = vadd.f32 %v249, %v425
  %v427 = vpop.f32.mrf.mxu0
  %428 = vmatprep.mubr.f32.mxu0 0.0
  %v429 = vand.u32 %v98, 4294901760
  %430 = vmatmul.mubr.f32.gmra.mxu0 %v429
  %v431 = vpop.f32.mrf.mxu0
  %v432 = vadd.f32 %v259, %v431
  %v433 = vpop.f32.mrf.mxu0
  %434 = vmatprep.mubr.f32.mxu0 0.0
  %v435 = vand.u32 %v101, 4294901760
  %436 = vmatmul.mubr.f32.gmra.mxu0 %v435
  %v437 = vpop.f32.mrf.mxu0
  %v438 = vadd.f32 %v269, %v437
  %v439 = vpop.f32.mrf.mxu0
  %440 = vdwg.mxu0
  %441 = vmatprep.subr.mxu0 0.0
  %v442 = vand.u32 %v149, 4294901760
  %v443 = vsub.f32 %v149, %v442
  %444 = vmatpush1.xpose.msra.mxu0 %v443
  %445 = vmatprep.subr.mxu0 0.0
  %v446 = vand.u32 %v146, 4294901760
  %v447 = vsub.f32 %v146, %v446
  %448 = vmatpush1.xpose.msra.mxu0 %v447
  %449 = vmatprep.subr.mxu0 0.0
  %v450 = vand.u32 %v143, 4294901760
  %v451 = vsub.f32 %v143, %v450
  %452 = vmatpush1.xpose.msra.mxu0 %v451
  %453 = vmatprep.subr.mxu0 0.0
  %v454 = vand.u32 %v140, 4294901760
  %v455 = vsub.f32 %v140, %v454
  %456 = vmatpush1.xpose.msra.mxu0 %v455
  %457 = vmatprep.subr.mxu0 0.0
  %v458 = vand.u32 %v137, 4294901760
  %v459 = vsub.f32 %v137, %v458
  %460 = vmatpush1.xpose.msra.mxu0 %v459
  %461 = vmatprep.subr.mxu0 0.0
  %v462 = vand.u32 %v134, 4294901760
  %v463 = vsub.f32 %v134, %v462
  %464 = vmatpush1.xpose.msra.mxu0 %v463
  %465 = vmatprep.subr.mxu0 0.0
  %v466 = vand.u32 %v131, 4294901760
  %v467 = vsub.f32 %v131, %v466
  %468 = vmatpush1.xpose.msra.mxu0 %v467
  %469 = vmatprep.subr.mxu0 0.0
  %v470 = vand.u32 %v128, 4294901760
  %v471 = vsub.f32 %v128, %v470
  %472 = vmatpush1.xpose.msra.mxu0 %v471
  %473 = vmatprep.subr.mxu0 0.0
  %v474 = vand.u32 %v125, 4294901760
  %v475 = vsub.f32 %v125, %v474
  %476 = vmatpush1.xpose.msra.mxu0 %v475
  %477 = vmatprep.subr.mxu0 0.0
  %v478 = vand.u32 %v122, 4294901760
  %v479 = vsub.f32 %v122, %v478
  %480 = vmatpush1.xpose.msra.mxu0 %v479
  %481 = vmatprep.subr.mxu0 0.0
  %v482 = vand.u32 %v119, 4294901760
  %v483 = vsub.f32 %v119, %v482
  %484 = vmatpush1.xpose.msra.mxu0 %v483
  %485 = vmatprep.subr.mxu0 0.0
  %v486 = vand.u32 %v116, 4294901760
  %v487 = vsub.f32 %v116, %v486
  %488 = vmatpush1.xpose.msra.mxu0 %v487
  %489 = vmatprep.subr.mxu0 0.0
  %v490 = vand.u32 %v113, 4294901760
  %v491 = vsub.f32 %v113, %v490
  %492 = vmatpush1.xpose.msra.mxu0 %v491
  %493 = vmatprep.subr.mxu0 0.0
  %v494 = vand.u32 %v110, 4294901760
  %v495 = vsub.f32 %v110, %v494
  %496 = vmatpush1.xpose.msra.mxu0 %v495
  %497 = vmatprep.subr.mxu0 0.0
  %v498 = vand.u32 %v107, 4294901760
  %v499 = vsub.f32 %v107, %v498
  %500 = vmatpush1.xpose.msra.mxu0 %v499
  %501 = vmatprep.subr.mxu0 0.0
  %v502 = vand.u32 %v104, 4294901760
  %v503 = vsub.f32 %v104, %v502
  %504 = vmatpush1.xpose.msra.mxu0 %v503
  %505 = vmatprep.subr.mxu0 0.0
  %506 = vmatpush2.xpose.msra.mxu0 0.0
  %507 = vmatprep.subr.mxu0 0.0
  %508 = vmatpush2.xpose.msra.mxu0 0.0
  %509 = vmatprep.subr.mxu0 0.0
  %510 = vmatpush2.xpose.msra.mxu0 0.0
  %511 = vmatprep.subr.mxu0 0.0
  %512 = vmatpush2.xpose.msra.mxu0 0.0
  %513 = vmatprep.subr.mxu0 0.0
  %514 = vmatpush2.xpose.msra.mxu0 0.0
  %515 = vmatprep.subr.mxu0 0.0
  %516 = vmatpush2.xpose.msra.mxu0 0.0
  %517 = vmatprep.subr.mxu0 0.0
  %518 = vmatpush2.xpose.msra.mxu0 0.0
  %519 = vmatprep.subr.mxu0 0.0
  %520 = vmatpush2.xpose.msra.mxu0 0.0
  %521 = vmatprep.subr.mxu0 0.0
  %522 = vmatpush2.xpose.msra.mxu0 0.0
  %523 = vmatprep.subr.mxu0 0.0
  %524 = vmatpush2.xpose.msra.mxu0 0.0
  %525 = vmatprep.subr.mxu0 0.0
  %526 = vmatpush2.xpose.msra.mxu0 0.0
  %527 = vmatprep.subr.mxu0 0.0
  %528 = vmatpush2.xpose.msra.mxu0 0.0
  %529 = vmatprep.subr.mxu0 0.0
  %530 = vmatpush2.xpose.msra.mxu0 0.0
  %531 = vmatprep.subr.mxu0 0.0
  %532 = vmatpush2.xpose.msra.mxu0 0.0
  %533 = vmatprep.subr.mxu0 0.0
  %534 = vmatpush2.xpose.msra.mxu0 0.0
  %535 = vmatprep.subr.mxu0 0.0
  %536 = vmatpush2.xpose.msra.mxu0 0.0
  %537 = vmatprep.mubr.f32.mxu0 0.0
  %v538 = vand.u32 %v92, 4294901760
  %v539 = vsub.f32 %v92, %v538
  %540 = vmatmul.mubr.f32.gmra.mxu0 %v539
  %v541 = vpop.f32.mrf.mxu0
  %v542 = vadd.f32 %v420, %v541
  %v543 = vpop.f32.mrf.mxu0
  %544 = vmatprep.mubr.f32.mxu0 0.0
  %v545 = vand.u32 %v95, 4294901760
  %v546 = vsub.f32 %v95, %v545
  %547 = vmatmul.mubr.f32.gmra.mxu0 %v546
  %v548 = vpop.f32.mrf.mxu0
  %v549 = vadd.f32 %v426, %v548
  %v550 = vpop.f32.mrf.mxu0
  %551 = vmatprep.mubr.f32.mxu0 0.0
  %v552 = vand.u32 %v98, 4294901760
  %v553 = vsub.f32 %v98, %v552
  %554 = vmatmul.mubr.f32.gmra.mxu0 %v553
  %v555 = vpop.f32.mrf.mxu0
  %v556 = vadd.f32 %v432, %v555
  %v557 = vpop.f32.mrf.mxu0
  %558 = vmatprep.mubr.f32.mxu0 0.0
  %v559 = vand.u32 %v101, 4294901760
  %v560 = vsub.f32 %v101, %v559
  %561 = vmatmul.mubr.f32.gmra.mxu0 %v560
  %v562 = vpop.f32.mrf.mxu0
  %v563 = vadd.f32 %v438, %v562
  %v564 = vpop.f32.mrf.mxu0
  %565 = vdwg.mxu0
  %566 = vmatprep.subr.mxu0 0.0
  %v567 = vand.u32 %v149, 4294901760
  %568 = vmatpush1.xpose.msra.mxu0 %v567
  %569 = vmatprep.subr.mxu0 0.0
  %v570 = vand.u32 %v146, 4294901760
  %571 = vmatpush1.xpose.msra.mxu0 %v570
  %572 = vmatprep.subr.mxu0 0.0
  %v573 = vand.u32 %v143, 4294901760
  %574 = vmatpush1.xpose.msra.mxu0 %v573
  %575 = vmatprep.subr.mxu0 0.0
  %v576 = vand.u32 %v140, 4294901760
  %577 = vmatpush1.xpose.msra.mxu0 %v576
  %578 = vmatprep.subr.mxu0 0.0
  %v579 = vand.u32 %v137, 4294901760
  %580 = vmatpush1.xpose.msra.mxu0 %v579
  %581 = vmatprep.subr.mxu0 0.0
  %v582 = vand.u32 %v134, 4294901760
  %583 = vmatpush1.xpose.msra.mxu0 %v582
  %584 = vmatprep.subr.mxu0 0.0
  %v585 = vand.u32 %v131, 4294901760
  %586 = vmatpush1.xpose.msra.mxu0 %v585
  %587 = vmatprep.subr.mxu0 0.0
  %v588 = vand.u32 %v128, 4294901760
  %589 = vmatpush1.xpose.msra.mxu0 %v588
  %590 = vmatprep.subr.mxu0 0.0
  %v591 = vand.u32 %v125, 4294901760
  %592 = vmatpush1.xpose.msra.mxu0 %v591
  %593 = vmatprep.subr.mxu0 0.0
  %v594 = vand.u32 %v122, 4294901760
  %595 = vmatpush1.xpose.msra.mxu0 %v594
  %596 = vmatprep.subr.mxu0 0.0
  %v597 = vand.u32 %v119, 4294901760
  %598 = vmatpush1.xpose.msra.mxu0 %v597
  %599 = vmatprep.subr.mxu0 0.0
  %v600 = vand.u32 %v116, 4294901760
  %601 = vmatpush1.xpose.msra.mxu0 %v600
  %602 = vmatprep.subr.mxu0 0.0
  %v603 = vand.u32 %v113, 4294901760
  %604 = vmatpush1.xpose.msra.mxu0 %v603
  %605 = vmatprep.subr.mxu0 0.0
  %v606 = vand.u32 %v110, 4294901760
  %607 = vmatpush1.xpose.msra.mxu0 %v606
  %608 = vmatprep.subr.mxu0 0.0
  %v609 = vand.u32 %v107, 4294901760
  %610 = vmatpush1.xpose.msra.mxu0 %v609
  %611 = vmatprep.subr.mxu0 0.0
  %v612 = vand.u32 %v104, 4294901760
  %613 = vmatpush1.xpose.msra.mxu0 %v612
  %614 = vmatprep.subr.mxu0 0.0
  %615 = vmatpush2.xpose.msra.mxu0 0.0
  %616 = vmatprep.subr.mxu0 0.0
  %617 = vmatpush2.xpose.msra.mxu0 0.0
  %618 = vmatprep.subr.mxu0 0.0
  %619 = vmatpush2.xpose.msra.mxu0 0.0
  %620 = vmatprep.subr.mxu0 0.0
  %621 = vmatpush2.xpose.msra.mxu0 0.0
  %622 = vmatprep.subr.mxu0 0.0
  %623 = vmatpush2.xpose.msra.mxu0 0.0
  %624 = vmatprep.subr.mxu0 0.0
  %625 = vmatpush2.xpose.msra.mxu0 0.0
  %626 = vmatprep.subr.mxu0 0.0
  %627 = vmatpush2.xpose.msra.mxu0 0.0
  %628 = vmatprep.subr.mxu0 0.0
  %629 = vmatpush2.xpose.msra.mxu0 0.0
  %630 = vmatprep.subr.mxu0 0.0
  %631 = vmatpush2.xpose.msra.mxu0 0.0
  %632 = vmatprep.subr.mxu0 0.0
  %633 = vmatpush2.xpose.msra.mxu0 0.0
  %634 = vmatprep.subr.mxu0 0.0
  %635 = vmatpush2.xpose.msra.mxu0 0.0
  %636 = vmatprep.subr.mxu0 0.0
  %637 = vmatpush2.xpose.msra.mxu0 0.0
  %638 = vmatprep.subr.mxu0 0.0
  %639 = vmatpush2.xpose.msra.mxu0 0.0
  %640 = vmatprep.subr.mxu0 0.0
  %641 = vmatpush2.xpose.msra.mxu0 0.0
  %642 = vmatprep.subr.mxu0 0.0
  %643 = vmatpush2.xpose.msra.mxu0 0.0
  %644 = vmatprep.subr.mxu0 0.0
  %645 = vmatpush2.xpose.msra.mxu0 0.0
  %646 = vmatprep.mubr.f32.mxu0 0.0
  %v647 = vand.u32 %v92, 4294901760
  %v648 = vsub.f32 %v92, %v647
  %v649 = vand.u32 %v648, 4294901760
  %650 = vmatmul.mubr.f32.gmra.mxu0 %v649
  %v651 = vpop.f32.mrf.mxu0
  %v652 = vadd.f32 %v542, %v651
  %v653 = vpop.f32.mrf.mxu0
  %654 = vmatprep.mubr.f32.mxu0 0.0
  %v655 = vand.u32 %v95, 4294901760
  %v656 = vsub.f32 %v95, %v655
  %v657 = vand.u32 %v656, 4294901760
  %658 = vmatmul.mubr.f32.gmra.mxu0 %v657
  %v659 = vpop.f32.mrf.mxu0
  %v660 = vadd.f32 %v549, %v659
  %v661 = vpop.f32.mrf.mxu0
  %662 = vmatprep.mubr.f32.mxu0 0.0
  %v663 = vand.u32 %v98, 4294901760
  %v664 = vsub.f32 %v98, %v663
  %v665 = vand.u32 %v664, 4294901760
  %666 = vmatmul.mubr.f32.gmra.mxu0 %v665
  %v667 = vpop.f32.mrf.mxu0
  %v668 = vadd.f32 %v556, %v667
  %v669 = vpop.f32.mrf.mxu0
  %670 = vmatprep.mubr.f32.mxu0 0.0
  %v671 = vand.u32 %v101, 4294901760
  %v672 = vsub.f32 %v101, %v671
  %v673 = vand.u32 %v672, 4294901760
  %674 = vmatmul.mubr.f32.gmra.mxu0 %v673
  %v675 = vpop.f32.mrf.mxu0
  %v676 = vadd.f32 %v563, %v675
  %v677 = vpop.f32.mrf.mxu0
  %678 = vdwg.mxu0
  %679 = vmatprep.subr.mxu0 0.0
  %v680 = vand.u32 %v149, 4294901760
  %v681 = vsub.f32 %v149, %v680
  %v682 = vand.u32 %v681, 4294901760
  %683 = vmatpush1.xpose.msra.mxu0 %v682
  %684 = vmatprep.subr.mxu0 0.0
  %v685 = vand.u32 %v146, 4294901760
  %v686 = vsub.f32 %v146, %v685
  %v687 = vand.u32 %v686, 4294901760
  %688 = vmatpush1.xpose.msra.mxu0 %v687
  %689 = vmatprep.subr.mxu0 0.0
  %v690 = vand.u32 %v143, 4294901760
  %v691 = vsub.f32 %v143, %v690
  %v692 = vand.u32 %v691, 4294901760
  %693 = vmatpush1.xpose.msra.mxu0 %v692
  %694 = vmatprep.subr.mxu0 0.0
  %v695 = vand.u32 %v140, 4294901760
  %v696 = vsub.f32 %v140, %v695
  %v697 = vand.u32 %v696, 4294901760
  %698 = vmatpush1.xpose.msra.mxu0 %v697
  %699 = vmatprep.subr.mxu0 0.0
  %v700 = vand.u32 %v137, 4294901760
  %v701 = vsub.f32 %v137, %v700
  %v702 = vand.u32 %v701, 4294901760
  %703 = vmatpush1.xpose.msra.mxu0 %v702
  %704 = vmatprep.subr.mxu0 0.0
  %v705 = vand.u32 %v134, 4294901760
  %v706 = vsub.f32 %v134, %v705
  %v707 = vand.u32 %v706, 4294901760
  %708 = vmatpush1.xpose.msra.mxu0 %v707
  %709 = vmatprep.subr.mxu0 0.0
  %v710 = vand.u32 %v131, 4294901760
  %v711 = vsub.f32 %v131, %v710
  %v712 = vand.u32 %v711, 4294901760
  %713 = vmatpush1.xpose.msra.mxu0 %v712
  %714 = vmatprep.subr.mxu0 0.0
  %v715 = vand.u32 %v128, 4294901760
  %v716 = vsub.f32 %v128, %v715
  %v717 = vand.u32 %v716, 4294901760
  %718 = vmatpush1.xpose.msra.mxu0 %v717
  %719 = vmatprep.subr.mxu0 0.0
  %v720 = vand.u32 %v125, 4294901760
  %v721 = vsub.f32 %v125, %v720
  %v722 = vand.u32 %v721, 4294901760
  %723 = vmatpush1.xpose.msra.mxu0 %v722
  %724 = vmatprep.subr.mxu0 0.0
  %v725 = vand.u32 %v122, 4294901760
  %v726 = vsub.f32 %v122, %v725
  %v727 = vand.u32 %v726, 4294901760
  %728 = vmatpush1.xpose.msra.mxu0 %v727
  %729 = vmatprep.subr.mxu0 0.0
  %v730 = vand.u32 %v119, 4294901760
  %v731 = vsub.f32 %v119, %v730
  %v732 = vand.u32 %v731, 4294901760
  %733 = vmatpush1.xpose.msra.mxu0 %v732
  %734 = vmatprep.subr.mxu0 0.0
  %v735 = vand.u32 %v116, 4294901760
  %v736 = vsub.f32 %v116, %v735
  %v737 = vand.u32 %v736, 4294901760
  %738 = vmatpush1.xpose.msra.mxu0 %v737
  %739 = vmatprep.subr.mxu0 0.0
  %v740 = vand.u32 %v113, 4294901760
  %v741 = vsub.f32 %v113, %v740
  %v742 = vand.u32 %v741, 4294901760
  %743 = vmatpush1.xpose.msra.mxu0 %v742
  %744 = vmatprep.subr.mxu0 0.0
  %v745 = vand.u32 %v110, 4294901760
  %v746 = vsub.f32 %v110, %v745
  %v747 = vand.u32 %v746, 4294901760
  %748 = vmatpush1.xpose.msra.mxu0 %v747
  %749 = vmatprep.subr.mxu0 0.0
  %v750 = vand.u32 %v107, 4294901760
  %v751 = vsub.f32 %v107, %v750
  %v752 = vand.u32 %v751, 4294901760
  %753 = vmatpush1.xpose.msra.mxu0 %v752
  %754 = vmatprep.subr.mxu0 0.0
  %v755 = vand.u32 %v104, 4294901760
  %v756 = vsub.f32 %v104, %v755
  %v757 = vand.u32 %v756, 4294901760
  %758 = vmatpush1.xpose.msra.mxu0 %v757
  %759 = vmatprep.subr.mxu0 0.0
  %760 = vmatpush2.xpose.msra.mxu0 0.0
  %761 = vmatprep.subr.mxu0 0.0
  %762 = vmatpush2.xpose.msra.mxu0 0.0
  %763 = vmatprep.subr.mxu0 0.0
  %764 = vmatpush2.xpose.msra.mxu0 0.0
  %765 = vmatprep.subr.mxu0 0.0
  %766 = vmatpush2.xpose.msra.mxu0 0.0
  %767 = vmatprep.subr.mxu0 0.0
  %768 = vmatpush2.xpose.msra.mxu0 0.0
  %769 = vmatprep.subr.mxu0 0.0
  %770 = vmatpush2.xpose.msra.mxu0 0.0
  %771 = vmatprep.subr.mxu0 0.0
  %772 = vmatpush2.xpose.msra.mxu0 0.0
  %773 = vmatprep.subr.mxu0 0.0
  %774 = vmatpush2.xpose.msra.mxu0 0.0
  %775 = vmatprep.subr.mxu0 0.0
  %776 = vmatpush2.xpose.msra.mxu0 0.0
  %777 = vmatprep.subr.mxu0 0.0
  %778 = vmatpush2.xpose.msra.mxu0 0.0
  %779 = vmatprep.subr.mxu0 0.0
  %780 = vmatpush2.xpose.msra.mxu0 0.0
  %781 = vmatprep.subr.mxu0 0.0
  %782 = vmatpush2.xpose.msra.mxu0 0.0
  %783 = vmatprep.subr.mxu0 0.0
  %784 = vmatpush2.xpose.msra.mxu0 0.0
  %785 = vmatprep.subr.mxu0 0.0
  %786 = vmatpush2.xpose.msra.mxu0 0.0
  %787 = vmatprep.subr.mxu0 0.0
  %788 = vmatpush2.xpose.msra.mxu0 0.0
  %789 = vmatprep.subr.mxu0 0.0
  %790 = vmatpush2.xpose.msra.mxu0 0.0
  %791 = vmatprep.mubr.f32.mxu0 0.0
  %v792 = vand.u32 %v92, 4294901760
  %793 = vmatmul.mubr.f32.gmra.mxu0 %v792
  %v794 = vpop.f32.mrf.mxu0
  %v795 = vadd.f32 %v652, %v794
  %v796 = vpop.f32.mrf.mxu0
  %797 = vmatprep.mubr.f32.mxu0 0.0
  %v798 = vand.u32 %v95, 4294901760
  %799 = vmatmul.mubr.f32.gmra.mxu0 %v798
  %v800 = vpop.f32.mrf.mxu0
  %v801 = vadd.f32 %v660, %v800
  %v802 = vpop.f32.mrf.mxu0
  %803 = vmatprep.mubr.f32.mxu0 0.0
  %v804 = vand.u32 %v98, 4294901760
  %805 = vmatmul.mubr.f32.gmra.mxu0 %v804
  %v806 = vpop.f32.mrf.mxu0
  %v807 = vadd.f32 %v668, %v806
  %v808 = vpop.f32.mrf.mxu0
  %809 = vmatprep.mubr.f32.mxu0 0.0
  %v810 = vand.u32 %v101, 4294901760
  %811 = vmatmul.mubr.f32.gmra.mxu0 %v810
  %v812 = vpop.f32.mrf.mxu0
  %v813 = vadd.f32 %v676, %v812
  %v814 = vpop.f32.mrf.mxu0
  %815 = vdwg.mxu0
  %816 = vmatprep.subr.mxu0 0.0
  %v817 = vand.u32 %v149, 4294901760
  %818 = vmatpush1.xpose.msra.mxu0 %v817
  %819 = vmatprep.subr.mxu0 0.0
  %v820 = vand.u32 %v146, 4294901760
  %821 = vmatpush1.xpose.msra.mxu0 %v820
  %822 = vmatprep.subr.mxu0 0.0
  %v823 = vand.u32 %v143, 4294901760
  %824 = vmatpush1.xpose.msra.mxu0 %v823
  %825 = vmatprep.subr.mxu0 0.0
  %v826 = vand.u32 %v140, 4294901760
  %827 = vmatpush1.xpose.msra.mxu0 %v826
  %828 = vmatprep.subr.mxu0 0.0
  %v829 = vand.u32 %v137, 4294901760
  %830 = vmatpush1.xpose.msra.mxu0 %v829
  %831 = vmatprep.subr.mxu0 0.0
  %v832 = vand.u32 %v134, 4294901760
  %833 = vmatpush1.xpose.msra.mxu0 %v832
  %834 = vmatprep.subr.mxu0 0.0
  %v835 = vand.u32 %v131, 4294901760
  %836 = vmatpush1.xpose.msra.mxu0 %v835
  %837 = vmatprep.subr.mxu0 0.0
  %v838 = vand.u32 %v128, 4294901760
  %839 = vmatpush1.xpose.msra.mxu0 %v838
  %840 = vmatprep.subr.mxu0 0.0
  %v841 = vand.u32 %v125, 4294901760
  %842 = vmatpush1.xpose.msra.mxu0 %v841
  %843 = vmatprep.subr.mxu0 0.0
  %v844 = vand.u32 %v122, 4294901760
  %845 = vmatpush1.xpose.msra.mxu0 %v844
  %846 = vmatprep.subr.mxu0 0.0
  %v847 = vand.u32 %v119, 4294901760
  %848 = vmatpush1.xpose.msra.mxu0 %v847
  %849 = vmatprep.subr.mxu0 0.0
  %v850 = vand.u32 %v116, 4294901760
  %851 = vmatpush1.xpose.msra.mxu0 %v850
  %852 = vmatprep.subr.mxu0 0.0
  %v853 = vand.u32 %v113, 4294901760
  %854 = vmatpush1.xpose.msra.mxu0 %v853
  %855 = vmatprep.subr.mxu0 0.0
  %v856 = vand.u32 %v110, 4294901760
  %857 = vmatpush1.xpose.msra.mxu0 %v856
  %858 = vmatprep.subr.mxu0 0.0
  %v859 = vand.u32 %v107, 4294901760
  %860 = vmatpush1.xpose.msra.mxu0 %v859
  %861 = vmatprep.subr.mxu0 0.0
  %v862 = vand.u32 %v104, 4294901760
  %863 = vmatpush1.xpose.msra.mxu0 %v862
  %864 = vmatprep.subr.mxu0 0.0
  %865 = vmatpush2.xpose.msra.mxu0 0.0
  %866 = vmatprep.subr.mxu0 0.0
  %867 = vmatpush2.xpose.msra.mxu0 0.0
  %868 = vmatprep.subr.mxu0 0.0
  %869 = vmatpush2.xpose.msra.mxu0 0.0
  %870 = vmatprep.subr.mxu0 0.0
  %871 = vmatpush2.xpose.msra.mxu0 0.0
  %872 = vmatprep.subr.mxu0 0.0
  %873 = vmatpush2.xpose.msra.mxu0 0.0
  %874 = vmatprep.subr.mxu0 0.0
  %875 = vmatpush2.xpose.msra.mxu0 0.0
  %876 = vmatprep.subr.mxu0 0.0
  %877 = vmatpush2.xpose.msra.mxu0 0.0
  %878 = vmatprep.subr.mxu0 0.0
  %879 = vmatpush2.xpose.msra.mxu0 0.0
  %880 = vmatprep.subr.mxu0 0.0
  %881 = vmatpush2.xpose.msra.mxu0 0.0
  %882 = vmatprep.subr.mxu0 0.0
  %883 = vmatpush2.xpose.msra.mxu0 0.0
  %884 = vmatprep.subr.mxu0 0.0
  %885 = vmatpush2.xpose.msra.mxu0 0.0
  %886 = vmatprep.subr.mxu0 0.0
  %887 = vmatpush2.xpose.msra.mxu0 0.0
  %888 = vmatprep.subr.mxu0 0.0
  %889 = vmatpush2.xpose.msra.mxu0 0.0
  %890 = vmatprep.subr.mxu0 0.0
  %891 = vmatpush2.xpose.msra.mxu0 0.0
  %892 = vmatprep.subr.mxu0 0.0
  %893 = vmatpush2.xpose.msra.mxu0 0.0
  %894 = vmatprep.subr.mxu0 0.0
  %895 = vmatpush2.xpose.msra.mxu0 0.0
  %896 = vmatprep.mubr.f32.mxu0 0.0
  %v897 = vand.u32 %v92, 4294901760
  %898 = vmatmul.mubr.f32.gmra.mxu0 %v897
  %v899 = vpop.f32.mrf.mxu0
  %v900 = vadd.f32 %v795, %v899
  %v901 = vpop.f32.mrf.mxu0
  %902 = vmatprep.mubr.f32.mxu0 0.0
  %v903 = vand.u32 %v95, 4294901760
  %904 = vmatmul.mubr.f32.gmra.mxu0 %v903
  %v905 = vpop.f32.mrf.mxu0
  %v906 = vadd.f32 %v801, %v905
  %v907 = vpop.f32.mrf.mxu0
  %908 = vmatprep.mubr.f32.mxu0 0.0
  %v909 = vand.u32 %v98, 4294901760
  %910 = vmatmul.mubr.f32.gmra.mxu0 %v909
  %v911 = vpop.f32.mrf.mxu0
  %v912 = vadd.f32 %v807, %v911
  %v913 = vpop.f32.mrf.mxu0
  %914 = vmatprep.mubr.f32.mxu0 0.0
  %v915 = vand.u32 %v101, 4294901760
  %916 = vmatmul.mubr.f32.gmra.mxu0 %v915
  %v917 = vpop.f32.mrf.mxu0
  %v918 = vadd.f32 %v813, %v917
  %v919 = vpop.f32.mrf.mxu0
  %920 = vdwg.mxu0
  %v921 = vxor.u32 %v900, 2147483648
  %v922 = vxor.u32 %v906, 2147483648
  %v923 = vxor.u32 %v912, 2147483648
  %v924 = vxor.u32 %v918, 2147483648
  %v925 = vmul.f32 %v921, 1.442695
  %v926 = vpow.pop %v925
  %v927 = vmul.f32 %v922, 1.442695
  %v928 = vpow.pop %v927
  %v929 = vmul.f32 %v923, 1.442695
  %v930 = vpow.pop %v929
  %v931 = vmul.f32 %v924, 1.442695
  %v932 = vpow.pop %v931
  %v933 = vadd.f32 %v926, 1.0
  %v934 = vadd.f32 %v928, 1.0
  %v935 = vadd.f32 %v930, 1.0
  %v936 = vadd.f32 %v932, 1.0
  %v937 = vrcp.pop %v933
  %v938 = vmul.f32 1.0, %v937
  %v939 = vrcp.pop %v934
  %v940 = vmul.f32 1.0, %v939
  %v941 = vrcp.pop %v935
  %v942 = vmul.f32 1.0, %v941
  %v943 = vrcp.pop %v936
  %v944 = vmul.f32 1.0, %v943
  %v945 = vld [vmem:[%s2] sm:$0xff]
  %v946 = vld [vmem:[%s2 + $0x8] sm:$0xff]
  %v947 = vld [vmem:[%s8] sm:$0xff]
  %v948 = vld [vmem:[%s8 + $0x8] sm:$0xff]
  %950 = vset.pattern.permute.xlu0 0
  %951 = vperm.xlu0 %950, %v947
  %v952 = vpop.permute.xlu0 %951
  %955 = vset.pattern.permute.xlu0 0
  %956 = vperm.xlu0 %955, %v948
  %v957 = vpop.permute.xlu0 %956
  %vm959 = vcmask 261120
  %v961 = vsel %vm959, %v945, 0
  %v964 = vsel %vm959, %v946, 0
  %966 = vmatprep.subr.mxu0 0.0
  %967 = vmatpush1.msra.mxu0 0.0
  %968 = vmatprep.subr.mxu0 0.0
  %969 = vmatpush1.msra.mxu0 0.0
  %970 = vmatprep.subr.mxu0 0.0
  %971 = vmatpush1.msra.mxu0 0.0
  %972 = vmatprep.subr.mxu0 0.0
  %973 = vmatpush1.msra.mxu0 0.0
  %974 = vmatprep.subr.mxu0 0.0
  %975 = vmatpush1.msra.mxu0 0.0
  %976 = vmatprep.subr.mxu0 0.0
  %977 = vmatpush1.msra.mxu0 0.0
  %978 = vmatprep.subr.mxu0 0.0
  %979 = vmatpush1.msra.mxu0 0.0
  %980 = vmatprep.subr.mxu0 0.0
  %981 = vmatpush1.msra.mxu0 0.0
  %982 = vmatprep.subr.mxu0 0.0
  %983 = vmatpush1.msra.mxu0 0.0
  %984 = vmatprep.subr.mxu0 0.0
  %985 = vmatpush1.msra.mxu0 0.0
  %986 = vmatprep.subr.mxu0 0.0
  %987 = vmatpush1.msra.mxu0 0.0
  %988 = vmatprep.subr.mxu0 0.0
  %989 = vmatpush1.msra.mxu0 0.0
  %990 = vmatprep.subr.mxu0 0.0
  %v991 = vand.u32 %v944, 4294901760
  %992 = vmatpush1.msra.mxu0 %v991
  %993 = vmatprep.subr.mxu0 0.0
  %v994 = vand.u32 %v942, 4294901760
  %995 = vmatpush1.msra.mxu0 %v994
  %996 = vmatprep.subr.mxu0 0.0
  %v997 = vand.u32 %v940, 4294901760
  %998 = vmatpush1.msra.mxu0 %v997
  %999 = vmatprep.subr.mxu0 0.0
  %v1000 = vand.u32 %v938, 4294901760
  %1001 = vmatpush1.msra.mxu0 %v1000
  %1002 = vmatprep.subr.mxu0 0.0
  %1003 = vmatpush2.msra.mxu0 0.0
  %1004 = vmatprep.subr.mxu0 0.0
  %1005 = vmatpush2.msra.mxu0 0.0
  %1006 = vmatprep.subr.mxu0 0.0
  %1007 = vmatpush2.msra.mxu0 0.0
  %1008 = vmatprep.subr.mxu0 0.0
  %1009 = vmatpush2.msra.mxu0 0.0
  %1010 = vmatprep.subr.mxu0 0.0
  %1011 = vmatpush2.msra.mxu0 0.0
  %1012 = vmatprep.subr.mxu0 0.0
  %1013 = vmatpush2.msra.mxu0 0.0
  %1014 = vmatprep.subr.mxu0 0.0
  %1015 = vmatpush2.msra.mxu0 0.0
  %1016 = vmatprep.subr.mxu0 0.0
  %1017 = vmatpush2.msra.mxu0 0.0
  %1018 = vmatprep.subr.mxu0 0.0
  %1019 = vmatpush2.msra.mxu0 0.0
  %1020 = vmatprep.subr.mxu0 0.0
  %1021 = vmatpush2.msra.mxu0 0.0
  %1022 = vmatprep.subr.mxu0 0.0
  %1023 = vmatpush2.msra.mxu0 0.0
  %1024 = vmatprep.subr.mxu0 0.0
  %1025 = vmatpush2.msra.mxu0 0.0
  %1026 = vmatprep.subr.mxu0 0.0
  %1027 = vmatpush2.msra.mxu0 0.0
  %1028 = vmatprep.subr.mxu0 0.0
  %1029 = vmatpush2.msra.mxu0 0.0
  %1030 = vmatprep.subr.mxu0 0.0
  %1031 = vmatpush2.msra.mxu0 0.0
  %1032 = vmatprep.subr.mxu0 0.0
  %1033 = vmatpush2.msra.mxu0 0.0
  %1034 = vmatprep.mubr.f32.mxu0 0.0
  %v1035 = vand.u32 %v961, 4294901760
  %v1036 = vsub.f32 %v961, %v1035
  %v1037 = vand.u32 %v1036, 4294901760
  %v1038 = vsub.f32 %v1036, %v1037
  %v1039 = vand.u32 %v1038, 4294901760
  %1040 = vmatmul.mubr.f32.gmra.mxu0 %v1039
  %v1041 = vpop.f32.mrf.mxu0
  %v1042 = vadd.f32 %v952, %v1041
  %v1043 = vpop.f32.mrf.mxu0
  %1044 = vmatprep.mubr.f32.mxu0 0.0
  %v1045 = vand.u32 %v964, 4294901760
  %v1046 = vsub.f32 %v964, %v1045
  %v1047 = vand.u32 %v1046, 4294901760
  %v1048 = vsub.f32 %v1046, %v1047
  %v1049 = vand.u32 %v1048, 4294901760
  %1050 = vmatmul.mubr.f32.gmra.mxu0 %v1049
  %v1051 = vpop.f32.mrf.mxu0
  %v1052 = vadd.f32 %v957, %v1051
  %v1053 = vpop.f32.mrf.mxu0
  %1054 = vdwg.mxu0
  %1055 = vmatprep.subr.mxu0 0.0
  %1056 = vmatpush1.msra.mxu0 0.0
  %1057 = vmatprep.subr.mxu0 0.0
  %1058 = vmatpush1.msra.mxu0 0.0
  %1059 = vmatprep.subr.mxu0 0.0
  %1060 = vmatpush1.msra.mxu0 0.0
  %1061 = vmatprep.subr.mxu0 0.0
  %1062 = vmatpush1.msra.mxu0 0.0
  %1063 = vmatprep.subr.mxu0 0.0
  %1064 = vmatpush1.msra.mxu0 0.0
  %1065 = vmatprep.subr.mxu0 0.0
  %1066 = vmatpush1.msra.mxu0 0.0
  %1067 = vmatprep.subr.mxu0 0.0
  %1068 = vmatpush1.msra.mxu0 0.0
  %1069 = vmatprep.subr.mxu0 0.0
  %1070 = vmatpush1.msra.mxu0 0.0
  %1071 = vmatprep.subr.mxu0 0.0
  %1072 = vmatpush1.msra.mxu0 0.0
  %1073 = vmatprep.subr.mxu0 0.0
  %1074 = vmatpush1.msra.mxu0 0.0
  %1075 = vmatprep.subr.mxu0 0.0
  %1076 = vmatpush1.msra.mxu0 0.0
  %1077 = vmatprep.subr.mxu0 0.0
  %1078 = vmatpush1.msra.mxu0 0.0
  %1079 = vmatprep.subr.mxu0 0.0
  %v1080 = vand.u32 %v944, 4294901760
  %v1081 = vsub.f32 %v944, %v1080
  %v1082 = vand.u32 %v1081, 4294901760
  %v1083 = vsub.f32 %v1081, %v1082
  %v1084 = vand.u32 %v1083, 4294901760
  %1085 = vmatpush1.msra.mxu0 %v1084
  %1086 = vmatprep.subr.mxu0 0.0
  %v1087 = vand.u32 %v942, 4294901760
  %v1088 = vsub.f32 %v942, %v1087
  %v1089 = vand.u32 %v1088, 4294901760
  %v1090 = vsub.f32 %v1088, %v1089
  %v1091 = vand.u32 %v1090, 4294901760
  %1092 = vmatpush1.msra.mxu0 %v1091
  %1093 = vmatprep.subr.mxu0 0.0
  %v1094 = vand.u32 %v940, 4294901760
  %v1095 = vsub.f32 %v940, %v1094
  %v1096 = vand.u32 %v1095, 4294901760
  %v1097 = vsub.f32 %v1095, %v1096
  %v1098 = vand.u32 %v1097, 4294901760
  %1099 = vmatpush1.msra.mxu0 %v1098
  %1100 = vmatprep.subr.mxu0 0.0
  %v1101 = vand.u32 %v938, 4294901760
  %v1102 = vsub.f32 %v938, %v1101
  %v1103 = vand.u32 %v1102, 4294901760
  %v1104 = vsub.f32 %v1102, %v1103
  %v1105 = vand.u32 %v1104, 4294901760
  %1106 = vmatpush1.msra.mxu0 %v1105
  %1107 = vmatprep.subr.mxu0 0.0
  %1108 = vmatpush2.msra.mxu0 0.0
  %1109 = vmatprep.subr.mxu0 0.0
  %1110 = vmatpush2.msra.mxu0 0.0
  %1111 = vmatprep.subr.mxu0 0.0
  %1112 = vmatpush2.msra.mxu0 0.0
  %1113 = vmatprep.subr.mxu0 0.0
  %1114 = vmatpush2.msra.mxu0 0.0
  %1115 = vmatprep.subr.mxu0 0.0
  %1116 = vmatpush2.msra.mxu0 0.0
  %1117 = vmatprep.subr.mxu0 0.0
  %1118 = vmatpush2.msra.mxu0 0.0
  %1119 = vmatprep.subr.mxu0 0.0
  %1120 = vmatpush2.msra.mxu0 0.0
  %1121 = vmatprep.subr.mxu0 0.0
  %1122 = vmatpush2.msra.mxu0 0.0
  %1123 = vmatprep.subr.mxu0 0.0
  %1124 = vmatpush2.msra.mxu0 0.0
  %1125 = vmatprep.subr.mxu0 0.0
  %1126 = vmatpush2.msra.mxu0 0.0
  %1127 = vmatprep.subr.mxu0 0.0
  %1128 = vmatpush2.msra.mxu0 0.0
  %1129 = vmatprep.subr.mxu0 0.0
  %1130 = vmatpush2.msra.mxu0 0.0
  %1131 = vmatprep.subr.mxu0 0.0
  %1132 = vmatpush2.msra.mxu0 0.0
  %1133 = vmatprep.subr.mxu0 0.0
  %1134 = vmatpush2.msra.mxu0 0.0
  %1135 = vmatprep.subr.mxu0 0.0
  %1136 = vmatpush2.msra.mxu0 0.0
  %1137 = vmatprep.subr.mxu0 0.0
  %1138 = vmatpush2.msra.mxu0 0.0
  %1139 = vmatprep.mubr.f32.mxu0 0.0
  %v1140 = vand.u32 %v961, 4294901760
  %1141 = vmatmul.mubr.f32.gmra.mxu0 %v1140
  %v1142 = vpop.f32.mrf.mxu0
  %v1143 = vadd.f32 %v1042, %v1142
  %v1144 = vpop.f32.mrf.mxu0
  %1145 = vmatprep.mubr.f32.mxu0 0.0
  %v1146 = vand.u32 %v964, 4294901760
  %1147 = vmatmul.mubr.f32.gmra.mxu0 %v1146
  %v1148 = vpop.f32.mrf.mxu0
  %v1149 = vadd.f32 %v1052, %v1148
  %v1150 = vpop.f32.mrf.mxu0
  %1151 = vdwg.mxu0
  %1152 = vmatprep.subr.mxu0 0.0
  %1153 = vmatpush1.msra.mxu0 0.0
  %1154 = vmatprep.subr.mxu0 0.0
  %1155 = vmatpush1.msra.mxu0 0.0
  %1156 = vmatprep.subr.mxu0 0.0
  %1157 = vmatpush1.msra.mxu0 0.0
  %1158 = vmatprep.subr.mxu0 0.0
  %1159 = vmatpush1.msra.mxu0 0.0
  %1160 = vmatprep.subr.mxu0 0.0
  %1161 = vmatpush1.msra.mxu0 0.0
  %1162 = vmatprep.subr.mxu0 0.0
  %1163 = vmatpush1.msra.mxu0 0.0
  %1164 = vmatprep.subr.mxu0 0.0
  %1165 = vmatpush1.msra.mxu0 0.0
  %1166 = vmatprep.subr.mxu0 0.0
  %1167 = vmatpush1.msra.mxu0 0.0
  %1168 = vmatprep.subr.mxu0 0.0
  %1169 = vmatpush1.msra.mxu0 0.0
  %1170 = vmatprep.subr.mxu0 0.0
  %1171 = vmatpush1.msra.mxu0 0.0
  %1172 = vmatprep.subr.mxu0 0.0
  %1173 = vmatpush1.msra.mxu0 0.0
  %1174 = vmatprep.subr.mxu0 0.0
  %1175 = vmatpush1.msra.mxu0 0.0
  %1176 = vmatprep.subr.mxu0 0.0
  %v1177 = vand.u32 %v944, 4294901760
  %v1178 = vsub.f32 %v944, %v1177
  %1179 = vmatpush1.msra.mxu0 %v1178
  %1180 = vmatprep.subr.mxu0 0.0
  %v1181 = vand.u32 %v942, 4294901760
  %v1182 = vsub.f32 %v942, %v1181
  %1183 = vmatpush1.msra.mxu0 %v1182
  %1184 = vmatprep.subr.mxu0 0.0
  %v1185 = vand.u32 %v940, 4294901760
  %v1186 = vsub.f32 %v940, %v1185
  %1187 = vmatpush1.msra.mxu0 %v1186
  %1188 = vmatprep.subr.mxu0 0.0
  %v1189 = vand.u32 %v938, 4294901760
  %v1190 = vsub.f32 %v938, %v1189
  %1191 = vmatpush1.msra.mxu0 %v1190
  %1192 = vmatprep.subr.mxu0 0.0
  %1193 = vmatpush2.msra.mxu0 0.0
  %1194 = vmatprep.subr.mxu0 0.0
  %1195 = vmatpush2.msra.mxu0 0.0
  %1196 = vmatprep.subr.mxu0 0.0
  %1197 = vmatpush2.msra.mxu0 0.0
  %1198 = vmatprep.subr.mxu0 0.0
  %1199 = vmatpush2.msra.mxu0 0.0
  %1200 = vmatprep.subr.mxu0 0.0
  %1201 = vmatpush2.msra.mxu0 0.0
  %1202 = vmatprep.subr.mxu0 0.0
  %1203 = vmatpush2.msra.mxu0 0.0
  %1204 = vmatprep.subr.mxu0 0.0
  %1205 = vmatpush2.msra.mxu0 0.0
  %1206 = vmatprep.subr.mxu0 0.0
  %1207 = vmatpush2.msra.mxu0 0.0
  %1208 = vmatprep.subr.mxu0 0.0
  %1209 = vmatpush2.msra.mxu0 0.0
  %1210 = vmatprep.subr.mxu0 0.0
  %1211 = vmatpush2.msra.mxu0 0.0
  %1212 = vmatprep.subr.mxu0 0.0
  %1213 = vmatpush2.msra.mxu0 0.0
  %1214 = vmatprep.subr.mxu0 0.0
  %1215 = vmatpush2.msra.mxu0 0.0
  %1216 = vmatprep.subr.mxu0 0.0
  %1217 = vmatpush2.msra.mxu0 0.0
  %1218 = vmatprep.subr.mxu0 0.0
  %1219 = vmatpush2.msra.mxu0 0.0
  %1220 = vmatprep.subr.mxu0 0.0
  %1221 = vmatpush2.msra.mxu0 0.0
  %1222 = vmatprep.subr.mxu0 0.0
  %1223 = vmatpush2.msra.mxu0 0.0
  %1224 = vmatprep.mubr.f32.mxu0 0.0
  %v1225 = vand.u32 %v961, 4294901760
  %v1226 = vsub.f32 %v961, %v1225
  %1227 = vmatmul.mubr.f32.gmra.mxu0 %v1226
  %v1228 = vpop.f32.mrf.mxu0
  %v1229 = vadd.f32 %v1143, %v1228
  %v1230 = vpop.f32.mrf.mxu0
  %1231 = vmatprep.mubr.f32.mxu0 0.0
  %v1232 = vand.u32 %v964, 4294901760
  %v1233 = vsub.f32 %v964, %v1232
  %1234 = vmatmul.mubr.f32.gmra.mxu0 %v1233
  %v1235 = vpop.f32.mrf.mxu0
  %v1236 = vadd.f32 %v1149, %v1235
  %v1237 = vpop.f32.mrf.mxu0
  %1238 = vdwg.mxu0
  %1239 = vmatprep.subr.mxu0 0.0
  %1240 = vmatpush1.msra.mxu0 0.0
  %1241 = vmatprep.subr.mxu0 0.0
  %1242 = vmatpush1.msra.mxu0 0.0
  %1243 = vmatprep.subr.mxu0 0.0
  %1244 = vmatpush1.msra.mxu0 0.0
  %1245 = vmatprep.subr.mxu0 0.0
  %1246 = vmatpush1.msra.mxu0 0.0
  %1247 = vmatprep.subr.mxu0 0.0
  %1248 = vmatpush1.msra.mxu0 0.0
  %1249 = vmatprep.subr.mxu0 0.0
  %1250 = vmatpush1.msra.mxu0 0.0
  %1251 = vmatprep.subr.mxu0 0.0
  %1252 = vmatpush1.msra.mxu0 0.0
  %1253 = vmatprep.subr.mxu0 0.0
  %1254 = vmatpush1.msra.mxu0 0.0
  %1255 = vmatprep.subr.mxu0 0.0
  %1256 = vmatpush1.msra.mxu0 0.0
  %1257 = vmatprep.subr.mxu0 0.0
  %1258 = vmatpush1.msra.mxu0 0.0
  %1259 = vmatprep.subr.mxu0 0.0
  %1260 = vmatpush1.msra.mxu0 0.0
  %1261 = vmatprep.subr.mxu0 0.0
  %1262 = vmatpush1.msra.mxu0 0.0
  %1263 = vmatprep.subr.mxu0 0.0
  %v1264 = vand.u32 %v944, 4294901760
  %1265 = vmatpush1.msra.mxu0 %v1264
  %1266 = vmatprep.subr.mxu0 0.0
  %v1267 = vand.u32 %v942, 4294901760
  %1268 = vmatpush1.msra.mxu0 %v1267
  %1269 = vmatprep.subr.mxu0 0.0
  %v1270 = vand.u32 %v940, 4294901760
  %1271 = vmatpush1.msra.mxu0 %v1270
  %1272 = vmatprep.subr.mxu0 0.0
  %v1273 = vand.u32 %v938, 4294901760
  %1274 = vmatpush1.msra.mxu0 %v1273
  %1275 = vmatprep.subr.mxu0 0.0
  %1276 = vmatpush2.msra.mxu0 0.0
  %1277 = vmatprep.subr.mxu0 0.0
  %1278 = vmatpush2.msra.mxu0 0.0
  %1279 = vmatprep.subr.mxu0 0.0
  %1280 = vmatpush2.msra.mxu0 0.0
  %1281 = vmatprep.subr.mxu0 0.0
  %1282 = vmatpush2.msra.mxu0 0.0
  %1283 = vmatprep.subr.mxu0 0.0
  %1284 = vmatpush2.msra.mxu0 0.0
  %1285 = vmatprep.subr.mxu0 0.0
  %1286 = vmatpush2.msra.mxu0 0.0
  %1287 = vmatprep.subr.mxu0 0.0
  %1288 = vmatpush2.msra.mxu0 0.0
  %1289 = vmatprep.subr.mxu0 0.0
  %1290 = vmatpush2.msra.mxu0 0.0
  %1291 = vmatprep.subr.mxu0 0.0
  %1292 = vmatpush2.msra.mxu0 0.0
  %1293 = vmatprep.subr.mxu0 0.0
  %1294 = vmatpush2.msra.mxu0 0.0
  %1295 = vmatprep.subr.mxu0 0.0
  %1296 = vmatpush2.msra.mxu0 0.0
  %1297 = vmatprep.subr.mxu0 0.0
  %1298 = vmatpush2.msra.mxu0 0.0
  %1299 = vmatprep.subr.mxu0 0.0
  %1300 = vmatpush2.msra.mxu0 0.0
  %1301 = vmatprep.subr.mxu0 0.0
  %1302 = vmatpush2.msra.mxu0 0.0
  %1303 = vmatprep.subr.mxu0 0.0
  %1304 = vmatpush2.msra.mxu0 0.0
  %1305 = vmatprep.subr.mxu0 0.0
  %1306 = vmatpush2.msra.mxu0 0.0
  %1307 = vmatprep.mubr.f32.mxu0 0.0
  %v1308 = vand.u32 %v961, 4294901760
  %v1309 = vsub.f32 %v961, %v1308
  %v1310 = vand.u32 %v1309, 4294901760
  %1311 = vmatmul.mubr.f32.gmra.mxu0 %v1310
  %v1312 = vpop.f32.mrf.mxu0
  %v1313 = vadd.f32 %v1229, %v1312
  %v1314 = vpop.f32.mrf.mxu0
  %1315 = vmatprep.mubr.f32.mxu0 0.0
  %v1316 = vand.u32 %v964, 4294901760
  %v1317 = vsub.f32 %v964, %v1316
  %v1318 = vand.u32 %v1317, 4294901760
  %1319 = vmatmul.mubr.f32.gmra.mxu0 %v1318
  %v1320 = vpop.f32.mrf.mxu0
  %v1321 = vadd.f32 %v1236, %v1320
  %v1322 = vpop.f32.mrf.mxu0
  %1323 = vdwg.mxu0
  %1324 = vmatprep.subr.mxu0 0.0
  %1325 = vmatpush1.msra.mxu0 0.0
  %1326 = vmatprep.subr.mxu0 0.0
  %1327 = vmatpush1.msra.mxu0 0.0
  %1328 = vmatprep.subr.mxu0 0.0
  %1329 = vmatpush1.msra.mxu0 0.0
  %1330 = vmatprep.subr.mxu0 0.0
  %1331 = vmatpush1.msra.mxu0 0.0
  %1332 = vmatprep.subr.mxu0 0.0
  %1333 = vmatpush1.msra.mxu0 0.0
  %1334 = vmatprep.subr.mxu0 0.0
  %1335 = vmatpush1.msra.mxu0 0.0
  %1336 = vmatprep.subr.mxu0 0.0
  %1337 = vmatpush1.msra.mxu0 0.0
  %1338 = vmatprep.subr.mxu0 0.0
  %1339 = vmatpush1.msra.mxu0 0.0
  %1340 = vmatprep.subr.mxu0 0.0
  %1341 = vmatpush1.msra.mxu0 0.0
  %1342 = vmatprep.subr.mxu0 0.0
  %1343 = vmatpush1.msra.mxu0 0.0
  %1344 = vmatprep.subr.mxu0 0.0
  %1345 = vmatpush1.msra.mxu0 0.0
  %1346 = vmatprep.subr.mxu0 0.0
  %1347 = vmatpush1.msra.mxu0 0.0
  %1348 = vmatprep.subr.mxu0 0.0
  %v1349 = vand.u32 %v944, 4294901760
  %v1350 = vsub.f32 %v944, %v1349
  %v1351 = vand.u32 %v1350, 4294901760
  %1352 = vmatpush1.msra.mxu0 %v1351
  %1353 = vmatprep.subr.mxu0 0.0
  %v1354 = vand.u32 %v942, 4294901760
  %v1355 = vsub.f32 %v942, %v1354
  %v1356 = vand.u32 %v1355, 4294901760
  %1357 = vmatpush1.msra.mxu0 %v1356
  %1358 = vmatprep.subr.mxu0 0.0
  %v1359 = vand.u32 %v940, 4294901760
  %v1360 = vsub.f32 %v940, %v1359
  %v1361 = vand.u32 %v1360, 4294901760
  %1362 = vmatpush1.msra.mxu0 %v1361
  %1363 = vmatprep.subr.mxu0 0.0
  %v1364 = vand.u32 %v938, 4294901760
  %v1365 = vsub.f32 %v938, %v1364
  %v1366 = vand.u32 %v1365, 4294901760
  %1367 = vmatpush1.msra.mxu0 %v1366
  %1368 = vmatprep.subr.mxu0 0.0
  %1369 = vmatpush2.msra.mxu0 0.0
  %1370 = vmatprep.subr.mxu0 0.0
  %1371 = vmatpush2.msra.mxu0 0.0
  %1372 = vmatprep.subr.mxu0 0.0
  %1373 = vmatpush2.msra.mxu0 0.0
  %1374 = vmatprep.subr.mxu0 0.0
  %1375 = vmatpush2.msra.mxu0 0.0
  %1376 = vmatprep.subr.mxu0 0.0
  %1377 = vmatpush2.msra.mxu0 0.0
  %1378 = vmatprep.subr.mxu0 0.0
  %1379 = vmatpush2.msra.mxu0 0.0
  %1380 = vmatprep.subr.mxu0 0.0
  %1381 = vmatpush2.msra.mxu0 0.0
  %1382 = vmatprep.subr.mxu0 0.0
  %1383 = vmatpush2.msra.mxu0 0.0
  %1384 = vmatprep.subr.mxu0 0.0
  %1385 = vmatpush2.msra.mxu0 0.0
  %1386 = vmatprep.subr.mxu0 0.0
  %1387 = vmatpush2.msra.mxu0 0.0
  %1388 = vmatprep.subr.mxu0 0.0
  %1389 = vmatpush2.msra.mxu0 0.0
  %1390 = vmatprep.subr.mxu0 0.0
  %1391 = vmatpush2.msra.mxu0 0.0
  %1392 = vmatprep.subr.mxu0 0.0
  %1393 = vmatpush2.msra.mxu0 0.0
  %1394 = vmatprep.subr.mxu0 0.0
  %1395 = vmatpush2.msra.mxu0 0.0
  %1396 = vmatprep.subr.mxu0 0.0
  %1397 = vmatpush2.msra.mxu0 0.0
  %1398 = vmatprep.subr.mxu0 0.0
  %1399 = vmatpush2.msra.mxu0 0.0
  %1400 = vmatprep.mubr.f32.mxu0 0.0
  %v1401 = vand.u32 %v961, 4294901760
  %1402 = vmatmul.mubr.f32.gmra.mxu0 %v1401
  %v1403 = vpop.f32.mrf.mxu0
  %v1404 = vadd.f32 %v1313, %v1403
  %v1405 = vpop.f32.mrf.mxu0
  %1406 = vmatprep.mubr.f32.mxu0 0.0
  %v1407 = vand.u32 %v964, 4294901760
  %1408 = vmatmul.mubr.f32.gmra.mxu0 %v1407
  %v1409 = vpop.f32.mrf.mxu0
  %v1410 = vadd.f32 %v1321, %v1409
  %v1411 = vpop.f32.mrf.mxu0
  %1412 = vdwg.mxu0
  %1413 = vmatprep.subr.mxu0 0.0
  %1414 = vmatpush1.msra.mxu0 0.0
  %1415 = vmatprep.subr.mxu0 0.0
  %1416 = vmatpush1.msra.mxu0 0.0
  %1417 = vmatprep.subr.mxu0 0.0
  %1418 = vmatpush1.msra.mxu0 0.0
  %1419 = vmatprep.subr.mxu0 0.0
  %1420 = vmatpush1.msra.mxu0 0.0
  %1421 = vmatprep.subr.mxu0 0.0
  %1422 = vmatpush1.msra.mxu0 0.0
  %1423 = vmatprep.subr.mxu0 0.0
  %1424 = vmatpush1.msra.mxu0 0.0
  %1425 = vmatprep.subr.mxu0 0.0
  %1426 = vmatpush1.msra.mxu0 0.0
  %1427 = vmatprep.subr.mxu0 0.0
  %1428 = vmatpush1.msra.mxu0 0.0
  %1429 = vmatprep.subr.mxu0 0.0
  %1430 = vmatpush1.msra.mxu0 0.0
  %1431 = vmatprep.subr.mxu0 0.0
  %1432 = vmatpush1.msra.mxu0 0.0
  %1433 = vmatprep.subr.mxu0 0.0
  %1434 = vmatpush1.msra.mxu0 0.0
  %1435 = vmatprep.subr.mxu0 0.0
  %1436 = vmatpush1.msra.mxu0 0.0
  %1437 = vmatprep.subr.mxu0 0.0
  %v1438 = vand.u32 %v944, 4294901760
  %1439 = vmatpush1.msra.mxu0 %v1438
  %1440 = vmatprep.subr.mxu0 0.0
  %v1441 = vand.u32 %v942, 4294901760
  %1442 = vmatpush1.msra.mxu0 %v1441
  %1443 = vmatprep.subr.mxu0 0.0
  %v1444 = vand.u32 %v940, 4294901760
  %1445 = vmatpush1.msra.mxu0 %v1444
  %1446 = vmatprep.subr.mxu0 0.0
  %v1447 = vand.u32 %v938, 4294901760
  %1448 = vmatpush1.msra.mxu0 %v1447
  %1449 = vmatprep.subr.mxu0 0.0
  %1450 = vmatpush2.msra.mxu0 0.0
  %1451 = vmatprep.subr.mxu0 0.0
  %1452 = vmatpush2.msra.mxu0 0.0
  %1453 = vmatprep.subr.mxu0 0.0
  %1454 = vmatpush2.msra.mxu0 0.0
  %1455 = vmatprep.subr.mxu0 0.0
  %1456 = vmatpush2.msra.mxu0 0.0
  %1457 = vmatprep.subr.mxu0 0.0
  %1458 = vmatpush2.msra.mxu0 0.0
  %1459 = vmatprep.subr.mxu0 0.0
  %1460 = vmatpush2.msra.mxu0 0.0
  %1461 = vmatprep.subr.mxu0 0.0
  %1462 = vmatpush2.msra.mxu0 0.0
  %1463 = vmatprep.subr.mxu0 0.0
  %1464 = vmatpush2.msra.mxu0 0.0
  %1465 = vmatprep.subr.mxu0 0.0
  %1466 = vmatpush2.msra.mxu0 0.0
  %1467 = vmatprep.subr.mxu0 0.0
  %1468 = vmatpush2.msra.mxu0 0.0
  %1469 = vmatprep.subr.mxu0 0.0
  %1470 = vmatpush2.msra.mxu0 0.0
  %1471 = vmatprep.subr.mxu0 0.0
  %1472 = vmatpush2.msra.mxu0 0.0
  %1473 = vmatprep.subr.mxu0 0.0
  %1474 = vmatpush2.msra.mxu0 0.0
  %1475 = vmatprep.subr.mxu0 0.0
  %1476 = vmatpush2.msra.mxu0 0.0
  %1477 = vmatprep.subr.mxu0 0.0
  %1478 = vmatpush2.msra.mxu0 0.0
  %1479 = vmatprep.subr.mxu0 0.0
  %1480 = vmatpush2.msra.mxu0 0.0
  %1481 = vmatprep.mubr.f32.mxu0 0.0
  %v1482 = vand.u32 %v961, 4294901760
  %1483 = vmatmul.mubr.f32.gmra.mxu0 %v1482
  %v1484 = vpop.f32.mrf.mxu0
  %v1485 = vadd.f32 %v1404, %v1484
  %v1486 = vpop.f32.mrf.mxu0
  %1487 = vmatprep.mubr.f32.mxu0 0.0
  %v1488 = vand.u32 %v964, 4294901760
  %1489 = vmatmul.mubr.f32.gmra.mxu0 %v1488
  %v1490 = vpop.f32.mrf.mxu0
  %v1491 = vadd.f32 %v1410, %v1490
  %v1492 = vpop.f32.mrf.mxu0
  %1493 = vdwg.mxu0
  %v1494 = vxor.u32 %v1485, 2147483648
  %v1495 = vxor.u32 %v1491, 2147483648
  %v1496 = vmul.f32 %v1494, 1.442695
  %v1497 = vpow.pop %v1496
  %v1498 = vmul.f32 %v1495, 1.442695
  %v1499 = vpow.pop %v1498
  %v1500 = vadd.f32 %v1497, 1.0
  %v1501 = vadd.f32 %v1499, 1.0
  %v1502 = vrcp.pop %v1500
  %v1503 = vmul.f32 1.0, %v1502
  %v1504 = vrcp.pop %v1501
  %v1505 = vmul.f32 1.0, %v1504
  %v1506 = vld [vmem:[%s3] sm:$0xff]
  %v1507 = vld [vmem:[%s9] sm:$0xff]
  %1509 = vset.pattern.permute.xlu0 0
  %1510 = vperm.xlu0 %1509, %v1507
  %v1511 = vpop.permute.xlu0 %1510
  %vm1513 = vcmask 130048
  %v1515 = vsel %vm1513, %v1506, 0
  %1517 = vmatprep.subr.mxu0 0.0
  %1518 = vmatpush1.msra.mxu0 0.0
  %1519 = vmatprep.subr.mxu0 0.0
  %1520 = vmatpush1.msra.mxu0 0.0
  %1521 = vmatprep.subr.mxu0 0.0
  %1522 = vmatpush1.msra.mxu0 0.0
  %1523 = vmatprep.subr.mxu0 0.0
  %1524 = vmatpush1.msra.mxu0 0.0
  %1525 = vmatprep.subr.mxu0 0.0
  %1526 = vmatpush1.msra.mxu0 0.0
  %1527 = vmatprep.subr.mxu0 0.0
  %1528 = vmatpush1.msra.mxu0 0.0
  %1529 = vmatprep.subr.mxu0 0.0
  %1530 = vmatpush1.msra.mxu0 0.0
  %1531 = vmatprep.subr.mxu0 0.0
  %1532 = vmatpush1.msra.mxu0 0.0
  %1533 = vmatprep.subr.mxu0 0.0
  %1534 = vmatpush1.msra.mxu0 0.0
  %1535 = vmatprep.subr.mxu0 0.0
  %1536 = vmatpush1.msra.mxu0 0.0
  %1537 = vmatprep.subr.mxu0 0.0
  %1538 = vmatpush1.msra.mxu0 0.0
  %1539 = vmatprep.subr.mxu0 0.0
  %1540 = vmatpush1.msra.mxu0 0.0
  %1541 = vmatprep.subr.mxu0 0.0
  %1542 = vmatpush1.msra.mxu0 0.0
  %1543 = vmatprep.subr.mxu0 0.0
  %1544 = vmatpush1.msra.mxu0 0.0
  %1545 = vmatprep.subr.mxu0 0.0
  %v1546 = vand.u32 %v1505, 4294901760
  %1547 = vmatpush1.msra.mxu0 %v1546
  %1548 = vmatprep.subr.mxu0 0.0
  %v1549 = vand.u32 %v1503, 4294901760
  %1550 = vmatpush1.msra.mxu0 %v1549
  %1551 = vmatprep.subr.mxu0 0.0
  %1552 = vmatpush2.msra.mxu0 0.0
  %1553 = vmatprep.subr.mxu0 0.0
  %1554 = vmatpush2.msra.mxu0 0.0
  %1555 = vmatprep.subr.mxu0 0.0
  %1556 = vmatpush2.msra.mxu0 0.0
  %1557 = vmatprep.subr.mxu0 0.0
  %1558 = vmatpush2.msra.mxu0 0.0
  %1559 = vmatprep.subr.mxu0 0.0
  %1560 = vmatpush2.msra.mxu0 0.0
  %1561 = vmatprep.subr.mxu0 0.0
  %1562 = vmatpush2.msra.mxu0 0.0
  %1563 = vmatprep.subr.mxu0 0.0
  %1564 = vmatpush2.msra.mxu0 0.0
  %1565 = vmatprep.subr.mxu0 0.0
  %1566 = vmatpush2.msra.mxu0 0.0
  %1567 = vmatprep.subr.mxu0 0.0
  %1568 = vmatpush2.msra.mxu0 0.0
  %1569 = vmatprep.subr.mxu0 0.0
  %1570 = vmatpush2.msra.mxu0 0.0
  %1571 = vmatprep.subr.mxu0 0.0
  %1572 = vmatpush2.msra.mxu0 0.0
  %1573 = vmatprep.subr.mxu0 0.0
  %1574 = vmatpush2.msra.mxu0 0.0
  %1575 = vmatprep.subr.mxu0 0.0
  %1576 = vmatpush2.msra.mxu0 0.0
  %1577 = vmatprep.subr.mxu0 0.0
  %1578 = vmatpush2.msra.mxu0 0.0
  %1579 = vmatprep.subr.mxu0 0.0
  %1580 = vmatpush2.msra.mxu0 0.0
  %1581 = vmatprep.subr.mxu0 0.0
  %1582 = vmatpush2.msra.mxu0 0.0
  %1583 = vmatprep.mubr.f32.mxu0 0.0
  %v1584 = vand.u32 %v1515, 4294901760
  %v1585 = vsub.f32 %v1515, %v1584
  %v1586 = vand.u32 %v1585, 4294901760
  %v1587 = vsub.f32 %v1585, %v1586
  %v1588 = vand.u32 %v1587, 4294901760
  %1589 = vmatmul.mubr.f32.gmra.mxu0 %v1588
  %v1590 = vpop.f32.mrf.mxu0
  %v1591 = vadd.f32 %v1511, %v1590
  %v1592 = vpop.f32.mrf.mxu0
  %1593 = vdwg.mxu0
  %1594 = vmatprep.subr.mxu0 0.0
  %1595 = vmatpush1.msra.mxu0 0.0
  %1596 = vmatprep.subr.mxu0 0.0
  %1597 = vmatpush1.msra.mxu0 0.0
  %1598 = vmatprep.subr.mxu0 0.0
  %1599 = vmatpush1.msra.mxu0 0.0
  %1600 = vmatprep.subr.mxu0 0.0
  %1601 = vmatpush1.msra.mxu0 0.0
  %1602 = vmatprep.subr.mxu0 0.0
  %1603 = vmatpush1.msra.mxu0 0.0
  %1604 = vmatprep.subr.mxu0 0.0
  %1605 = vmatpush1.msra.mxu0 0.0
  %1606 = vmatprep.subr.mxu0 0.0
  %1607 = vmatpush1.msra.mxu0 0.0
  %1608 = vmatprep.subr.mxu0 0.0
  %1609 = vmatpush1.msra.mxu0 0.0
  %1610 = vmatprep.subr.mxu0 0.0
  %1611 = vmatpush1.msra.mxu0 0.0
  %1612 = vmatprep.subr.mxu0 0.0
  %1613 = vmatpush1.msra.mxu0 0.0
  %1614 = vmatprep.subr.mxu0 0.0
  %1615 = vmatpush1.msra.mxu0 0.0
  %1616 = vmatprep.subr.mxu0 0.0
  %1617 = vmatpush1.msra.mxu0 0.0
  %1618 = vmatprep.subr.mxu0 0.0
  %1619 = vmatpush1.msra.mxu0 0.0
  %1620 = vmatprep.subr.mxu0 0.0
  %1621 = vmatpush1.msra.mxu0 0.0
  %1622 = vmatprep.subr.mxu0 0.0
  %v1623 = vand.u32 %v1505, 4294901760
  %v1624 = vsub.f32 %v1505, %v1623
  %v1625 = vand.u32 %v1624, 4294901760
  %v1626 = vsub.f32 %v1624, %v1625
  %v1627 = vand.u32 %v1626, 4294901760
  %1628 = vmatpush1.msra.mxu0 %v1627
  %1629 = vmatprep.subr.mxu0 0.0
  %v1630 = vand.u32 %v1503, 4294901760
  %v1631 = vsub.f32 %v1503, %v1630
  %v1632 = vand.u32 %v1631, 4294901760
  %v1633 = vsub.f32 %v1631, %v1632
  %v1634 = vand.u32 %v1633, 4294901760
  %1635 = vmatpush1.msra.mxu0 %v1634
  %1636 = vmatprep.subr.mxu0 0.0
  %1637 = vmatpush2.msra.mxu0 0.0
  %1638 = vmatprep.subr.mxu0 0.0
  %1639 = vmatpush2.msra.mxu0 0.0
  %1640 = vmatprep.subr.mxu0 0.0
  %1641 = vmatpush2.msra.mxu0 0.0
  %1642 = vmatprep.subr.mxu0 0.0
  %1643 = vmatpush2.msra.mxu0 0.0
  %1644 = vmatprep.subr.mxu0 0.0
  %1645 = vmatpush2.msra.mxu0 0.0
  %1646 = vmatprep.subr.mxu0 0.0
  %1647 = vmatpush2.msra.mxu0 0.0
  %1648 = vmatprep.subr.mxu0 0.0
  %1649 = vmatpush2.msra.mxu0 0.0
  %1650 = vmatprep.subr.mxu0 0.0
  %1651 = vmatpush2.msra.mxu0 0.0
  %1652 = vmatprep.subr.mxu0 0.0
  %1653 = vmatpush2.msra.mxu0 0.0
  %1654 = vmatprep.subr.mxu0 0.0
  %1655 = vmatpush2.msra.mxu0 0.0
  %1656 = vmatprep.subr.mxu0 0.0
  %1657 = vmatpush2.msra.mxu0 0.0
  %1658 = vmatprep.subr.mxu0 0.0
  %1659 = vmatpush2.msra.mxu0 0.0
  %1660 = vmatprep.subr.mxu0 0.0
  %1661 = vmatpush2.msra.mxu0 0.0
  %1662 = vmatprep.subr.mxu0 0.0
  %1663 = vmatpush2.msra.mxu0 0.0
  %1664 = vmatprep.subr.mxu0 0.0
  %1665 = vmatpush2.msra.mxu0 0.0
  %1666 = vmatprep.subr.mxu0 0.0
  %1667 = vmatpush2.msra.mxu0 0.0
  %1668 = vmatprep.mubr.f32.mxu0 0.0
  %v1669 = vand.u32 %v1515, 4294901760
  %1670 = vmatmul.mubr.f32.gmra.mxu0 %v1669
  %v1671 = vpop.f32.mrf.mxu0
  %v1672 = vadd.f32 %v1591, %v1671
  %v1673 = vpop.f32.mrf.mxu0
  %1674 = vdwg.mxu0
  %1675 = vmatprep.subr.mxu0 0.0
  %1676 = vmatpush1.msra.mxu0 0.0
  %1677 = vmatprep.subr.mxu0 0.0
  %1678 = vmatpush1.msra.mxu0 0.0
  %1679 = vmatprep.subr.mxu0 0.0
  %1680 = vmatpush1.msra.mxu0 0.0
  %1681 = vmatprep.subr.mxu0 0.0
  %1682 = vmatpush1.msra.mxu0 0.0
  %1683 = vmatprep.subr.mxu0 0.0
  %1684 = vmatpush1.msra.mxu0 0.0
  %1685 = vmatprep.subr.mxu0 0.0
  %1686 = vmatpush1.msra.mxu0 0.0
  %1687 = vmatprep.subr.mxu0 0.0
  %1688 = vmatpush1.msra.mxu0 0.0
  %1689 = vmatprep.subr.mxu0 0.0
  %1690 = vmatpush1.msra.mxu0 0.0
  %1691 = vmatprep.subr.mxu0 0.0
  %1692 = vmatpush1.msra.mxu0 0.0
  %1693 = vmatprep.subr.mxu0 0.0
  %1694 = vmatpush1.msra.mxu0 0.0
  %1695 = vmatprep.subr.mxu0 0.0
  %1696 = vmatpush1.msra.mxu0 0.0
  %1697 = vmatprep.subr.mxu0 0.0
  %1698 = vmatpush1.msra.mxu0 0.0
  %1699 = vmatprep.subr.mxu0 0.0
  %1700 = vmatpush1.msra.mxu0 0.0
  %1701 = vmatprep.subr.mxu0 0.0
  %1702 = vmatpush1.msra.mxu0 0.0
  %1703 = vmatprep.subr.mxu0 0.0
  %v1704 = vand.u32 %v1505, 4294901760
  %v1705 = vsub.f32 %v1505, %v1704
  %1706 = vmatpush1.msra.mxu0 %v1705
  %1707 = vmatprep.subr.mxu0 0.0
  %v1708 = vand.u32 %v1503, 4294901760
  %v1709 = vsub.f32 %v1503, %v1708
  %1710 = vmatpush1.msra.mxu0 %v1709
  %1711 = vmatprep.subr.mxu0 0.0
  %1712 = vmatpush2.msra.mxu0 0.0
  %1713 = vmatprep.subr.mxu0 0.0
  %1714 = vmatpush2.msra.mxu0 0.0
  %1715 = vmatprep.subr.mxu0 0.0
  %1716 = vmatpush2.msra.mxu0 0.0
  %1717 = vmatprep.subr.mxu0 0.0
  %1718 = vmatpush2.msra.mxu0 0.0
  %1719 = vmatprep.subr.mxu0 0.0
  %1720 = vmatpush2.msra.mxu0 0.0
  %1721 = vmatprep.subr.mxu0 0.0
  %1722 = vmatpush2.msra.mxu0 0.0
  %1723 = vmatprep.subr.mxu0 0.0
  %1724 = vmatpush2.msra.mxu0 0.0
  %1725 = vmatprep.subr.mxu0 0.0
  %1726 = vmatpush2.msra.mxu0 0.0
  %1727 = vmatprep.subr.mxu0 0.0
  %1728 = vmatpush2.msra.mxu0 0.0
  %1729 = vmatprep.subr.mxu0 0.0
  %1730 = vmatpush2.msra.mxu0 0.0
  %1731 = vmatprep.subr.mxu0 0.0
  %1732 = vmatpush2.msra.mxu0 0.0
  %1733 = vmatprep.subr.mxu0 0.0
  %1734 = vmatpush2.msra.mxu0 0.0
  %1735 = vmatprep.subr.mxu0 0.0
  %1736 = vmatpush2.msra.mxu0 0.0
  %1737 = vmatprep.subr.mxu0 0.0
  %1738 = vmatpush2.msra.mxu0 0.0
  %1739 = vmatprep.subr.mxu0 0.0
  %1740 = vmatpush2.msra.mxu0 0.0
  %1741 = vmatprep.subr.mxu0 0.0
  %1742 = vmatpush2.msra.mxu0 0.0
  %1743 = vmatprep.mubr.f32.mxu0 0.0
  %v1744 = vand.u32 %v1515, 4294901760
  %v1745 = vsub.f32 %v1515, %v1744
  %1746 = vmatmul.mubr.f32.gmra.mxu0 %v1745
  %v1747 = vpop.f32.mrf.mxu0
  %v1748 = vadd.f32 %v1672, %v1747
  %v1749 = vpop.f32.mrf.mxu0
  %1750 = vdwg.mxu0
  %1751 = vmatprep.subr.mxu0 0.0
  %1752 = vmatpush1.msra.mxu0 0.0
  %1753 = vmatprep.subr.mxu0 0.0
  %1754 = vmatpush1.msra.mxu0 0.0
  %1755 = vmatprep.subr.mxu0 0.0
  %1756 = vmatpush1.msra.mxu0 0.0
  %1757 = vmatprep.subr.mxu0 0.0
  %1758 = vmatpush1.msra.mxu0 0.0
  %1759 = vmatprep.subr.mxu0 0.0
  %1760 = vmatpush1.msra.mxu0 0.0
  %1761 = vmatprep.subr.mxu0 0.0
  %1762 = vmatpush1.msra.mxu0 0.0
  %1763 = vmatprep.subr.mxu0 0.0
  %1764 = vmatpush1.msra.mxu0 0.0
  %1765 = vmatprep.subr.mxu0 0.0
  %1766 = vmatpush1.msra.mxu0 0.0
  %1767 = vmatprep.subr.mxu0 0.0
  %1768 = vmatpush1.msra.mxu0 0.0
  %1769 = vmatprep.subr.mxu0 0.0
  %1770 = vmatpush1.msra.mxu0 0.0
  %1771 = vmatprep.subr.mxu0 0.0
  %1772 = vmatpush1.msra.mxu0 0.0
  %1773 = vmatprep.subr.mxu0 0.0
  %1774 = vmatpush1.msra.mxu0 0.0
  %1775 = vmatprep.subr.mxu0 0.0
  %1776 = vmatpush1.msra.mxu0 0.0
  %1777 = vmatprep.subr.mxu0 0.0
  %1778 = vmatpush1.msra.mxu0 0.0
  %1779 = vmatprep.subr.mxu0 0.0
  %v1780 = vand.u32 %v1505, 4294901760
  %1781 = vmatpush1.msra.mxu0 %v1780
  %1782 = vmatprep.subr.mxu0 0.0
  %v1783 = vand.u32 %v1503, 4294901760
  %1784 = vmatpush1.msra.mxu0 %v1783
  %1785 = vmatprep.subr.mxu0 0.0
  %1786 = vmatpush2.msra.mxu0 0.0
  %1787 = vmatprep.subr.mxu0 0.0
  %1788 = vmatpush2.msra.mxu0 0.0
  %1789 = vmatprep.subr.mxu0 0.0
  %1790 = vmatpush2.msra.mxu0 0.0
  %1791 = vmatprep.subr.mxu0 0.0
  %1792 = vmatpush2.msra.mxu0 0.0
  %1793 = vmatprep.subr.mxu0 0.0
  %1794 = vmatpush2.msra.mxu0 0.0
  %1795 = vmatprep.subr.mxu0 0.0
  %1796 = vmatpush2.msra.mxu0 0.0
  %1797 = vmatprep.subr.mxu0 0.0
  %1798 = vmatpush2.msra.mxu0 0.0
  %1799 = vmatprep.subr.mxu0 0.0
  %1800 = vmatpush2.msra.mxu0 0.0
  %1801 = vmatprep.subr.mxu0 0.0
  %1802 = vmatpush2.msra.mxu0 0.0
  %1803 = vmatprep.subr.mxu0 0.0
  %1804 = vmatpush2.msra.mxu0 0.0
  %1805 = vmatprep.subr.mxu0 0.0
  %1806 = vmatpush2.msra.mxu0 0.0
  %1807 = vmatprep.subr.mxu0 0.0
  %1808 = vmatpush2.msra.mxu0 0.0
  %1809 = vmatprep.subr.mxu0 0.0
  %1810 = vmatpush2.msra.mxu0 0.0
  %1811 = vmatprep.subr.mxu0 0.0
  %1812 = vmatpush2.msra.mxu0 0.0
  %1813 = vmatprep.subr.mxu0 0.0
  %1814 = vmatpush2.msra.mxu0 0.0
  %1815 = vmatprep.subr.mxu0 0.0
  %1816 = vmatpush2.msra.mxu0 0.0
  %1817 = vmatprep.mubr.f32.mxu0 0.0
  %v1818 = vand.u32 %v1515, 4294901760
  %v1819 = vsub.f32 %v1515, %v1818
  %v1820 = vand.u32 %v1819, 4294901760
  %1821 = vmatmul.mubr.f32.gmra.mxu0 %v1820
  %v1822 = vpop.f32.mrf.mxu0
  %v1823 = vadd.f32 %v1748, %v1822
  %v1824 = vpop.f32.mrf.mxu0
  %1825 = vdwg.mxu0
  %1826 = vmatprep.subr.mxu0 0.0
  %1827 = vmatpush1.msra.mxu0 0.0
  %1828 = vmatprep.subr.mxu0 0.0
  %1829 = vmatpush1.msra.mxu0 0.0
  %1830 = vmatprep.subr.mxu0 0.0
  %1831 = vmatpush1.msra.mxu0 0.0
  %1832 = vmatprep.subr.mxu0 0.0
  %1833 = vmatpush1.msra.mxu0 0.0
  %1834 = vmatprep.subr.mxu0 0.0
  %1835 = vmatpush1.msra.mxu0 0.0
  %1836 = vmatprep.subr.mxu0 0.0
  %1837 = vmatpush1.msra.mxu0 0.0
  %1838 = vmatprep.subr.mxu0 0.0
  %1839 = vmatpush1.msra.mxu0 0.0
  %1840 = vmatprep.subr.mxu0 0.0
  %1841 = vmatpush1.msra.mxu0 0.0
  %1842 = vmatprep.subr.mxu0 0.0
  %1843 = vmatpush1.msra.mxu0 0.0
  %1844 = vmatprep.subr.mxu0 0.0
  %1845 = vmatpush1.msra.mxu0 0.0
  %1846 = vmatprep.subr.mxu0 0.0
  %1847 = vmatpush1.msra.mxu0 0.0
  %1848 = vmatprep.subr.mxu0 0.0
  %1849 = vmatpush1.msra.mxu0 0.0
  %1850 = vmatprep.subr.mxu0 0.0
  %1851 = vmatpush1.msra.mxu0 0.0
  %1852 = vmatprep.subr.mxu0 0.0
  %1853 = vmatpush1.msra.mxu0 0.0
  %1854 = vmatprep.subr.mxu0 0.0
  %v1855 = vand.u32 %v1505, 4294901760
  %v1856 = vsub.f32 %v1505, %v1855
  %v1857 = vand.u32 %v1856, 4294901760
  %1858 = vmatpush1.msra.mxu0 %v1857
  %1859 = vmatprep.subr.mxu0 0.0
  %v1860 = vand.u32 %v1503, 4294901760
  %v1861 = vsub.f32 %v1503, %v1860
  %v1862 = vand.u32 %v1861, 4294901760
  %1863 = vmatpush1.msra.mxu0 %v1862
  %1864 = vmatprep.subr.mxu0 0.0
  %1865 = vmatpush2.msra.mxu0 0.0
  %1866 = vmatprep.subr.mxu0 0.0
  %1867 = vmatpush2.msra.mxu0 0.0
  %1868 = vmatprep.subr.mxu0 0.0
  %1869 = vmatpush2.msra.mxu0 0.0
  %1870 = vmatprep.subr.mxu0 0.0
  %1871 = vmatpush2.msra.mxu0 0.0
  %1872 = vmatprep.subr.mxu0 0.0
  %1873 = vmatpush2.msra.mxu0 0.0
  %1874 = vmatprep.subr.mxu0 0.0
  %1875 = vmatpush2.msra.mxu0 0.0
  %1876 = vmatprep.subr.mxu0 0.0
  %1877 = vmatpush2.msra.mxu0 0.0
  %1878 = vmatprep.subr.mxu0 0.0
  %1879 = vmatpush2.msra.mxu0 0.0
  %1880 = vmatprep.subr.mxu0 0.0
  %1881 = vmatpush2.msra.mxu0 0.0
  %1882 = vmatprep.subr.mxu0 0.0
  %1883 = vmatpush2.msra.mxu0 0.0
  %1884 = vmatprep.subr.mxu0 0.0
  %1885 = vmatpush2.msra.mxu0 0.0
  %1886 = vmatprep.subr.mxu0 0.0
  %1887 = vmatpush2.msra.mxu0 0.0
  %1888 = vmatprep.subr.mxu0 0.0
  %1889 = vmatpush2.msra.mxu0 0.0
  %1890 = vmatprep.subr.mxu0 0.0
  %1891 = vmatpush2.msra.mxu0 0.0
  %1892 = vmatprep.subr.mxu0 0.0
  %1893 = vmatpush2.msra.mxu0 0.0
  %1894 = vmatprep.subr.mxu0 0.0
  %1895 = vmatpush2.msra.mxu0 0.0
  %1896 = vmatprep.mubr.f32.mxu0 0.0
  %v1897 = vand.u32 %v1515, 4294901760
  %1898 = vmatmul.mubr.f32.gmra.mxu0 %v1897
  %v1899 = vpop.f32.mrf.mxu0
  %v1900 = vadd.f32 %v1823, %v1899
  %v1901 = vpop.f32.mrf.mxu0
  %1902 = vdwg.mxu0
  %1903 = vmatprep.subr.mxu0 0.0
  %1904 = vmatpush1.msra.mxu0 0.0
  %1905 = vmatprep.subr.mxu0 0.0
  %1906 = vmatpush1.msra.mxu0 0.0
  %1907 = vmatprep.subr.mxu0 0.0
  %1908 = vmatpush1.msra.mxu0 0.0
  %1909 = vmatprep.subr.mxu0 0.0
  %1910 = vmatpush1.msra.mxu0 0.0
  %1911 = vmatprep.subr.mxu0 0.0
  %1912 = vmatpush1.msra.mxu0 0.0
  %1913 = vmatprep.subr.mxu0 0.0
  %1914 = vmatpush1.msra.mxu0 0.0
  %1915 = vmatprep.subr.mxu0 0.0
  %1916 = vmatpush1.msra.mxu0 0.0
  %1917 = vmatprep.subr.mxu0 0.0
  %1918 = vmatpush1.msra.mxu0 0.0
  %1919 = vmatprep.subr.mxu0 0.0
  %1920 = vmatpush1.msra.mxu0 0.0
  %1921 = vmatprep.subr.mxu0 0.0
  %1922 = vmatpush1.msra.mxu0 0.0
  %1923 = vmatprep.subr.mxu0 0.0
  %1924 = vmatpush1.msra.mxu0 0.0
  %1925 = vmatprep.subr.mxu0 0.0
  %1926 = vmatpush1.msra.mxu0 0.0
  %1927 = vmatprep.subr.mxu0 0.0
  %1928 = vmatpush1.msra.mxu0 0.0
  %1929 = vmatprep.subr.mxu0 0.0
  %1930 = vmatpush1.msra.mxu0 0.0
  %1931 = vmatprep.subr.mxu0 0.0
  %v1932 = vand.u32 %v1505, 4294901760
  %1933 = vmatpush1.msra.mxu0 %v1932
  %1934 = vmatprep.subr.mxu0 0.0
  %v1935 = vand.u32 %v1503, 4294901760
  %1936 = vmatpush1.msra.mxu0 %v1935
  %1937 = vmatprep.subr.mxu0 0.0
  %1938 = vmatpush2.msra.mxu0 0.0
  %1939 = vmatprep.subr.mxu0 0.0
  %1940 = vmatpush2.msra.mxu0 0.0
  %1941 = vmatprep.subr.mxu0 0.0
  %1942 = vmatpush2.msra.mxu0 0.0
  %1943 = vmatprep.subr.mxu0 0.0
  %1944 = vmatpush2.msra.mxu0 0.0
  %1945 = vmatprep.subr.mxu0 0.0
  %1946 = vmatpush2.msra.mxu0 0.0
  %1947 = vmatprep.subr.mxu0 0.0
  %1948 = vmatpush2.msra.mxu0 0.0
  %1949 = vmatprep.subr.mxu0 0.0
  %1950 = vmatpush2.msra.mxu0 0.0
  %1951 = vmatprep.subr.mxu0 0.0
  %1952 = vmatpush2.msra.mxu0 0.0
  %1953 = vmatprep.subr.mxu0 0.0
  %1954 = vmatpush2.msra.mxu0 0.0
  %1955 = vmatprep.subr.mxu0 0.0
  %1956 = vmatpush2.msra.mxu0 0.0
  %1957 = vmatprep.subr.mxu0 0.0
  %1958 = vmatpush2.msra.mxu0 0.0
  %1959 = vmatprep.subr.mxu0 0.0
  %1960 = vmatpush2.msra.mxu0 0.0
  %1961 = vmatprep.subr.mxu0 0.0
  %1962 = vmatpush2.msra.mxu0 0.0
  %1963 = vmatprep.subr.mxu0 0.0
  %1964 = vmatpush2.msra.mxu0 0.0
  %1965 = vmatprep.subr.mxu0 0.0
  %1966 = vmatpush2.msra.mxu0 0.0
  %1967 = vmatprep.subr.mxu0 0.0
  %1968 = vmatpush2.msra.mxu0 0.0
  %1969 = vmatprep.mubr.f32.mxu0 0.0
  %v1970 = vand.u32 %v1515, 4294901760
  %1971 = vmatmul.mubr.f32.gmra.mxu0 %v1970
  %v1972 = vpop.f32.mrf.mxu0
  %v1973 = vadd.f32 %v1900, %v1972
  %v1974 = vpop.f32.mrf.mxu0
  %1975 = vdwg.mxu0
  %v1976 = vxor.u32 %v1973, 2147483648
  %v1977 = vmul.f32 %v1976, 1.442695
  %v1978 = vpow.pop %v1977
  %v1979 = vadd.f32 %v1978, 1.0
  %v1980 = vrcp.pop %v1979
  %v1981 = vmul.f32 1.0, %v1980
  %1982 = vst [vmem:[%s14] sm:$0xff] %v1981
  %v1983 = vld [vmem:[%s4] sm:$0xff]
  %v1984 = vld [vmem:[%s4 + $0x8] sm:$0xff]
  %v1985 = vld [vmem:[%s10] sm:$0xff]
  %v1986 = vld [vmem:[%s10 + $0x8] sm:$0xff]
  %1988 = vset.pattern.permute.xlu0 0
  %1989 = vperm.xlu0 %1988, %v1985
  %v1990 = vpop.permute.xlu0 %1989
  %1993 = vset.pattern.permute.xlu0 0
  %1994 = vperm.xlu0 %1993, %v1986
  %v1995 = vpop.permute.xlu0 %1994
  %vm1997 = vcmask 64512
  %v1999 = vsel %vm1997, %v1983, 0
  %v2002 = vsel %vm1997, %v1984, 0
  %2004 = vmatprep.subr.mxu0 0.0
  %2005 = vmatpush1.msra.mxu0 0.0
  %2006 = vmatprep.subr.mxu0 0.0
  %2007 = vmatpush1.msra.mxu0 0.0
  %2008 = vmatprep.subr.mxu0 0.0
  %2009 = vmatpush1.msra.mxu0 0.0
  %2010 = vmatprep.subr.mxu0 0.0
  %2011 = vmatpush1.msra.mxu0 0.0
  %2012 = vmatprep.subr.mxu0 0.0
  %2013 = vmatpush1.msra.mxu0 0.0
  %2014 = vmatprep.subr.mxu0 0.0
  %2015 = vmatpush1.msra.mxu0 0.0
  %2016 = vmatprep.subr.mxu0 0.0
  %2017 = vmatpush1.msra.mxu0 0.0
  %2018 = vmatprep.subr.mxu0 0.0
  %2019 = vmatpush1.msra.mxu0 0.0
  %2020 = vmatprep.subr.mxu0 0.0
  %2021 = vmatpush1.msra.mxu0 0.0
  %2022 = vmatprep.subr.mxu0 0.0
  %2023 = vmatpush1.msra.mxu0 0.0
  %2024 = vmatprep.subr.mxu0 0.0
  %2025 = vmatpush1.msra.mxu0 0.0
  %2026 = vmatprep.subr.mxu0 0.0
  %2027 = vmatpush1.msra.mxu0 0.0
  %2028 = vmatprep.subr.mxu0 0.0
  %2029 = vmatpush1.msra.mxu0 0.0
  %2030 = vmatprep.subr.mxu0 0.0
  %2031 = vmatpush1.msra.mxu0 0.0
  %2032 = vmatprep.subr.mxu0 0.0
  %2033 = vmatpush1.msra.mxu0 0.0
  %2034 = vmatprep.subr.mxu0 0.0
  %v2035 = vand.u32 %v1981, 4294901760
  %2036 = vmatpush1.msra.mxu0 %v2035
  %2037 = vmatprep.subr.mxu0 0.0
  %2038 = vmatpush2.msra.mxu0 0.0
  %2039 = vmatprep.subr.mxu0 0.0
  %2040 = vmatpush2.msra.mxu0 0.0
  %2041 = vmatprep.subr.mxu0 0.0
  %2042 = vmatpush2.msra.mxu0 0.0
  %2043 = vmatprep.subr.mxu0 0.0
  %2044 = vmatpush2.msra.mxu0 0.0
  %2045 = vmatprep.subr.mxu0 0.0
  %2046 = vmatpush2.msra.mxu0 0.0
  %2047 = vmatprep.subr.mxu0 0.0
  %2048 = vmatpush2.msra.mxu0 0.0
  %2049 = vmatprep.subr.mxu0 0.0
  %2050 = vmatpush2.msra.mxu0 0.0
  %2051 = vmatprep.subr.mxu0 0.0
  %2052 = vmatpush2.msra.mxu0 0.0
  %2053 = vmatprep.subr.mxu0 0.0
  %2054 = vmatpush2.msra.mxu0 0.0
  %2055 = vmatprep.subr.mxu0 0.0
  %2056 = vmatpush2.msra.mxu0 0.0
  %2057 = vmatprep.subr.mxu0 0.0
  %2058 = vmatpush2.msra.mxu0 0.0
  %2059 = vmatprep.subr.mxu0 0.0
  %2060 = vmatpush2.msra.mxu0 0.0
  %2061 = vmatprep.subr.mxu0 0.0
  %2062 = vmatpush2.msra.mxu0 0.0
  %2063 = vmatprep.subr.mxu0 0.0
  %2064 = vmatpush2.msra.mxu0 0.0
  %2065 = vmatprep.subr.mxu0 0.0
  %2066 = vmatpush2.msra.mxu0 0.0
  %2067 = vmatprep.subr.mxu0 0.0
  %2068 = vmatpush2.msra.mxu0 0.0
  %2069 = vmatprep.mubr.f32.mxu0 0.0
  %v2070 = vand.u32 %v1999, 4294901760
  %v2071 = vsub.f32 %v1999, %v2070
  %v2072 = vand.u32 %v2071, 4294901760
  %v2073 = vsub.f32 %v2071, %v2072
  %v2074 = vand.u32 %v2073, 4294901760
  %2075 = vmatmul.mubr.f32.gmra.mxu0 %v2074
  %v2076 = vpop.f32.mrf.mxu0
  %v2077 = vadd.f32 %v1990, %v2076
  %v2078 = vpop.f32.mrf.mxu0
  %2079 = vmatprep.mubr.f32.mxu0 0.0
  %v2080 = vand.u32 %v2002, 4294901760
  %v2081 = vsub.f32 %v2002, %v2080
  %v2082 = vand.u32 %v2081, 4294901760
  %v2083 = vsub.f32 %v2081, %v2082
  %v2084 = vand.u32 %v2083, 4294901760
  %2085 = vmatmul.mubr.f32.gmra.mxu0 %v2084
  %v2086 = vpop.f32.mrf.mxu0
  %v2087 = vadd.f32 %v1995, %v2086
  %v2088 = vpop.f32.mrf.mxu0
  %2089 = vdwg.mxu0
  %2090 = vmatprep.subr.mxu0 0.0
  %2091 = vmatpush1.msra.mxu0 0.0
  %2092 = vmatprep.subr.mxu0 0.0
  %2093 = vmatpush1.msra.mxu0 0.0
  %2094 = vmatprep.subr.mxu0 0.0
  %2095 = vmatpush1.msra.mxu0 0.0
  %2096 = vmatprep.subr.mxu0 0.0
  %2097 = vmatpush1.msra.mxu0 0.0
  %2098 = vmatprep.subr.mxu0 0.0
  %2099 = vmatpush1.msra.mxu0 0.0
  %2100 = vmatprep.subr.mxu0 0.0
  %2101 = vmatpush1.msra.mxu0 0.0
  %2102 = vmatprep.subr.mxu0 0.0
  %2103 = vmatpush1.msra.mxu0 0.0
  %2104 = vmatprep.subr.mxu0 0.0
  %2105 = vmatpush1.msra.mxu0 0.0
  %2106 = vmatprep.subr.mxu0 0.0
  %2107 = vmatpush1.msra.mxu0 0.0
  %2108 = vmatprep.subr.mxu0 0.0
  %2109 = vmatpush1.msra.mxu0 0.0
  %2110 = vmatprep.subr.mxu0 0.0
  %2111 = vmatpush1.msra.mxu0 0.0
  %2112 = vmatprep.subr.mxu0 0.0
  %2113 = vmatpush1.msra.mxu0 0.0
  %2114 = vmatprep.subr.mxu0 0.0
  %2115 = vmatpush1.msra.mxu0 0.0
  %2116 = vmatprep.subr.mxu0 0.0
  %2117 = vmatpush1.msra.mxu0 0.0
  %2118 = vmatprep.subr.mxu0 0.0
  %2119 = vmatpush1.msra.mxu0 0.0
  %2120 = vmatprep.subr.mxu0 0.0
  %v2121 = vand.u32 %v1981, 4294901760
  %v2122 = vsub.f32 %v1981, %v2121
  %v2123 = vand.u32 %v2122, 4294901760
  %v2124 = vsub.f32 %v2122, %v2123
  %v2125 = vand.u32 %v2124, 4294901760
  %2126 = vmatpush1.msra.mxu0 %v2125
  %2127 = vmatprep.subr.mxu0 0.0
  %2128 = vmatpush2.msra.mxu0 0.0
  %2129 = vmatprep.subr.mxu0 0.0
  %2130 = vmatpush2.msra.mxu0 0.0
  %2131 = vmatprep.subr.mxu0 0.0
  %2132 = vmatpush2.msra.mxu0 0.0
  %2133 = vmatprep.subr.mxu0 0.0
  %2134 = vmatpush2.msra.mxu0 0.0
  %2135 = vmatprep.subr.mxu0 0.0
  %2136 = vmatpush2.msra.mxu0 0.0
  %2137 = vmatprep.subr.mxu0 0.0
  %2138 = vmatpush2.msra.mxu0 0.0
  %2139 = vmatprep.subr.mxu0 0.0
  %2140 = vmatpush2.msra.mxu0 0.0
  %2141 = vmatprep.subr.mxu0 0.0
  %2142 = vmatpush2.msra.mxu0 0.0
  %2143 = vmatprep.subr.mxu0 0.0
  %2144 = vmatpush2.msra.mxu0 0.0
  %2145 = vmatprep.subr.mxu0 0.0
  %2146 = vmatpush2.msra.mxu0 0.0
  %2147 = vmatprep.subr.mxu0 0.0
  %2148 = vmatpush2.msra.mxu0 0.0
  %2149 = vmatprep.subr.mxu0 0.0
  %2150 = vmatpush2.msra.mxu0 0.0
  %2151 = vmatprep.subr.mxu0 0.0
  %2152 = vmatpush2.msra.mxu0 0.0
  %2153 = vmatprep.subr.mxu0 0.0
  %2154 = vmatpush2.msra.mxu0 0.0
  %2155 = vmatprep.subr.mxu0 0.0
  %2156 = vmatpush2.msra.mxu0 0.0
  %2157 = vmatprep.subr.mxu0 0.0
  %2158 = vmatpush2.msra.mxu0 0.0
  %2159 = vmatprep.mubr.f32.mxu0 0.0
  %v2160 = vand.u32 %v1999, 4294901760
  %2161 = vmatmul.mubr.f32.gmra.mxu0 %v2160
  %v2162 = vpop.f32.mrf.mxu0
  %v2163 = vadd.f32 %v2077, %v2162
  %v2164 = vpop.f32.mrf.mxu0
  %2165 = vmatprep.mubr.f32.mxu0 0.0
  %v2166 = vand.u32 %v2002, 4294901760
  %2167 = vmatmul.mubr.f32.gmra.mxu0 %v2166
  %v2168 = vpop.f32.mrf.mxu0
  %v2169 = vadd.f32 %v2087, %v2168
  %v2170 = vpop.f32.mrf.mxu0
  %2171 = vdwg.mxu0
  %2172 = vmatprep.subr.mxu0 0.0
  %2173 = vmatpush1.msra.mxu0 0.0
  %2174 = vmatprep.subr.mxu0 0.0
  %2175 = vmatpush1.msra.mxu0 0.0
  %2176 = vmatprep.subr.mxu0 0.0
  %2177 = vmatpush1.msra.mxu0 0.0
  %2178 = vmatprep.subr.mxu0 0.0
  %2179 = vmatpush1.msra.mxu0 0.0
  %2180 = vmatprep.subr.mxu0 0.0
  %2181 = vmatpush1.msra.mxu0 0.0
  %2182 = vmatprep.subr.mxu0 0.0
  %2183 = vmatpush1.msra.mxu0 0.0
  %2184 = vmatprep.subr.mxu0 0.0
  %2185 = vmatpush1.msra.mxu0 0.0
  %2186 = vmatprep.subr.mxu0 0.0
  %2187 = vmatpush1.msra.mxu0 0.0
  %2188 = vmatprep.subr.mxu0 0.0
  %2189 = vmatpush1.msra.mxu0 0.0
  %2190 = vmatprep.subr.mxu0 0.0
  %2191 = vmatpush1.msra.mxu0 0.0
  %2192 = vmatprep.subr.mxu0 0.0
  %2193 = vmatpush1.msra.mxu0 0.0
  %2194 = vmatprep.subr.mxu0 0.0
  %2195 = vmatpush1.msra.mxu0 0.0
  %2196 = vmatprep.subr.mxu0 0.0
  %2197 = vmatpush1.msra.mxu0 0.0
  %2198 = vmatprep.subr.mxu0 0.0
  %2199 = vmatpush1.msra.mxu0 0.0
  %2200 = vmatprep.subr.mxu0 0.0
  %2201 = vmatpush1.msra.mxu0 0.0
  %2202 = vmatprep.subr.mxu0 0.0
  %v2203 = vand.u32 %v1981, 4294901760
  %v2204 = vsub.f32 %v1981, %v2203
  %2205 = vmatpush1.msra.mxu0 %v2204
  %2206 = vmatprep.subr.mxu0 0.0
  %2207 = vmatpush2.msra.mxu0 0.0
  %2208 = vmatprep.subr.mxu0 0.0
  %2209 = vmatpush2.msra.mxu0 0.0
  %2210 = vmatprep.subr.mxu0 0.0
  %2211 = vmatpush2.msra.mxu0 0.0
  %2212 = vmatprep.subr.mxu0 0.0
  %2213 = vmatpush2.msra.mxu0 0.0
  %2214 = vmatprep.subr.mxu0 0.0
  %2215 = vmatpush2.msra.mxu0 0.0
  %2216 = vmatprep.subr.mxu0 0.0
  %2217 = vmatpush2.msra.mxu0 0.0
  %2218 = vmatprep.subr.mxu0 0.0
  %2219 = vmatpush2.msra.mxu0 0.0
  %2220 = vmatprep.subr.mxu0 0.0
  %2221 = vmatpush2.msra.mxu0 0.0
  %2222 = vmatprep.subr.mxu0 0.0
  %2223 = vmatpush2.msra.mxu0 0.0
  %2224 = vmatprep.subr.mxu0 0.0
  %2225 = vmatpush2.msra.mxu0 0.0
  %2226 = vmatprep.subr.mxu0 0.0
  %2227 = vmatpush2.msra.mxu0 0.0
  %2228 = vmatprep.subr.mxu0 0.0
  %2229 = vmatpush2.msra.mxu0 0.0
  %2230 = vmatprep.subr.mxu0 0.0
  %2231 = vmatpush2.msra.mxu0 0.0
  %2232 = vmatprep.subr.mxu0 0.0
  %2233 = vmatpush2.msra.mxu0 0.0
  %2234 = vmatprep.subr.mxu0 0.0
  %2235 = vmatpush2.msra.mxu0 0.0
  %2236 = vmatprep.subr.mxu0 0.0
  %2237 = vmatpush2.msra.mxu0 0.0
  %2238 = vmatprep.mubr.f32.mxu0 0.0
  %v2239 = vand.u32 %v1999, 4294901760
  %v2240 = vsub.f32 %v1999, %v2239
  %2241 = vmatmul.mubr.f32.gmra.mxu0 %v2240
  %v2242 = vpop.f32.mrf.mxu0
  %v2243 = vadd.f32 %v2163, %v2242
  %v2244 = vpop.f32.mrf.mxu0
  %2245 = vmatprep.mubr.f32.mxu0 0.0
  %v2246 = vand.u32 %v2002, 4294901760
  %v2247 = vsub.f32 %v2002, %v2246
  %2248 = vmatmul.mubr.f32.gmra.mxu0 %v2247
  %v2249 = vpop.f32.mrf.mxu0
  %v2250 = vadd.f32 %v2169, %v2249
  %v2251 = vpop.f32.mrf.mxu0
  %2252 = vdwg.mxu0
  %2253 = vmatprep.subr.mxu0 0.0
  %2254 = vmatpush1.msra.mxu0 0.0
  %2255 = vmatprep.subr.mxu0 0.0
  %2256 = vmatpush1.msra.mxu0 0.0
  %2257 = vmatprep.subr.mxu0 0.0
  %2258 = vmatpush1.msra.mxu0 0.0
  %2259 = vmatprep.subr.mxu0 0.0
  %2260 = vmatpush1.msra.mxu0 0.0
  %2261 = vmatprep.subr.mxu0 0.0
  %2262 = vmatpush1.msra.mxu0 0.0
  %2263 = vmatprep.subr.mxu0 0.0
  %2264 = vmatpush1.msra.mxu0 0.0
  %2265 = vmatprep.subr.mxu0 0.0
  %2266 = vmatpush1.msra.mxu0 0.0
  %2267 = vmatprep.subr.mxu0 0.0
  %2268 = vmatpush1.msra.mxu0 0.0
  %2269 = vmatprep.subr.mxu0 0.0
  %2270 = vmatpush1.msra.mxu0 0.0
  %2271 = vmatprep.subr.mxu0 0.0
  %2272 = vmatpush1.msra.mxu0 0.0
  %2273 = vmatprep.subr.mxu0 0.0
  %2274 = vmatpush1.msra.mxu0 0.0
  %2275 = vmatprep.subr.mxu0 0.0
  %2276 = vmatpush1.msra.mxu0 0.0
  %2277 = vmatprep.subr.mxu0 0.0
  %2278 = vmatpush1.msra.mxu0 0.0
  %2279 = vmatprep.subr.mxu0 0.0
  %2280 = vmatpush1.msra.mxu0 0.0
  %2281 = vmatprep.subr.mxu0 0.0
  %2282 = vmatpush1.msra.mxu0 0.0
  %2283 = vmatprep.subr.mxu0 0.0
  %v2284 = vand.u32 %v1981, 4294901760
  %2285 = vmatpush1.msra.mxu0 %v2284
  %2286 = vmatprep.subr.mxu0 0.0
  %2287 = vmatpush2.msra.mxu0 0.0
  %2288 = vmatprep.subr.mxu0 0.0
  %2289 = vmatpush2.msra.mxu0 0.0
  %2290 = vmatprep.subr.mxu0 0.0
  %2291 = vmatpush2.msra.mxu0 0.0
  %2292 = vmatprep.subr.mxu0 0.0
  %2293 = vmatpush2.msra.mxu0 0.0
  %2294 = vmatprep.subr.mxu0 0.0
  %2295 = vmatpush2.msra.mxu0 0.0
  %2296 = vmatprep.subr.mxu0 0.0
  %2297 = vmatpush2.msra.mxu0 0.0
  %2298 = vmatprep.subr.mxu0 0.0
  %2299 = vmatpush2.msra.mxu0 0.0
  %2300 = vmatprep.subr.mxu0 0.0
  %2301 = vmatpush2.msra.mxu0 0.0
  %2302 = vmatprep.subr.mxu0 0.0
  %2303 = vmatpush2.msra.mxu0 0.0
  %2304 = vmatprep.subr.mxu0 0.0
  %2305 = vmatpush2.msra.mxu0 0.0
  %2306 = vmatprep.subr.mxu0 0.0
  %2307 = vmatpush2.msra.mxu0 0.0
  %2308 = vmatprep.subr.mxu0 0.0
  %2309 = vmatpush2.msra.mxu0 0.0
  %2310 = vmatprep.subr.mxu0 0.0
  %2311 = vmatpush2.msra.mxu0 0.0
  %2312 = vmatprep.subr.mxu0 0.0
  %2313 = vmatpush2.msra.mxu0 0.0
  %2314 = vmatprep.subr.mxu0 0.0
  %2315 = vmatpush2.msra.mxu0 0.0
  %2316 = vmatprep.subr.mxu0 0.0
  %2317 = vmatpush2.msra.mxu0 0.0
  %2318 = vmatprep.mubr.f32.mxu0 0.0
  %v2319 = vand.u32 %v1999, 4294901760
  %v2320 = vsub.f32 %v1999, %v2319
  %v2321 = vand.u32 %v2320, 4294901760
  %2322 = vmatmul.mubr.f32.gmra.mxu0 %v2321
  %v2323 = vpop.f32.mrf.mxu0
  %v2324 = vadd.f32 %v2243, %v2323
  %v2325 = vpop.f32.mrf.mxu0
  %2326 = vmatprep.mubr.f32.mxu0 0.0
  %v2327 = vand.u32 %v2002, 4294901760
  %v2328 = vsub.f32 %v2002, %v2327
  %v2329 = vand.u32 %v2328, 4294901760
  %2330 = vmatmul.mubr.f32.gmra.mxu0 %v2329
  %v2331 = vpop.f32.mrf.mxu0
  %v2332 = vadd.f32 %v2250, %v2331
  %v2333 = vpop.f32.mrf.mxu0
  %2334 = vdwg.mxu0
  %2335 = vmatprep.subr.mxu0 0.0
  %2336 = vmatpush1.msra.mxu0 0.0
  %2337 = vmatprep.subr.mxu0 0.0
  %2338 = vmatpush1.msra.mxu0 0.0
  %2339 = vmatprep.subr.mxu0 0.0
  %2340 = vmatpush1.msra.mxu0 0.0
  %2341 = vmatprep.subr.mxu0 0.0
  %2342 = vmatpush1.msra.mxu0 0.0
  %2343 = vmatprep.subr.mxu0 0.0
  %2344 = vmatpush1.msra.mxu0 0.0
  %2345 = vmatprep.subr.mxu0 0.0
  %2346 = vmatpush1.msra.mxu0 0.0
  %2347 = vmatprep.subr.mxu0 0.0
  %2348 = vmatpush1.msra.mxu0 0.0
  %2349 = vmatprep.subr.mxu0 0.0
  %2350 = vmatpush1.msra.mxu0 0.0
  %2351 = vmatprep.subr.mxu0 0.0
  %2352 = vmatpush1.msra.mxu0 0.0
  %2353 = vmatprep.subr.mxu0 0.0
  %2354 = vmatpush1.msra.mxu0 0.0
  %2355 = vmatprep.subr.mxu0 0.0
  %2356 = vmatpush1.msra.mxu0 0.0
  %2357 = vmatprep.subr.mxu0 0.0
  %2358 = vmatpush1.msra.mxu0 0.0
  %2359 = vmatprep.subr.mxu0 0.0
  %2360 = vmatpush1.msra.mxu0 0.0
  %2361 = vmatprep.subr.mxu0 0.0
  %2362 = vmatpush1.msra.mxu0 0.0
  %2363 = vmatprep.subr.mxu0 0.0
  %2364 = vmatpush1.msra.mxu0 0.0
  %2365 = vmatprep.subr.mxu0 0.0
  %v2366 = vand.u32 %v1981, 4294901760
  %v2367 = vsub.f32 %v1981, %v2366
  %v2368 = vand.u32 %v2367, 4294901760
  %2369 = vmatpush1.msra.mxu0 %v2368
  %2370 = vmatprep.subr.mxu0 0.0
  %2371 = vmatpush2.msra.mxu0 0.0
  %2372 = vmatprep.subr.mxu0 0.0
  %2373 = vmatpush2.msra.mxu0 0.0
  %2374 = vmatprep.subr.mxu0 0.0
  %2375 = vmatpush2.msra.mxu0 0.0
  %2376 = vmatprep.subr.mxu0 0.0
  %2377 = vmatpush2.msra.mxu0 0.0
  %2378 = vmatprep.subr.mxu0 0.0
  %2379 = vmatpush2.msra.mxu0 0.0
  %2380 = vmatprep.subr.mxu0 0.0
  %2381 = vmatpush2.msra.mxu0 0.0
  %2382 = vmatprep.subr.mxu0 0.0
  %2383 = vmatpush2.msra.mxu0 0.0
  %2384 = vmatprep.subr.mxu0 0.0
  %2385 = vmatpush2.msra.mxu0 0.0
  %2386 = vmatprep.subr.mxu0 0.0
  %2387 = vmatpush2.msra.mxu0 0.0
  %2388 = vmatprep.subr.mxu0 0.0
  %2389 = vmatpush2.msra.mxu0 0.0
  %2390 = vmatprep.subr.mxu0 0.0
  %2391 = vmatpush2.msra.mxu0 0.0
  %2392 = vmatprep.subr.mxu0 0.0
  %2393 = vmatpush2.msra.mxu0 0.0
  %2394 = vmatprep.subr.mxu0 0.0
  %2395 = vmatpush2.msra.mxu0 0.0
  %2396 = vmatprep.subr.mxu0 0.0
  %2397 = vmatpush2.msra.mxu0 0.0
  %2398 = vmatprep.subr.mxu0 0.0
  %2399 = vmatpush2.msra.mxu0 0.0
  %2400 = vmatprep.subr.mxu0 0.0
  %2401 = vmatpush2.msra.mxu0 0.0
  %2402 = vmatprep.mubr.f32.mxu0 0.0
  %v2403 = vand.u32 %v1999, 4294901760
  %2404 = vmatmul.mubr.f32.gmra.mxu0 %v2403
  %v2405 = vpop.f32.mrf.mxu0
  %v2406 = vadd.f32 %v2324, %v2405
  %v2407 = vpop.f32.mrf.mxu0
  %2408 = vmatprep.mubr.f32.mxu0 0.0
  %v2409 = vand.u32 %v2002, 4294901760
  %2410 = vmatmul.mubr.f32.gmra.mxu0 %v2409
  %v2411 = vpop.f32.mrf.mxu0
  %v2412 = vadd.f32 %v2332, %v2411
  %v2413 = vpop.f32.mrf.mxu0
  %2414 = vdwg.mxu0
  %2415 = vmatprep.subr.mxu0 0.0
  %2416 = vmatpush1.msra.mxu0 0.0
  %2417 = vmatprep.subr.mxu0 0.0
  %2418 = vmatpush1.msra.mxu0 0.0
  %2419 = vmatprep.subr.mxu0 0.0
  %2420 = vmatpush1.msra.mxu0 0.0
  %2421 = vmatprep.subr.mxu0 0.0
  %2422 = vmatpush1.msra.mxu0 0.0
  %2423 = vmatprep.subr.mxu0 0.0
  %2424 = vmatpush1.msra.mxu0 0.0
  %2425 = vmatprep.subr.mxu0 0.0
  %2426 = vmatpush1.msra.mxu0 0.0
  %2427 = vmatprep.subr.mxu0 0.0
  %2428 = vmatpush1.msra.mxu0 0.0
  %2429 = vmatprep.subr.mxu0 0.0
  %2430 = vmatpush1.msra.mxu0 0.0
  %2431 = vmatprep.subr.mxu0 0.0
  %2432 = vmatpush1.msra.mxu0 0.0
  %2433 = vmatprep.subr.mxu0 0.0
  %2434 = vmatpush1.msra.mxu0 0.0
  %2435 = vmatprep.subr.mxu0 0.0
  %2436 = vmatpush1.msra.mxu0 0.0
  %2437 = vmatprep.subr.mxu0 0.0
  %2438 = vmatpush1.msra.mxu0 0.0
  %2439 = vmatprep.subr.mxu0 0.0
  %2440 = vmatpush1.msra.mxu0 0.0
  %2441 = vmatprep.subr.mxu0 0.0
  %2442 = vmatpush1.msra.mxu0 0.0
  %2443 = vmatprep.subr.mxu0 0.0
  %2444 = vmatpush1.msra.mxu0 0.0
  %2445 = vmatprep.subr.mxu0 0.0
  %v2446 = vand.u32 %v1981, 4294901760
  %2447 = vmatpush1.msra.mxu0 %v2446
  %2448 = vmatprep.subr.mxu0 0.0
  %2449 = vmatpush2.msra.mxu0 0.0
  %2450 = vmatprep.subr.mxu0 0.0
  %2451 = vmatpush2.msra.mxu0 0.0
  %2452 = vmatprep.subr.mxu0 0.0
  %2453 = vmatpush2.msra.mxu0 0.0
  %2454 = vmatprep.subr.mxu0 0.0
  %2455 = vmatpush2.msra.mxu0 0.0
  %2456 = vmatprep.subr.mxu0 0.0
  %2457 = vmatpush2.msra.mxu0 0.0
  %2458 = vmatprep.subr.mxu0 0.0
  %2459 = vmatpush2.msra.mxu0 0.0
  %2460 = vmatprep.subr.mxu0 0.0
  %2461 = vmatpush2.msra.mxu0 0.0
  %2462 = vmatprep.subr.mxu0 0.0
  %2463 = vmatpush2.msra.mxu0 0.0
  %2464 = vmatprep.subr.mxu0 0.0
  %2465 = vmatpush2.msra.mxu0 0.0
  %2466 = vmatprep.subr.mxu0 0.0
  %2467 = vmatpush2.msra.mxu0 0.0
  %2468 = vmatprep.subr.mxu0 0.0
  %2469 = vmatpush2.msra.mxu0 0.0
  %2470 = vmatprep.subr.mxu0 0.0
  %2471 = vmatpush2.msra.mxu0 0.0
  %2472 = vmatprep.subr.mxu0 0.0
  %2473 = vmatpush2.msra.mxu0 0.0
  %2474 = vmatprep.subr.mxu0 0.0
  %2475 = vmatpush2.msra.mxu0 0.0
  %2476 = vmatprep.subr.mxu0 0.0
  %2477 = vmatpush2.msra.mxu0 0.0
  %2478 = vmatprep.subr.mxu0 0.0
  %2479 = vmatpush2.msra.mxu0 0.0
  %2480 = vmatprep.mubr.f32.mxu0 0.0
  %v2481 = vand.u32 %v1999, 4294901760
  %2482 = vmatmul.mubr.f32.gmra.mxu0 %v2481
  %v2483 = vpop.f32.mrf.mxu0
  %v2484 = vadd.f32 %v2406, %v2483
  %v2485 = vpop.f32.mrf.mxu0
  %2486 = vmatprep.mubr.f32.mxu0 0.0
  %v2487 = vand.u32 %v2002, 4294901760
  %2488 = vmatmul.mubr.f32.gmra.mxu0 %v2487
  %v2489 = vpop.f32.mrf.mxu0
  %v2490 = vadd.f32 %v2412, %v2489
  %v2491 = vpop.f32.mrf.mxu0
  %2492 = vdwg.mxu0
  %v2493 = vxor.u32 %v2484, 2147483648
  %v2494 = vxor.u32 %v2490, 2147483648
  %v2495 = vmul.f32 %v2493, 1.442695
  %v2496 = vpow.pop %v2495
  %v2497 = vmul.f32 %v2494, 1.442695
  %v2498 = vpow.pop %v2497
  %v2499 = vadd.f32 %v2496, 1.0
  %v2500 = vadd.f32 %v2498, 1.0
  %v2501 = vrcp.pop %v2499
  %v2502 = vmul.f32 1.0, %v2501
  %v2503 = vrcp.pop %v2500
  %v2504 = vmul.f32 1.0, %v2503
  %v2505 = vld [vmem:[%s5] sm:$0xff]
  %v2506 = vld [vmem:[%s5 + $0x8] sm:$0xff]
  %v2507 = vld [vmem:[%s5 + $0x10] sm:$0xff]
  %v2508 = vld [vmem:[%s5 + $0x18] sm:$0xff]
  %v2509 = vld [vmem:[%s11] sm:$0xff]
  %v2510 = vld [vmem:[%s11 + $0x8] sm:$0xff]
  %v2511 = vld [vmem:[%s11 + $0x10] sm:$0xff]
  %v2512 = vld [vmem:[%s11 + $0x18] sm:$0xff]
  %2514 = vset.pattern.permute.xlu0 0
  %2515 = vperm.xlu0 %2514, %v2509
  %v2516 = vpop.permute.xlu0 %2515
  %2519 = vset.pattern.permute.xlu0 0
  %2520 = vperm.xlu0 %2519, %v2510
  %v2521 = vpop.permute.xlu0 %2520
  %2524 = vset.pattern.permute.xlu0 0
  %2525 = vperm.xlu0 %2524, %v2511
  %v2526 = vpop.permute.xlu0 %2525
  %2529 = vset.pattern.permute.xlu0 0
  %2530 = vperm.xlu0 %2529, %v2512
  %v2531 = vpop.permute.xlu0 %2530
  %v2534 = vsel %vm1513, %v2505, 0
  %v2537 = vsel %vm1513, %v2506, 0
  %v2540 = vsel %vm1513, %v2507, 0
  %v2543 = vsel %vm1513, %v2508, 0
  %2545 = vmatprep.subr.mxu0 0.0
  %2546 = vmatpush1.msra.mxu0 0.0
  %2547 = vmatprep.subr.mxu0 0.0
  %2548 = vmatpush1.msra.mxu0 0.0
  %2549 = vmatprep.subr.mxu0 0.0
  %2550 = vmatpush1.msra.mxu0 0.0
  %2551 = vmatprep.subr.mxu0 0.0
  %2552 = vmatpush1.msra.mxu0 0.0
  %2553 = vmatprep.subr.mxu0 0.0
  %2554 = vmatpush1.msra.mxu0 0.0
  %2555 = vmatprep.subr.mxu0 0.0
  %2556 = vmatpush1.msra.mxu0 0.0
  %2557 = vmatprep.subr.mxu0 0.0
  %2558 = vmatpush1.msra.mxu0 0.0
  %2559 = vmatprep.subr.mxu0 0.0
  %2560 = vmatpush1.msra.mxu0 0.0
  %2561 = vmatprep.subr.mxu0 0.0
  %2562 = vmatpush1.msra.mxu0 0.0
  %2563 = vmatprep.subr.mxu0 0.0
  %2564 = vmatpush1.msra.mxu0 0.0
  %2565 = vmatprep.subr.mxu0 0.0
  %2566 = vmatpush1.msra.mxu0 0.0
  %2567 = vmatprep.subr.mxu0 0.0
  %2568 = vmatpush1.msra.mxu0 0.0
  %2569 = vmatprep.subr.mxu0 0.0
  %2570 = vmatpush1.msra.mxu0 0.0
  %2571 = vmatprep.subr.mxu0 0.0
  %2572 = vmatpush1.msra.mxu0 0.0
  %2573 = vmatprep.subr.mxu0 0.0
  %v2574 = vand.u32 %v2504, 4294901760
  %2575 = vmatpush1.msra.mxu0 %v2574
  %2576 = vmatprep.subr.mxu0 0.0
  %v2577 = vand.u32 %v2502, 4294901760
  %2578 = vmatpush1.msra.mxu0 %v2577
  %2579 = vmatprep.subr.mxu0 0.0
  %2580 = vmatpush2.msra.mxu0 0.0
  %2581 = vmatprep.subr.mxu0 0.0
  %2582 = vmatpush2.msra.mxu0 0.0
  %2583 = vmatprep.subr.mxu0 0.0
  %2584 = vmatpush2.msra.mxu0 0.0
  %2585 = vmatprep.subr.mxu0 0.0
  %2586 = vmatpush2.msra.mxu0 0.0
  %2587 = vmatprep.subr.mxu0 0.0
  %2588 = vmatpush2.msra.mxu0 0.0
  %2589 = vmatprep.subr.mxu0 0.0
  %2590 = vmatpush2.msra.mxu0 0.0
  %2591 = vmatprep.subr.mxu0 0.0
  %2592 = vmatpush2.msra.mxu0 0.0
  %2593 = vmatprep.subr.mxu0 0.0
  %2594 = vmatpush2.msra.mxu0 0.0
  %2595 = vmatprep.subr.mxu0 0.0
  %2596 = vmatpush2.msra.mxu0 0.0
  %2597 = vmatprep.subr.mxu0 0.0
  %2598 = vmatpush2.msra.mxu0 0.0
  %2599 = vmatprep.subr.mxu0 0.0
  %2600 = vmatpush2.msra.mxu0 0.0
  %2601 = vmatprep.subr.mxu0 0.0
  %2602 = vmatpush2.msra.mxu0 0.0
  %2603 = vmatprep.subr.mxu0 0.0
  %2604 = vmatpush2.msra.mxu0 0.0
  %2605 = vmatprep.subr.mxu0 0.0
  %2606 = vmatpush2.msra.mxu0 0.0
  %2607 = vmatprep.subr.mxu0 0.0
  %2608 = vmatpush2.msra.mxu0 0.0
  %2609 = vmatprep.subr.mxu0 0.0
  %2610 = vmatpush2.msra.mxu0 0.0
  %2611 = vmatprep.mubr.f32.mxu0 0.0
  %v2612 = vand.u32 %v2534, 4294901760
  %v2613 = vsub.f32 %v2534, %v2612
  %v2614 = vand.u32 %v2613, 4294901760
  %v2615 = vsub.f32 %v2613, %v2614
  %v2616 = vand.u32 %v2615, 4294901760
  %2617 = vmatmul.mubr.f32.gmra.mxu0 %v2616
  %v2618 = vpop.f32.mrf.mxu0
  %v2619 = vadd.f32 %v2516, %v2618
  %v2620 = vpop.f32.mrf.mxu0
  %2621 = vmatprep.mubr.f32.mxu0 0.0
  %v2622 = vand.u32 %v2537, 4294901760
  %v2623 = vsub.f32 %v2537, %v2622
  %v2624 = vand.u32 %v2623, 4294901760
  %v2625 = vsub.f32 %v2623, %v2624
  %v2626 = vand.u32 %v2625, 4294901760
  %2627 = vmatmul.mubr.f32.gmra.mxu0 %v2626
  %v2628 = vpop.f32.mrf.mxu0
  %v2629 = vadd.f32 %v2521, %v2628
  %v2630 = vpop.f32.mrf.mxu0
  %2631 = vmatprep.mubr.f32.mxu0 0.0
  %v2632 = vand.u32 %v2540, 4294901760
  %v2633 = vsub.f32 %v2540, %v2632
  %v2634 = vand.u32 %v2633, 4294901760
  %v2635 = vsub.f32 %v2633, %v2634
  %v2636 = vand.u32 %v2635, 4294901760
  %2637 = vmatmul.mubr.f32.gmra.mxu0 %v2636
  %v2638 = vpop.f32.mrf.mxu0
  %v2639 = vadd.f32 %v2526, %v2638
  %v2640 = vpop.f32.mrf.mxu0
  %2641 = vmatprep.mubr.f32.mxu0 0.0
  %v2642 = vand.u32 %v2543, 4294901760
  %v2643 = vsub.f32 %v2543, %v2642
  %v2644 = vand.u32 %v2643, 4294901760
  %v2645 = vsub.f32 %v2643, %v2644
  %v2646 = vand.u32 %v2645, 4294901760
  %2647 = vmatmul.mubr.f32.gmra.mxu0 %v2646
  %v2648 = vpop.f32.mrf.mxu0
  %v2649 = vadd.f32 %v2531, %v2648
  %v2650 = vpop.f32.mrf.mxu0
  %2651 = vdwg.mxu0
  %2652 = vmatprep.subr.mxu0 0.0
  %2653 = vmatpush1.msra.mxu0 0.0
  %2654 = vmatprep.subr.mxu0 0.0
  %2655 = vmatpush1.msra.mxu0 0.0
  %2656 = vmatprep.subr.mxu0 0.0
  %2657 = vmatpush1.msra.mxu0 0.0
  %2658 = vmatprep.subr.mxu0 0.0
  %2659 = vmatpush1.msra.mxu0 0.0
  %2660 = vmatprep.subr.mxu0 0.0
  %2661 = vmatpush1.msra.mxu0 0.0
  %2662 = vmatprep.subr.mxu0 0.0
  %2663 = vmatpush1.msra.mxu0 0.0
  %2664 = vmatprep.subr.mxu0 0.0
  %2665 = vmatpush1.msra.mxu0 0.0
  %2666 = vmatprep.subr.mxu0 0.0
  %2667 = vmatpush1.msra.mxu0 0.0
  %2668 = vmatprep.subr.mxu0 0.0
  %2669 = vmatpush1.msra.mxu0 0.0
  %2670 = vmatprep.subr.mxu0 0.0
  %2671 = vmatpush1.msra.mxu0 0.0
  %2672 = vmatprep.subr.mxu0 0.0
  %2673 = vmatpush1.msra.mxu0 0.0
  %2674 = vmatprep.subr.mxu0 0.0
  %2675 = vmatpush1.msra.mxu0 0.0
  %2676 = vmatprep.subr.mxu0 0.0
  %2677 = vmatpush1.msra.mxu0 0.0
  %2678 = vmatprep.subr.mxu0 0.0
  %2679 = vmatpush1.msra.mxu0 0.0
  %2680 = vmatprep.subr.mxu0 0.0
  %v2681 = vand.u32 %v2504, 4294901760
  %v2682 = vsub.f32 %v2504, %v2681
  %v2683 = vand.u32 %v2682, 4294901760
  %v2684 = vsub.f32 %v2682, %v2683
  %v2685 = vand.u32 %v2684, 4294901760
  %2686 = vmatpush1.msra.mxu0 %v2685
  %2687 = vmatprep.subr.mxu0 0.0
  %v2688 = vand.u32 %v2502, 4294901760
  %v2689 = vsub.f32 %v2502, %v2688
  %v2690 = vand.u32 %v2689, 4294901760
  %v2691 = vsub.f32 %v2689, %v2690
  %v2692 = vand.u32 %v2691, 4294901760
  %2693 = vmatpush1.msra.mxu0 %v2692
  %2694 = vmatprep.subr.mxu0 0.0
  %2695 = vmatpush2.msra.mxu0 0.0
  %2696 = vmatprep.subr.mxu0 0.0
  %2697 = vmatpush2.msra.mxu0 0.0
  %2698 = vmatprep.subr.mxu0 0.0
  %2699 = vmatpush2.msra.mxu0 0.0
  %2700 = vmatprep.subr.mxu0 0.0
  %2701 = vmatpush2.msra.mxu0 0.0
  %2702 = vmatprep.subr.mxu0 0.0
  %2703 = vmatpush2.msra.mxu0 0.0
  %2704 = vmatprep.subr.mxu0 0.0
  %2705 = vmatpush2.msra.mxu0 0.0
  %2706 = vmatprep.subr.mxu0 0.0
  %2707 = vmatpush2.msra.mxu0 0.0
  %2708 = vmatprep.subr.mxu0 0.0
  %2709 = vmatpush2.msra.mxu0 0.0
  %2710 = vmatprep.subr.mxu0 0.0
  %2711 = vmatpush2.msra.mxu0 0.0
  %2712 = vmatprep.subr.mxu0 0.0
  %2713 = vmatpush2.msra.mxu0 0.0
  %2714 = vmatprep.subr.mxu0 0.0
  %2715 = vmatpush2.msra.mxu0 0.0
  %2716 = vmatprep.subr.mxu0 0.0
  %2717 = vmatpush2.msra.mxu0 0.0
  %2718 = vmatprep.subr.mxu0 0.0
  %2719 = vmatpush2.msra.mxu0 0.0
  %2720 = vmatprep.subr.mxu0 0.0
  %2721 = vmatpush2.msra.mxu0 0.0
  %2722 = vmatprep.subr.mxu0 0.0
  %2723 = vmatpush2.msra.mxu0 0.0
  %2724 = vmatprep.subr.mxu0 0.0
  %2725 = vmatpush2.msra.mxu0 0.0
  %2726 = vmatprep.mubr.f32.mxu0 0.0
  %v2727 = vand.u32 %v2534, 4294901760
  %2728 = vmatmul.mubr.f32.gmra.mxu0 %v2727
  %v2729 = vpop.f32.mrf.mxu0
  %v2730 = vadd.f32 %v2619, %v2729
  %v2731 = vpop.f32.mrf.mxu0
  %2732 = vmatprep.mubr.f32.mxu0 0.0
  %v2733 = vand.u32 %v2537, 4294901760
  %2734 = vmatmul.mubr.f32.gmra.mxu0 %v2733
  %v2735 = vpop.f32.mrf.mxu0
  %v2736 = vadd.f32 %v2629, %v2735
  %v2737 = vpop.f32.mrf.mxu0
  %2738 = vmatprep.mubr.f32.mxu0 0.0
  %v2739 = vand.u32 %v2540, 4294901760
  %2740 = vmatmul.mubr.f32.gmra.mxu0 %v2739
  %v2741 = vpop.f32.mrf.mxu0
  %v2742 = vadd.f32 %v2639, %v2741
  %v2743 = vpop.f32.mrf.mxu0
  %2744 = vmatprep.mubr.f32.mxu0 0.0
  %v2745 = vand.u32 %v2543, 4294901760
  %2746 = vmatmul.mubr.f32.gmra.mxu0 %v2745
  %v2747 = vpop.f32.mrf.mxu0
  %v2748 = vadd.f32 %v2649, %v2747
  %v2749 = vpop.f32.mrf.mxu0
  %2750 = vdwg.mxu0
  %2751 = vmatprep.subr.mxu0 0.0
  %2752 = vmatpush1.msra.mxu0 0.0
  %2753 = vmatprep.subr.mxu0 0.0
  %2754 = vmatpush1.msra.mxu0 0.0
  %2755 = vmatprep.subr.mxu0 0.0
  %2756 = vmatpush1.msra.mxu0 0.0
  %2757 = vmatprep.subr.mxu0 0.0
  %2758 = vmatpush1.msra.mxu0 0.0
  %2759 = vmatprep.subr.mxu0 0.0
  %2760 = vmatpush1.msra.mxu0 0.0
  %2761 = vmatprep.subr.mxu0 0.0
  %2762 = vmatpush1.msra.mxu0 0.0
  %2763 = vmatprep.subr.mxu0 0.0
  %2764 = vmatpush1.msra.mxu0 0.0
  %2765 = vmatprep.subr.mxu0 0.0
  %2766 = vmatpush1.msra.mxu0 0.0
  %2767 = vmatprep.subr.mxu0 0.0
  %2768 = vmatpush1.msra.mxu0 0.0
  %2769 = vmatprep.subr.mxu0 0.0
  %2770 = vmatpush1.msra.mxu0 0.0
  %2771 = vmatprep.subr.mxu0 0.0
  %2772 = vmatpush1.msra.mxu0 0.0
  %2773 = vmatprep.subr.mxu0 0.0
  %2774 = vmatpush1.msra.mxu0 0.0
  %2775 = vmatprep.subr.mxu0 0.0
  %2776 = vmatpush1.msra.mxu0 0.0
  %2777 = vmatprep.subr.mxu0 0.0
  %2778 = vmatpush1.msra.mxu0 0.0
  %2779 = vmatprep.subr.mxu0 0.0
  %v2780 = vand.u32 %v2504, 4294901760
  %v2781 = vsub.f32 %v2504, %v2780
  %2782 = vmatpush1.msra.mxu0 %v2781
  %2783 = vmatprep.subr.mxu0 0.0
  %v2784 = vand.u32 %v2502, 4294901760
  %v2785 = vsub.f32 %v2502, %v2784
  %2786 = vmatpush1.msra.mxu0 %v2785
  %2787 = vmatprep.subr.mxu0 0.0
  %2788 = vmatpush2.msra.mxu0 0.0
  %2789 = vmatprep.subr.mxu0 0.0
  %2790 = vmatpush2.msra.mxu0 0.0
  %2791 = vmatprep.subr.mxu0 0.0
  %2792 = vmatpush2.msra.mxu0 0.0
  %2793 = vmatprep.subr.mxu0 0.0
  %2794 = vmatpush2.msra.mxu0 0.0
  %2795 = vmatprep.subr.mxu0 0.0
  %2796 = vmatpush2.msra.mxu0 0.0
  %2797 = vmatprep.subr.mxu0 0.0
  %2798 = vmatpush2.msra.mxu0 0.0
  %2799 = vmatprep.subr.mxu0 0.0
  %2800 = vmatpush2.msra.mxu0 0.0
  %2801 = vmatprep.subr.mxu0 0.0
  %2802 = vmatpush2.msra.mxu0 0.0
  %2803 = vmatprep.subr.mxu0 0.0
  %2804 = vmatpush2.msra.mxu0 0.0
  %2805 = vmatprep.subr.mxu0 0.0
  %2806 = vmatpush2.msra.mxu0 0.0
  %2807 = vmatprep.subr.mxu0 0.0
  %2808 = vmatpush2.msra.mxu0 0.0
  %2809 = vmatprep.subr.mxu0 0.0
  %2810 = vmatpush2.msra.mxu0 0.0
  %2811 = vmatprep.subr.mxu0 0.0
  %2812 = vmatpush2.msra.mxu0 0.0
  %2813 = vmatprep.subr.mxu0 0.0
  %2814 = vmatpush2.msra.mxu0 0.0
  %2815 = vmatprep.subr.mxu0 0.0
  %2816 = vmatpush2.msra.mxu0 0.0
  %2817 = vmatprep.subr.mxu0 0.0
  %2818 = vmatpush2.msra.mxu0 0.0
  %2819 = vmatprep.mubr.f32.mxu0 0.0
  %v2820 = vand.u32 %v2534, 4294901760
  %v2821 = vsub.f32 %v2534, %v2820
  %2822 = vmatmul.mubr.f32.gmra.mxu0 %v2821
  %v2823 = vpop.f32.mrf.mxu0
  %v2824 = vadd.f32 %v2730, %v2823
  %v2825 = vpop.f32.mrf.mxu0
  %2826 = vmatprep.mubr.f32.mxu0 0.0
  %v2827 = vand.u32 %v2537, 4294901760
  %v2828 = vsub.f32 %v2537, %v2827
  %2829 = vmatmul.mubr.f32.gmra.mxu0 %v2828
  %v2830 = vpop.f32.mrf.mxu0
  %v2831 = vadd.f32 %v2736, %v2830
  %v2832 = vpop.f32.mrf.mxu0
  %2833 = vmatprep.mubr.f32.mxu0 0.0
  %v2834 = vand.u32 %v2540, 4294901760
  %v2835 = vsub.f32 %v2540, %v2834
  %2836 = vmatmul.mubr.f32.gmra.mxu0 %v2835
  %v2837 = vpop.f32.mrf.mxu0
  %v2838 = vadd.f32 %v2742, %v2837
  %v2839 = vpop.f32.mrf.mxu0
  %2840 = vmatprep.mubr.f32.mxu0 0.0
  %v2841 = vand.u32 %v2543, 4294901760
  %v2842 = vsub.f32 %v2543, %v2841
  %2843 = vmatmul.mubr.f32.gmra.mxu0 %v2842
  %v2844 = vpop.f32.mrf.mxu0
  %v2845 = vadd.f32 %v2748, %v2844
  %v2846 = vpop.f32.mrf.mxu0
  %2847 = vdwg.mxu0
  %2848 = vmatprep.subr.mxu0 0.0
  %2849 = vmatpush1.msra.mxu0 0.0
  %2850 = vmatprep.subr.mxu0 0.0
  %2851 = vmatpush1.msra.mxu0 0.0
  %2852 = vmatprep.subr.mxu0 0.0
  %2853 = vmatpush1.msra.mxu0 0.0
  %2854 = vmatprep.subr.mxu0 0.0
  %2855 = vmatpush1.msra.mxu0 0.0
  %2856 = vmatprep.subr.mxu0 0.0
  %2857 = vmatpush1.msra.mxu0 0.0
  %2858 = vmatprep.subr.mxu0 0.0
  %2859 = vmatpush1.msra.mxu0 0.0
  %2860 = vmatprep.subr.mxu0 0.0
  %2861 = vmatpush1.msra.mxu0 0.0
  %2862 = vmatprep.subr.mxu0 0.0
  %2863 = vmatpush1.msra.mxu0 0.0
  %2864 = vmatprep.subr.mxu0 0.0
  %2865 = vmatpush1.msra.mxu0 0.0
  %2866 = vmatprep.subr.mxu0 0.0
  %2867 = vmatpush1.msra.mxu0 0.0
  %2868 = vmatprep.subr.mxu0 0.0
  %2869 = vmatpush1.msra.mxu0 0.0
  %2870 = vmatprep.subr.mxu0 0.0
  %2871 = vmatpush1.msra.mxu0 0.0
  %2872 = vmatprep.subr.mxu0 0.0
  %2873 = vmatpush1.msra.mxu0 0.0
  %2874 = vmatprep.subr.mxu0 0.0
  %2875 = vmatpush1.msra.mxu0 0.0
  %2876 = vmatprep.subr.mxu0 0.0
  %v2877 = vand.u32 %v2504, 4294901760
  %2878 = vmatpush1.msra.mxu0 %v2877
  %2879 = vmatprep.subr.mxu0 0.0
  %v2880 = vand.u32 %v2502, 4294901760
  %2881 = vmatpush1.msra.mxu0 %v2880
  %2882 = vmatprep.subr.mxu0 0.0
  %2883 = vmatpush2.msra.mxu0 0.0
  %2884 = vmatprep.subr.mxu0 0.0
  %2885 = vmatpush2.msra.mxu0 0.0
  %2886 = vmatprep.subr.mxu0 0.0
  %2887 = vmatpush2.msra.mxu0 0.0
  %2888 = vmatprep.subr.mxu0 0.0
  %2889 = vmatpush2.msra.mxu0 0.0
  %2890 = vmatprep.subr.mxu0 0.0
  %2891 = vmatpush2.msra.mxu0 0.0
  %2892 = vmatprep.subr.mxu0 0.0
  %2893 = vmatpush2.msra.mxu0 0.0
  %2894 = vmatprep.subr.mxu0 0.0
  %2895 = vmatpush2.msra.mxu0 0.0
  %2896 = vmatprep.subr.mxu0 0.0
  %2897 = vmatpush2.msra.mxu0 0.0
  %2898 = vmatprep.subr.mxu0 0.0
  %2899 = vmatpush2.msra.mxu0 0.0
  %2900 = vmatprep.subr.mxu0 0.0
  %2901 = vmatpush2.msra.mxu0 0.0
  %2902 = vmatprep.subr.mxu0 0.0
  %2903 = vmatpush2.msra.mxu0 0.0
  %2904 = vmatprep.subr.mxu0 0.0
  %2905 = vmatpush2.msra.mxu0 0.0
  %2906 = vmatprep.subr.mxu0 0.0
  %2907 = vmatpush2.msra.mxu0 0.0
  %2908 = vmatprep.subr.mxu0 0.0
  %2909 = vmatpush2.msra.mxu0 0.0
  %2910 = vmatprep.subr.mxu0 0.0
  %2911 = vmatpush2.msra.mxu0 0.0
  %2912 = vmatprep.subr.mxu0 0.0
  %2913 = vmatpush2.msra.mxu0 0.0
  %2914 = vmatprep.mubr.f32.mxu0 0.0
  %v2915 = vand.u32 %v2534, 4294901760
  %v2916 = vsub.f32 %v2534, %v2915
  %v2917 = vand.u32 %v2916, 4294901760
  %2918 = vmatmul.mubr.f32.gmra.mxu0 %v2917
  %v2919 = vpop.f32.mrf.mxu0
  %v2920 = vadd.f32 %v2824, %v2919
  %v2921 = vpop.f32.mrf.mxu0
  %2922 = vmatprep.mubr.f32.mxu0 0.0
  %v2923 = vand.u32 %v2537, 4294901760
  %v2924 = vsub.f32 %v2537, %v2923
  %v2925 = vand.u32 %v2924, 4294901760
  %2926 = vmatmul.mubr.f32.gmra.mxu0 %v2925
  %v2927 = vpop.f32.mrf.mxu0
  %v2928 = vadd.f32 %v2831, %v2927
  %v2929 = vpop.f32.mrf.mxu0
  %2930 = vmatprep.mubr.f32.mxu0 0.0
  %v2931 = vand.u32 %v2540, 4294901760
  %v2932 = vsub.f32 %v2540, %v2931
  %v2933 = vand.u32 %v2932, 4294901760
  %2934 = vmatmul.mubr.f32.gmra.mxu0 %v2933
  %v2935 = vpop.f32.mrf.mxu0
  %v2936 = vadd.f32 %v2838, %v2935
  %v2937 = vpop.f32.mrf.mxu0
  %2938 = vmatprep.mubr.f32.mxu0 0.0
  %v2939 = vand.u32 %v2543, 4294901760
  %v2940 = vsub.f32 %v2543, %v2939
  %v2941 = vand.u32 %v2940, 4294901760
  %2942 = vmatmul.mubr.f32.gmra.mxu0 %v2941
  %v2943 = vpop.f32.mrf.mxu0
  %v2944 = vadd.f32 %v2845, %v2943
  %v2945 = vpop.f32.mrf.mxu0
  %2946 = vdwg.mxu0
  %2947 = vmatprep.subr.mxu0 0.0
  %2948 = vmatpush1.msra.mxu0 0.0
  %2949 = vmatprep.subr.mxu0 0.0
  %2950 = vmatpush1.msra.mxu0 0.0
  %2951 = vmatprep.subr.mxu0 0.0
  %2952 = vmatpush1.msra.mxu0 0.0
  %2953 = vmatprep.subr.mxu0 0.0
  %2954 = vmatpush1.msra.mxu0 0.0
  %2955 = vmatprep.subr.mxu0 0.0
  %2956 = vmatpush1.msra.mxu0 0.0
  %2957 = vmatprep.subr.mxu0 0.0
  %2958 = vmatpush1.msra.mxu0 0.0
  %2959 = vmatprep.subr.mxu0 0.0
  %2960 = vmatpush1.msra.mxu0 0.0
  %2961 = vmatprep.subr.mxu0 0.0
  %2962 = vmatpush1.msra.mxu0 0.0
  %2963 = vmatprep.subr.mxu0 0.0
  %2964 = vmatpush1.msra.mxu0 0.0
  %2965 = vmatprep.subr.mxu0 0.0
  %2966 = vmatpush1.msra.mxu0 0.0
  %2967 = vmatprep.subr.mxu0 0.0
  %2968 = vmatpush1.msra.mxu0 0.0
  %2969 = vmatprep.subr.mxu0 0.0
  %2970 = vmatpush1.msra.mxu0 0.0
  %2971 = vmatprep.subr.mxu0 0.0
  %2972 = vmatpush1.msra.mxu0 0.0
  %2973 = vmatprep.subr.mxu0 0.0
  %2974 = vmatpush1.msra.mxu0 0.0
  %2975 = vmatprep.subr.mxu0 0.0
  %v2976 = vand.u32 %v2504, 4294901760
  %v2977 = vsub.f32 %v2504, %v2976
  %v2978 = vand.u32 %v2977, 4294901760
  %2979 = vmatpush1.msra.mxu0 %v2978
  %2980 = vmatprep.subr.mxu0 0.0
  %v2981 = vand.u32 %v2502, 4294901760
  %v2982 = vsub.f32 %v2502, %v2981
  %v2983 = vand.u32 %v2982, 4294901760
  %2984 = vmatpush1.msra.mxu0 %v2983
  %2985 = vmatprep.subr.mxu0 0.0
  %2986 = vmatpush2.msra.mxu0 0.0
  %2987 = vmatprep.subr.mxu0 0.0
  %2988 = vmatpush2.msra.mxu0 0.0
  %2989 = vmatprep.subr.mxu0 0.0
  %2990 = vmatpush2.msra.mxu0 0.0
  %2991 = vmatprep.subr.mxu0 0.0
  %2992 = vmatpush2.msra.mxu0 0.0
  %2993 = vmatprep.subr.mxu0 0.0
  %2994 = vmatpush2.msra.mxu0 0.0
  %2995 = vmatprep.subr.mxu0 0.0
  %2996 = vmatpush2.msra.mxu0 0.0
  %2997 = vmatprep.subr.mxu0 0.0
  %2998 = vmatpush2.msra.mxu0 0.0
  %2999 = vmatprep.subr.mxu0 0.0
  %3000 = vmatpush2.msra.mxu0 0.0
  %3001 = vmatprep.subr.mxu0 0.0
  %3002 = vmatpush2.msra.mxu0 0.0
  %3003 = vmatprep.subr.mxu0 0.0
  %3004 = vmatpush2.msra.mxu0 0.0
  %3005 = vmatprep.subr.mxu0 0.0
  %3006 = vmatpush2.msra.mxu0 0.0
  %3007 = vmatprep.subr.mxu0 0.0
  %3008 = vmatpush2.msra.mxu0 0.0
  %3009 = vmatprep.subr.mxu0 0.0
  %3010 = vmatpush2.msra.mxu0 0.0
  %3011 = vmatprep.subr.mxu0 0.0
  %3012 = vmatpush2.msra.mxu0 0.0
  %3013 = vmatprep.subr.mxu0 0.0
  %3014 = vmatpush2.msra.mxu0 0.0
  %3015 = vmatprep.subr.mxu0 0.0
  %3016 = vmatpush2.msra.mxu0 0.0
  %3017 = vmatprep.mubr.f32.mxu0 0.0
  %v3018 = vand.u32 %v2534, 4294901760
  %3019 = vmatmul.mubr.f32.gmra.mxu0 %v3018
  %v3020 = vpop.f32.mrf.mxu0
  %v3021 = vadd.f32 %v2920, %v3020
  %v3022 = vpop.f32.mrf.mxu0
  %3023 = vmatprep.mubr.f32.mxu0 0.0
  %v3024 = vand.u32 %v2537, 4294901760
  %3025 = vmatmul.mubr.f32.gmra.mxu0 %v3024
  %v3026 = vpop.f32.mrf.mxu0
  %v3027 = vadd.f32 %v2928, %v3026
  %v3028 = vpop.f32.mrf.mxu0
  %3029 = vmatprep.mubr.f32.mxu0 0.0
  %v3030 = vand.u32 %v2540, 4294901760
  %3031 = vmatmul.mubr.f32.gmra.mxu0 %v3030
  %v3032 = vpop.f32.mrf.mxu0
  %v3033 = vadd.f32 %v2936, %v3032
  %v3034 = vpop.f32.mrf.mxu0
  %3035 = vmatprep.mubr.f32.mxu0 0.0
  %v3036 = vand.u32 %v2543, 4294901760
  %3037 = vmatmul.mubr.f32.gmra.mxu0 %v3036
  %v3038 = vpop.f32.mrf.mxu0
  %v3039 = vadd.f32 %v2944, %v3038
  %v3040 = vpop.f32.mrf.mxu0
  %3041 = vdwg.mxu0
  %3042 = vmatprep.subr.mxu0 0.0
  %3043 = vmatpush1.msra.mxu0 0.0
  %3044 = vmatprep.subr.mxu0 0.0
  %3045 = vmatpush1.msra.mxu0 0.0
  %3046 = vmatprep.subr.mxu0 0.0
  %3047 = vmatpush1.msra.mxu0 0.0
  %3048 = vmatprep.subr.mxu0 0.0
  %3049 = vmatpush1.msra.mxu0 0.0
  %3050 = vmatprep.subr.mxu0 0.0
  %3051 = vmatpush1.msra.mxu0 0.0
  %3052 = vmatprep.subr.mxu0 0.0
  %3053 = vmatpush1.msra.mxu0 0.0
  %3054 = vmatprep.subr.mxu0 0.0
  %3055 = vmatpush1.msra.mxu0 0.0
  %3056 = vmatprep.subr.mxu0 0.0
  %3057 = vmatpush1.msra.mxu0 0.0
  %3058 = vmatprep.subr.mxu0 0.0
  %3059 = vmatpush1.msra.mxu0 0.0
  %3060 = vmatprep.subr.mxu0 0.0
  %3061 = vmatpush1.msra.mxu0 0.0
  %3062 = vmatprep.subr.mxu0 0.0
  %3063 = vmatpush1.msra.mxu0 0.0
  %3064 = vmatprep.subr.mxu0 0.0
  %3065 = vmatpush1.msra.mxu0 0.0
  %3066 = vmatprep.subr.mxu0 0.0
  %3067 = vmatpush1.msra.mxu0 0.0
  %3068 = vmatprep.subr.mxu0 0.0
  %3069 = vmatpush1.msra.mxu0 0.0
  %3070 = vmatprep.subr.mxu0 0.0
  %v3071 = vand.u32 %v2504, 4294901760
  %3072 = vmatpush1.msra.mxu0 %v3071
  %3073 = vmatprep.subr.mxu0 0.0
  %v3074 = vand.u32 %v2502, 4294901760
  %3075 = vmatpush1.msra.mxu0 %v3074
  %3076 = vmatprep.subr.mxu0 0.0
  %3077 = vmatpush2.msra.mxu0 0.0
  %3078 = vmatprep.subr.mxu0 0.0
  %3079 = vmatpush2.msra.mxu0 0.0
  %3080 = vmatprep.subr.mxu0 0.0
  %3081 = vmatpush2.msra.mxu0 0.0
  %3082 = vmatprep.subr.mxu0 0.0
  %3083 = vmatpush2.msra.mxu0 0.0
  %3084 = vmatprep.subr.mxu0 0.0
  %3085 = vmatpush2.msra.mxu0 0.0
  %3086 = vmatprep.subr.mxu0 0.0
  %3087 = vmatpush2.msra.mxu0 0.0
  %3088 = vmatprep.subr.mxu0 0.0
  %3089 = vmatpush2.msra.mxu0 0.0
  %3090 = vmatprep.subr.mxu0 0.0
  %3091 = vmatpush2.msra.mxu0 0.0
  %3092 = vmatprep.subr.mxu0 0.0
  %3093 = vmatpush2.msra.mxu0 0.0
  %3094 = vmatprep.subr.mxu0 0.0
  %3095 = vmatpush2.msra.mxu0 0.0
  %3096 = vmatprep.subr.mxu0 0.0
  %3097 = vmatpush2.msra.mxu0 0.0
  %3098 = vmatprep.subr.mxu0 0.0
  %3099 = vmatpush2.msra.mxu0 0.0
  %3100 = vmatprep.subr.mxu0 0.0
  %3101 = vmatpush2.msra.mxu0 0.0
  %3102 = vmatprep.subr.mxu0 0.0
  %3103 = vmatpush2.msra.mxu0 0.0
  %3104 = vmatprep.subr.mxu0 0.0
  %3105 = vmatpush2.msra.mxu0 0.0
  %3106 = vmatprep.subr.mxu0 0.0
  %3107 = vmatpush2.msra.mxu0 0.0
  %3108 = vmatprep.mubr.f32.mxu0 0.0
  %v3109 = vand.u32 %v2534, 4294901760
  %3110 = vmatmul.mubr.f32.gmra.mxu0 %v3109
  %v3111 = vpop.f32.mrf.mxu0
  %v3112 = vadd.f32 %v3021, %v3111
  %v3113 = vpop.f32.mrf.mxu0
  %3114 = vmatprep.mubr.f32.mxu0 0.0
  %v3115 = vand.u32 %v2537, 4294901760
  %3116 = vmatmul.mubr.f32.gmra.mxu0 %v3115
  %v3117 = vpop.f32.mrf.mxu0
  %v3118 = vadd.f32 %v3027, %v3117
  %v3119 = vpop.f32.mrf.mxu0
  %3120 = vmatprep.mubr.f32.mxu0 0.0
  %v3121 = vand.u32 %v2540, 4294901760
  %3122 = vmatmul.mubr.f32.gmra.mxu0 %v3121
  %v3123 = vpop.f32.mrf.mxu0
  %v3124 = vadd.f32 %v3033, %v3123
  %v3125 = vpop.f32.mrf.mxu0
  %3126 = vmatprep.mubr.f32.mxu0 0.0
  %v3127 = vand.u32 %v2543, 4294901760
  %3128 = vmatmul.mubr.f32.gmra.mxu0 %v3127
  %v3129 = vpop.f32.mrf.mxu0
  %v3130 = vadd.f32 %v3039, %v3129
  %v3131 = vpop.f32.mrf.mxu0
  %3132 = vdwg.mxu0
  %v3133 = vxor.u32 %v3112, 2147483648
  %v3134 = vxor.u32 %v3118, 2147483648
  %v3135 = vxor.u32 %v3124, 2147483648
  %v3136 = vxor.u32 %v3130, 2147483648
  %v3137 = vmul.f32 %v3133, 1.442695
  %v3138 = vpow.pop %v3137
  %v3139 = vmul.f32 %v3134, 1.442695
  %v3140 = vpow.pop %v3139
  %v3141 = vmul.f32 %v3135, 1.442695
  %v3142 = vpow.pop %v3141
  %v3143 = vmul.f32 %v3136, 1.442695
  %v3144 = vpow.pop %v3143
  %v3145 = vadd.f32 %v3138, 1.0
  %v3146 = vadd.f32 %v3140, 1.0
  %v3147 = vadd.f32 %v3142, 1.0
  %v3148 = vadd.f32 %v3144, 1.0
  %v3149 = vrcp.pop %v3145
  %v3150 = vmul.f32 1.0, %v3149
  %v3151 = vrcp.pop %v3146
  %v3152 = vmul.f32 1.0, %v3151
  %v3153 = vrcp.pop %v3147
  %v3154 = vmul.f32 1.0, %v3153
  %v3155 = vrcp.pop %v3148
  %v3156 = vmul.f32 1.0, %v3155
  %v3157 = vld [vmem:[%s6] sm:$0xff]
  %v3158 = vld [vmem:[%s6 + $0x8] sm:$0xff]
  %v3159 = vld [vmem:[%s6 + $0x10] sm:$0xff]
  %v3160 = vld [vmem:[%s6 + $0x18] sm:$0xff]
  %v3161 = vld [vmem:[%s6 + $0x20] sm:$0xff]
  %v3162 = vld [vmem:[%s6 + $0x28] sm:$0xff]
  %v3163 = vld [vmem:[%s6 + $0x30] sm:$0xff]
  %v3164 = vld [vmem:[%s6 + $0x38] sm:$0xff]
  %v3165 = vld [vmem:[%s12] sm:$0xff]
  %v3166 = vld [vmem:[%s12 + $0x8] sm:$0xff]
  %v3167 = vld [vmem:[%s12 + $0x10] sm:$0xff]
  %v3168 = vld [vmem:[%s12 + $0x18] sm:$0xff]
  %v3169 = vld [vmem:[%s12 + $0x20] sm:$0xff]
  %v3170 = vld [vmem:[%s12 + $0x28] sm:$0xff]
  %v3171 = vld [vmem:[%s12 + $0x30] sm:$0xff]
  %v3172 = vld [vmem:[%s12 + $0x38] sm:$0xff]
  %3174 = vset.pattern.permute.xlu0 0
  %3175 = vperm.xlu0 %3174, %v3165
  %v3176 = vpop.permute.xlu0 %3175
  %3179 = vset.pattern.permute.xlu0 0
  %3180 = vperm.xlu0 %3179, %v3166
  %v3181 = vpop.permute.xlu0 %3180
  %3184 = vset.pattern.permute.xlu0 0
  %3185 = vperm.xlu0 %3184, %v3167
  %v3186 = vpop.permute.xlu0 %3185
  %3189 = vset.pattern.permute.xlu0 0
  %3190 = vperm.xlu0 %3189, %v3168
  %v3191 = vpop.permute.xlu0 %3190
  %3194 = vset.pattern.permute.xlu0 0
  %3195 = vperm.xlu0 %3194, %v3169
  %v3196 = vpop.permute.xlu0 %3195
  %3199 = vset.pattern.permute.xlu0 0
  %3200 = vperm.xlu0 %3199, %v3170
  %v3201 = vpop.permute.xlu0 %3200
  %3204 = vset.pattern.permute.xlu0 0
  %3205 = vperm.xlu0 %3204, %v3171
  %v3206 = vpop.permute.xlu0 %3205
  %3209 = vset.pattern.permute.xlu0 0
  %3210 = vperm.xlu0 %3209, %v3172
  %v3211 = vpop.permute.xlu0 %3210
  %v3214 = vsel %vm959, %v3157, 0
  %v3217 = vsel %vm959, %v3158, 0
  %v3220 = vsel %vm959, %v3159, 0
  %v3223 = vsel %vm959, %v3160, 0
  %v3226 = vsel %vm959, %v3161, 0
  %v3229 = vsel %vm959, %v3162, 0
  %v3232 = vsel %vm959, %v3163, 0
  %v3235 = vsel %vm959, %v3164, 0
  %3237 = vmatprep.subr.mxu0 0.0
  %3238 = vmatpush1.msra.mxu0 0.0
  %3239 = vmatprep.subr.mxu0 0.0
  %3240 = vmatpush1.msra.mxu0 0.0
  %3241 = vmatprep.subr.mxu0 0.0
  %3242 = vmatpush1.msra.mxu0 0.0
  %3243 = vmatprep.subr.mxu0 0.0
  %3244 = vmatpush1.msra.mxu0 0.0
  %3245 = vmatprep.subr.mxu0 0.0
  %3246 = vmatpush1.msra.mxu0 0.0
  %3247 = vmatprep.subr.mxu0 0.0
  %3248 = vmatpush1.msra.mxu0 0.0
  %3249 = vmatprep.subr.mxu0 0.0
  %3250 = vmatpush1.msra.mxu0 0.0
  %3251 = vmatprep.subr.mxu0 0.0
  %3252 = vmatpush1.msra.mxu0 0.0
  %3253 = vmatprep.subr.mxu0 0.0
  %3254 = vmatpush1.msra.mxu0 0.0
  %3255 = vmatprep.subr.mxu0 0.0
  %3256 = vmatpush1.msra.mxu0 0.0
  %3257 = vmatprep.subr.mxu0 0.0
  %3258 = vmatpush1.msra.mxu0 0.0
  %3259 = vmatprep.subr.mxu0 0.0
  %3260 = vmatpush1.msra.mxu0 0.0
  %3261 = vmatprep.subr.mxu0 0.0
  %v3262 = vand.u32 %v3156, 4294901760
  %3263 = vmatpush1.msra.mxu0 %v3262
  %3264 = vmatprep.subr.mxu0 0.0
  %v3265 = vand.u32 %v3154, 4294901760
  %3266 = vmatpush1.msra.mxu0 %v3265
  %3267 = vmatprep.subr.mxu0 0.0
  %v3268 = vand.u32 %v3152, 4294901760
  %3269 = vmatpush1.msra.mxu0 %v3268
  %3270 = vmatprep.subr.mxu0 0.0
  %v3271 = vand.u32 %v3150, 4294901760
  %3272 = vmatpush1.msra.mxu0 %v3271
  %3273 = vmatprep.subr.mxu0 0.0
  %3274 = vmatpush2.msra.mxu0 0.0
  %3275 = vmatprep.subr.mxu0 0.0
  %3276 = vmatpush2.msra.mxu0 0.0
  %3277 = vmatprep.subr.mxu0 0.0
  %3278 = vmatpush2.msra.mxu0 0.0
  %3279 = vmatprep.subr.mxu0 0.0
  %3280 = vmatpush2.msra.mxu0 0.0
  %3281 = vmatprep.subr.mxu0 0.0
  %3282 = vmatpush2.msra.mxu0 0.0
  %3283 = vmatprep.subr.mxu0 0.0
  %3284 = vmatpush2.msra.mxu0 0.0
  %3285 = vmatprep.subr.mxu0 0.0
  %3286 = vmatpush2.msra.mxu0 0.0
  %3287 = vmatprep.subr.mxu0 0.0
  %3288 = vmatpush2.msra.mxu0 0.0
  %3289 = vmatprep.subr.mxu0 0.0
  %3290 = vmatpush2.msra.mxu0 0.0
  %3291 = vmatprep.subr.mxu0 0.0
  %3292 = vmatpush2.msra.mxu0 0.0
  %3293 = vmatprep.subr.mxu0 0.0
  %3294 = vmatpush2.msra.mxu0 0.0
  %3295 = vmatprep.subr.mxu0 0.0
  %3296 = vmatpush2.msra.mxu0 0.0
  %3297 = vmatprep.subr.mxu0 0.0
  %3298 = vmatpush2.msra.mxu0 0.0
  %3299 = vmatprep.subr.mxu0 0.0
  %3300 = vmatpush2.msra.mxu0 0.0
  %3301 = vmatprep.subr.mxu0 0.0
  %3302 = vmatpush2.msra.mxu0 0.0
  %3303 = vmatprep.subr.mxu0 0.0
  %3304 = vmatpush2.msra.mxu0 0.0
  %3305 = vmatprep.mubr.f32.mxu0 0.0
  %v3306 = vand.u32 %v3214, 4294901760
  %v3307 = vsub.f32 %v3214, %v3306
  %v3308 = vand.u32 %v3307, 4294901760
  %v3309 = vsub.f32 %v3307, %v3308
  %v3310 = vand.u32 %v3309, 4294901760
  %3311 = vmatmul.mubr.f32.gmra.mxu0 %v3310
  %v3312 = vpop.f32.mrf.mxu0
  %v3313 = vadd.f32 %v3176, %v3312
  %v3314 = vpop.f32.mrf.mxu0
  %3315 = vmatprep.mubr.f32.mxu0 0.0
  %v3316 = vand.u32 %v3217, 4294901760
  %v3317 = vsub.f32 %v3217, %v3316
  %v3318 = vand.u32 %v3317, 4294901760
  %v3319 = vsub.f32 %v3317, %v3318
  %v3320 = vand.u32 %v3319, 4294901760
  %3321 = vmatmul.mubr.f32.gmra.mxu0 %v3320
  %v3322 = vpop.f32.mrf.mxu0
  %v3323 = vadd.f32 %v3181, %v3322
  %v3324 = vpop.f32.mrf.mxu0
  %3325 = vmatprep.mubr.f32.mxu0 0.0
  %v3326 = vand.u32 %v3220, 4294901760
  %v3327 = vsub.f32 %v3220, %v3326
  %v3328 = vand.u32 %v3327, 4294901760
  %v3329 = vsub.f32 %v3327, %v3328
  %v3330 = vand.u32 %v3329, 4294901760
  %3331 = vmatmul.mubr.f32.gmra.mxu0 %v3330
  %v3332 = vpop.f32.mrf.mxu0
  %v3333 = vadd.f32 %v3186, %v3332
  %v3334 = vpop.f32.mrf.mxu0
  %3335 = vmatprep.mubr.f32.mxu0 0.0
  %v3336 = vand.u32 %v3223, 4294901760
  %v3337 = vsub.f32 %v3223, %v3336
  %v3338 = vand.u32 %v3337, 4294901760
  %v3339 = vsub.f32 %v3337, %v3338
  %v3340 = vand.u32 %v3339, 4294901760
  %3341 = vmatmul.mubr.f32.gmra.mxu0 %v3340
  %v3342 = vpop.f32.mrf.mxu0
  %v3343 = vadd.f32 %v3191, %v3342
  %v3344 = vpop.f32.mrf.mxu0
  %3345 = vmatprep.mubr.f32.mxu0 0.0
  %v3346 = vand.u32 %v3226, 4294901760
  %v3347 = vsub.f32 %v3226, %v3346
  %v3348 = vand.u32 %v3347, 4294901760
  %v3349 = vsub.f32 %v3347, %v3348
  %v3350 = vand.u32 %v3349, 4294901760
  %3351 = vmatmul.mubr.f32.gmra.mxu0 %v3350
  %v3352 = vpop.f32.mrf.mxu0
  %v3353 = vadd.f32 %v3196, %v3352
  %v3354 = vpop.f32.mrf.mxu0
  %3355 = vmatprep.mubr.f32.mxu0 0.0
  %v3356 = vand.u32 %v3229, 4294901760
  %v3357 = vsub.f32 %v3229, %v3356
  %v3358 = vand.u32 %v3357, 4294901760
  %v3359 = vsub.f32 %v3357, %v3358
  %v3360 = vand.u32 %v3359, 4294901760
  %3361 = vmatmul.mubr.f32.gmra.mxu0 %v3360
  %v3362 = vpop.f32.mrf.mxu0
  %v3363 = vadd.f32 %v3201, %v3362
  %v3364 = vpop.f32.mrf.mxu0
  %3365 = vmatprep.mubr.f32.mxu0 0.0
  %v3366 = vand.u32 %v3232, 4294901760
  %v3367 = vsub.f32 %v3232, %v3366
  %v3368 = vand.u32 %v3367, 4294901760
  %v3369 = vsub.f32 %v3367, %v3368
  %v3370 = vand.u32 %v3369, 4294901760
  %3371 = vmatmul.mubr.f32.gmra.mxu0 %v3370
  %v3372 = vpop.f32.mrf.mxu0
  %v3373 = vadd.f32 %v3206, %v3372
  %v3374 = vpop.f32.mrf.mxu0
  %3375 = vmatprep.mubr.f32.mxu0 0.0
  %v3376 = vand.u32 %v3235, 4294901760
  %v3377 = vsub.f32 %v3235, %v3376
  %v3378 = vand.u32 %v3377, 4294901760
  %v3379 = vsub.f32 %v3377, %v3378
  %v3380 = vand.u32 %v3379, 4294901760
  %3381 = vmatmul.mubr.f32.gmra.mxu0 %v3380
  %v3382 = vpop.f32.mrf.mxu0
  %v3383 = vadd.f32 %v3211, %v3382
  %v3384 = vpop.f32.mrf.mxu0
  %3385 = vdwg.mxu0
  %3386 = vmatprep.subr.mxu0 0.0
  %3387 = vmatpush1.msra.mxu0 0.0
  %3388 = vmatprep.subr.mxu0 0.0
  %3389 = vmatpush1.msra.mxu0 0.0
  %3390 = vmatprep.subr.mxu0 0.0
  %3391 = vmatpush1.msra.mxu0 0.0
  %3392 = vmatprep.subr.mxu0 0.0
  %3393 = vmatpush1.msra.mxu0 0.0
  %3394 = vmatprep.subr.mxu0 0.0
  %3395 = vmatpush1.msra.mxu0 0.0
  %3396 = vmatprep.subr.mxu0 0.0
  %3397 = vmatpush1.msra.mxu0 0.0
  %3398 = vmatprep.subr.mxu0 0.0
  %3399 = vmatpush1.msra.mxu0 0.0
  %3400 = vmatprep.subr.mxu0 0.0
  %3401 = vmatpush1.msra.mxu0 0.0
  %3402 = vmatprep.subr.mxu0 0.0
  %3403 = vmatpush1.msra.mxu0 0.0
  %3404 = vmatprep.subr.mxu0 0.0
  %3405 = vmatpush1.msra.mxu0 0.0
  %3406 = vmatprep.subr.mxu0 0.0
  %3407 = vmatpush1.msra.mxu0 0.0
  %3408 = vmatprep.subr.mxu0 0.0
  %3409 = vmatpush1.msra.mxu0 0.0
  %3410 = vmatprep.subr.mxu0 0.0
  %v3411 = vand.u32 %v3156, 4294901760
  %v3412 = vsub.f32 %v3156, %v3411
  %v3413 = vand.u32 %v3412, 4294901760
  %v3414 = vsub.f32 %v3412, %v3413
  %v3415 = vand.u32 %v3414, 4294901760
  %3416 = vmatpush1.msra.mxu0 %v3415
  %3417 = vmatprep.subr.mxu0 0.0
  %v3418 = vand.u32 %v3154, 4294901760
  %v3419 = vsub.f32 %v3154, %v3418
  %v3420 = vand.u32 %v3419, 4294901760
  %v3421 = vsub.f32 %v3419, %v3420
  %v3422 = vand.u32 %v3421, 4294901760
  %3423 = vmatpush1.msra.mxu0 %v3422
  %3424 = vmatprep.subr.mxu0 0.0
  %v3425 = vand.u32 %v3152, 4294901760
  %v3426 = vsub.f32 %v3152, %v3425
  %v3427 = vand.u32 %v3426, 4294901760
  %v3428 = vsub.f32 %v3426, %v3427
  %v3429 = vand.u32 %v3428, 4294901760
  %3430 = vmatpush1.msra.mxu0 %v3429
  %3431 = vmatprep.subr.mxu0 0.0
  %v3432 = vand.u32 %v3150, 4294901760
  %v3433 = vsub.f32 %v3150, %v3432
  %v3434 = vand.u32 %v3433, 4294901760
  %v3435 = vsub.f32 %v3433, %v3434
  %v3436 = vand.u32 %v3435, 4294901760
  %3437 = vmatpush1.msra.mxu0 %v3436
  %3438 = vmatprep.subr.mxu0 0.0
  %3439 = vmatpush2.msra.mxu0 0.0
  %3440 = vmatprep.subr.mxu0 0.0
  %3441 = vmatpush2.msra.mxu0 0.0
  %3442 = vmatprep.subr.mxu0 0.0
  %3443 = vmatpush2.msra.mxu0 0.0
  %3444 = vmatprep.subr.mxu0 0.0
  %3445 = vmatpush2.msra.mxu0 0.0
  %3446 = vmatprep.subr.mxu0 0.0
  %3447 = vmatpush2.msra.mxu0 0.0
  %3448 = vmatprep.subr.mxu0 0.0
  %3449 = vmatpush2.msra.mxu0 0.0
  %3450 = vmatprep.subr.mxu0 0.0
  %3451 = vmatpush2.msra.mxu0 0.0
  %3452 = vmatprep.subr.mxu0 0.0
  %3453 = vmatpush2.msra.mxu0 0.0
  %3454 = vmatprep.subr.mxu0 0.0
  %3455 = vmatpush2.msra.mxu0 0.0
  %3456 = vmatprep.subr.mxu0 0.0
  %3457 = vmatpush2.msra.mxu0 0.0
  %3458 = vmatprep.subr.mxu0 0.0
  %3459 = vmatpush2.msra.mxu0 0.0
  %3460 = vmatprep.subr.mxu0 0.0
  %3461 = vmatpush2.msra.mxu0 0.0
  %3462 = vmatprep.subr.mxu0 0.0
  %3463 = vmatpush2.msra.mxu0 0.0
  %3464 = vmatprep.subr.mxu0 0.0
  %3465 = vmatpush2.msra.mxu0 0.0
  %3466 = vmatprep.subr.mxu0 0.0
  %3467 = vmatpush2.msra.mxu0 0.0
  %3468 = vmatprep.subr.mxu0 0.0
  %3469 = vmatpush2.msra.mxu0 0.0
  %3470 = vmatprep.mubr.f32.mxu0 0.0
  %v3471 = vand.u32 %v3214, 4294901760
  %3472 = vmatmul.mubr.f32.gmra.mxu0 %v3471
  %v3473 = vpop.f32.mrf.mxu0
  %v3474 = vadd.f32 %v3313, %v3473
  %v3475 = vpop.f32.mrf.mxu0
  %3476 = vmatprep.mubr.f32.mxu0 0.0
  %v3477 = vand.u32 %v3217, 4294901760
  %3478 = vmatmul.mubr.f32.gmra.mxu0 %v3477
  %v3479 = vpop.f32.mrf.mxu0
  %v3480 = vadd.f32 %v3323, %v3479
  %v3481 = vpop.f32.mrf.mxu0
  %3482 = vmatprep.mubr.f32.mxu0 0.0
  %v3483 = vand.u32 %v3220, 4294901760
  %3484 = vmatmul.mubr.f32.gmra.mxu0 %v3483
  %v3485 = vpop.f32.mrf.mxu0
  %v3486 = vadd.f32 %v3333, %v3485
  %v3487 = vpop.f32.mrf.mxu0
  %3488 = vmatprep.mubr.f32.mxu0 0.0
  %v3489 = vand.u32 %v3223, 4294901760
  %3490 = vmatmul.mubr.f32.gmra.mxu0 %v3489
  %v3491 = vpop.f32.mrf.mxu0
  %v3492 = vadd.f32 %v3343, %v3491
  %v3493 = vpop.f32.mrf.mxu0
  %3494 = vmatprep.mubr.f32.mxu0 0.0
  %v3495 = vand.u32 %v3226, 4294901760
  %3496 = vmatmul.mubr.f32.gmra.mxu0 %v3495
  %v3497 = vpop.f32.mrf.mxu0
  %v3498 = vadd.f32 %v3353, %v3497
  %v3499 = vpop.f32.mrf.mxu0
  %3500 = vmatprep.mubr.f32.mxu0 0.0
  %v3501 = vand.u32 %v3229, 4294901760
  %3502 = vmatmul.mubr.f32.gmra.mxu0 %v3501
  %v3503 = vpop.f32.mrf.mxu0
  %v3504 = vadd.f32 %v3363, %v3503
  %v3505 = vpop.f32.mrf.mxu0
  %3506 = vmatprep.mubr.f32.mxu0 0.0
  %v3507 = vand.u32 %v3232, 4294901760
  %3508 = vmatmul.mubr.f32.gmra.mxu0 %v3507
  %v3509 = vpop.f32.mrf.mxu0
  %v3510 = vadd.f32 %v3373, %v3509
  %v3511 = vpop.f32.mrf.mxu0
  %3512 = vmatprep.mubr.f32.mxu0 0.0
  %v3513 = vand.u32 %v3235, 4294901760
  %3514 = vmatmul.mubr.f32.gmra.mxu0 %v3513
  %v3515 = vpop.f32.mrf.mxu0
  %v3516 = vadd.f32 %v3383, %v3515
  %v3517 = vpop.f32.mrf.mxu0
  %3518 = vdwg.mxu0
  %3519 = vmatprep.subr.mxu0 0.0
  %3520 = vmatpush1.msra.mxu0 0.0
  %3521 = vmatprep.subr.mxu0 0.0
  %3522 = vmatpush1.msra.mxu0 0.0
  %3523 = vmatprep.subr.mxu0 0.0
  %3524 = vmatpush1.msra.mxu0 0.0
  %3525 = vmatprep.subr.mxu0 0.0
  %3526 = vmatpush1.msra.mxu0 0.0
  %3527 = vmatprep.subr.mxu0 0.0
  %3528 = vmatpush1.msra.mxu0 0.0
  %3529 = vmatprep.subr.mxu0 0.0
  %3530 = vmatpush1.msra.mxu0 0.0
  %3531 = vmatprep.subr.mxu0 0.0
  %3532 = vmatpush1.msra.mxu0 0.0
  %3533 = vmatprep.subr.mxu0 0.0
  %3534 = vmatpush1.msra.mxu0 0.0
  %3535 = vmatprep.subr.mxu0 0.0
  %3536 = vmatpush1.msra.mxu0 0.0
  %3537 = vmatprep.subr.mxu0 0.0
  %3538 = vmatpush1.msra.mxu0 0.0
  %3539 = vmatprep.subr.mxu0 0.0
  %3540 = vmatpush1.msra.mxu0 0.0
  %3541 = vmatprep.subr.mxu0 0.0
  %3542 = vmatpush1.msra.mxu0 0.0
  %3543 = vmatprep.subr.mxu0 0.0
  %v3544 = vand.u32 %v3156, 4294901760
  %v3545 = vsub.f32 %v3156, %v3544
  %3546 = vmatpush1.msra.mxu0 %v3545
  %3547 = vmatprep.subr.mxu0 0.0
  %v3548 = vand.u32 %v3154, 4294901760
  %v3549 = vsub.f32 %v3154, %v3548
  %3550 = vmatpush1.msra.mxu0 %v3549
  %3551 = vmatprep.subr.mxu0 0.0
  %v3552 = vand.u32 %v3152, 4294901760
  %v3553 = vsub.f32 %v3152, %v3552
  %3554 = vmatpush1.msra.mxu0 %v3553
  %3555 = vmatprep.subr.mxu0 0.0
  %v3556 = vand.u32 %v3150, 4294901760
  %v3557 = vsub.f32 %v3150, %v3556
  %3558 = vmatpush1.msra.mxu0 %v3557
  %3559 = vmatprep.subr.mxu0 0.0
  %3560 = vmatpush2.msra.mxu0 0.0
  %3561 = vmatprep.subr.mxu0 0.0
  %3562 = vmatpush2.msra.mxu0 0.0
  %3563 = vmatprep.subr.mxu0 0.0
  %3564 = vmatpush2.msra.mxu0 0.0
  %3565 = vmatprep.subr.mxu0 0.0
  %3566 = vmatpush2.msra.mxu0 0.0
  %3567 = vmatprep.subr.mxu0 0.0
  %3568 = vmatpush2.msra.mxu0 0.0
  %3569 = vmatprep.subr.mxu0 0.0
  %3570 = vmatpush2.msra.mxu0 0.0
  %3571 = vmatprep.subr.mxu0 0.0
  %3572 = vmatpush2.msra.mxu0 0.0
  %3573 = vmatprep.subr.mxu0 0.0
  %3574 = vmatpush2.msra.mxu0 0.0
  %3575 = vmatprep.subr.mxu0 0.0
  %3576 = vmatpush2.msra.mxu0 0.0
  %3577 = vmatprep.subr.mxu0 0.0
  %3578 = vmatpush2.msra.mxu0 0.0
  %3579 = vmatprep.subr.mxu0 0.0
  %3580 = vmatpush2.msra.mxu0 0.0
  %3581 = vmatprep.subr.mxu0 0.0
  %3582 = vmatpush2.msra.mxu0 0.0
  %3583 = vmatprep.subr.mxu0 0.0
  %3584 = vmatpush2.msra.mxu0 0.0
  %3585 = vmatprep.subr.mxu0 0.0
  %3586 = vmatpush2.msra.mxu0 0.0
  %3587 = vmatprep.subr.mxu0 0.0
  %3588 = vmatpush2.msra.mxu0 0.0
  %3589 = vmatprep.subr.mxu0 0.0
  %3590 = vmatpush2.msra.mxu0 0.0
  %3591 = vmatprep.mubr.f32.mxu0 0.0
  %v3592 = vand.u32 %v3214, 4294901760
  %v3593 = vsub.f32 %v3214, %v3592
  %3594 = vmatmul.mubr.f32.gmra.mxu0 %v3593
  %v3595 = vpop.f32.mrf.mxu0
  %v3596 = vadd.f32 %v3474, %v3595
  %v3597 = vpop.f32.mrf.mxu0
  %3598 = vmatprep.mubr.f32.mxu0 0.0
  %v3599 = vand.u32 %v3217, 4294901760
  %v3600 = vsub.f32 %v3217, %v3599
  %3601 = vmatmul.mubr.f32.gmra.mxu0 %v3600
  %v3602 = vpop.f32.mrf.mxu0
  %v3603 = vadd.f32 %v3480, %v3602
  %v3604 = vpop.f32.mrf.mxu0
  %3605 = vmatprep.mubr.f32.mxu0 0.0
  %v3606 = vand.u32 %v3220, 4294901760
  %v3607 = vsub.f32 %v3220, %v3606
  %3608 = vmatmul.mubr.f32.gmra.mxu0 %v3607
  %v3609 = vpop.f32.mrf.mxu0
  %v3610 = vadd.f32 %v3486, %v3609
  %v3611 = vpop.f32.mrf.mxu0
  %3612 = vmatprep.mubr.f32.mxu0 0.0
  %v3613 = vand.u32 %v3223, 4294901760
  %v3614 = vsub.f32 %v3223, %v3613
  %3615 = vmatmul.mubr.f32.gmra.mxu0 %v3614
  %v3616 = vpop.f32.mrf.mxu0
  %v3617 = vadd.f32 %v3492, %v3616
  %v3618 = vpop.f32.mrf.mxu0
  %3619 = vmatprep.mubr.f32.mxu0 0.0
  %v3620 = vand.u32 %v3226, 4294901760
  %v3621 = vsub.f32 %v3226, %v3620
  %3622 = vmatmul.mubr.f32.gmra.mxu0 %v3621
  %v3623 = vpop.f32.mrf.mxu0
  %v3624 = vadd.f32 %v3498, %v3623
  %v3625 = vpop.f32.mrf.mxu0
  %3626 = vmatprep.mubr.f32.mxu0 0.0
  %v3627 = vand.u32 %v3229, 4294901760
  %v3628 = vsub.f32 %v3229, %v3627
  %3629 = vmatmul.mubr.f32.gmra.mxu0 %v3628
  %v3630 = vpop.f32.mrf.mxu0
  %v3631 = vadd.f32 %v3504, %v3630
  %v3632 = vpop.f32.mrf.mxu0
  %3633 = vmatprep.mubr.f32.mxu0 0.0
  %v3634 = vand.u32 %v3232, 4294901760
  %v3635 = vsub.f32 %v3232, %v3634
  %3636 = vmatmul.mubr.f32.gmra.mxu0 %v3635
  %v3637 = vpop.f32.mrf.mxu0
  %v3638 = vadd.f32 %v3510, %v3637
  %v3639 = vpop.f32.mrf.mxu0
  %3640 = vmatprep.mubr.f32.mxu0 0.0
  %v3641 = vand.u32 %v3235, 4294901760
  %v3642 = vsub.f32 %v3235, %v3641
  %3643 = vmatmul.mubr.f32.gmra.mxu0 %v3642
  %v3644 = vpop.f32.mrf.mxu0
  %v3645 = vadd.f32 %v3516, %v3644
  %v3646 = vpop.f32.mrf.mxu0
  %3647 = vdwg.mxu0
  %3648 = vmatprep.subr.mxu0 0.0
  %3649 = vmatpush1.msra.mxu0 0.0
  %3650 = vmatprep.subr.mxu0 0.0
  %3651 = vmatpush1.msra.mxu0 0.0
  %3652 = vmatprep.subr.mxu0 0.0
  %3653 = vmatpush1.msra.mxu0 0.0
  %3654 = vmatprep.subr.mxu0 0.0
  %3655 = vmatpush1.msra.mxu0 0.0
  %3656 = vmatprep.subr.mxu0 0.0
  %3657 = vmatpush1.msra.mxu0 0.0
  %3658 = vmatprep.subr.mxu0 0.0
  %3659 = vmatpush1.msra.mxu0 0.0
  %3660 = vmatprep.subr.mxu0 0.0
  %3661 = vmatpush1.msra.mxu0 0.0
  %3662 = vmatprep.subr.mxu0 0.0
  %3663 = vmatpush1.msra.mxu0 0.0
  %3664 = vmatprep.subr.mxu0 0.0
  %3665 = vmatpush1.msra.mxu0 0.0
  %3666 = vmatprep.subr.mxu0 0.0
  %3667 = vmatpush1.msra.mxu0 0.0
  %3668 = vmatprep.subr.mxu0 0.0
  %3669 = vmatpush1.msra.mxu0 0.0
  %3670 = vmatprep.subr.mxu0 0.0
  %3671 = vmatpush1.msra.mxu0 0.0
  %3672 = vmatprep.subr.mxu0 0.0
  %v3673 = vand.u32 %v3156, 4294901760
  %3674 = vmatpush1.msra.mxu0 %v3673
  %3675 = vmatprep.subr.mxu0 0.0
  %v3676 = vand.u32 %v3154, 4294901760
  %3677 = vmatpush1.msra.mxu0 %v3676
  %3678 = vmatprep.subr.mxu0 0.0
  %v3679 = vand.u32 %v3152, 4294901760
  %3680 = vmatpush1.msra.mxu0 %v3679
  %3681 = vmatprep.subr.mxu0 0.0
  %v3682 = vand.u32 %v3150, 4294901760
  %3683 = vmatpush1.msra.mxu0 %v3682
  %3684 = vmatprep.subr.mxu0 0.0
  %3685 = vmatpush2.msra.mxu0 0.0
  %3686 = vmatprep.subr.mxu0 0.0
  %3687 = vmatpush2.msra.mxu0 0.0
  %3688 = vmatprep.subr.mxu0 0.0
  %3689 = vmatpush2.msra.mxu0 0.0
  %3690 = vmatprep.subr.mxu0 0.0
  %3691 = vmatpush2.msra.mxu0 0.0
  %3692 = vmatprep.subr.mxu0 0.0
  %3693 = vmatpush2.msra.mxu0 0.0
  %3694 = vmatprep.subr.mxu0 0.0
  %3695 = vmatpush2.msra.mxu0 0.0
  %3696 = vmatprep.subr.mxu0 0.0
  %3697 = vmatpush2.msra.mxu0 0.0
  %3698 = vmatprep.subr.mxu0 0.0
  %3699 = vmatpush2.msra.mxu0 0.0
  %3700 = vmatprep.subr.mxu0 0.0
  %3701 = vmatpush2.msra.mxu0 0.0
  %3702 = vmatprep.subr.mxu0 0.0
  %3703 = vmatpush2.msra.mxu0 0.0
  %3704 = vmatprep.subr.mxu0 0.0
  %3705 = vmatpush2.msra.mxu0 0.0
  %3706 = vmatprep.subr.mxu0 0.0
  %3707 = vmatpush2.msra.mxu0 0.0
  %3708 = vmatprep.subr.mxu0 0.0
  %3709 = vmatpush2.msra.mxu0 0.0
  %3710 = vmatprep.subr.mxu0 0.0
  %3711 = vmatpush2.msra.mxu0 0.0
  %3712 = vmatprep.subr.mxu0 0.0
  %3713 = vmatpush2.msra.mxu0 0.0
  %3714 = vmatprep.subr.mxu0 0.0
  %3715 = vmatpush2.msra.mxu0 0.0
  %3716 = vmatprep.mubr.f32.mxu0 0.0
  %v3717 = vand.u32 %v3214, 4294901760
  %v3718 = vsub.f32 %v3214, %v3717
  %v3719 = vand.u32 %v3718, 4294901760
  %3720 = vmatmul.mubr.f32.gmra.mxu0 %v3719
  %v3721 = vpop.f32.mrf.mxu0
  %v3722 = vadd.f32 %v3596, %v3721
  %v3723 = vpop.f32.mrf.mxu0
  %3724 = vmatprep.mubr.f32.mxu0 0.0
  %v3725 = vand.u32 %v3217, 4294901760
  %v3726 = vsub.f32 %v3217, %v3725
  %v3727 = vand.u32 %v3726, 4294901760
  %3728 = vmatmul.mubr.f32.gmra.mxu0 %v3727
  %v3729 = vpop.f32.mrf.mxu0
  %v3730 = vadd.f32 %v3603, %v3729
  %v3731 = vpop.f32.mrf.mxu0
  %3732 = vmatprep.mubr.f32.mxu0 0.0
  %v3733 = vand.u32 %v3220, 4294901760
  %v3734 = vsub.f32 %v3220, %v3733
  %v3735 = vand.u32 %v3734, 4294901760
  %3736 = vmatmul.mubr.f32.gmra.mxu0 %v3735
  %v3737 = vpop.f32.mrf.mxu0
  %v3738 = vadd.f32 %v3610, %v3737
  %v3739 = vpop.f32.mrf.mxu0
  %3740 = vmatprep.mubr.f32.mxu0 0.0
  %v3741 = vand.u32 %v3223, 4294901760
  %v3742 = vsub.f32 %v3223, %v3741
  %v3743 = vand.u32 %v3742, 4294901760
  %3744 = vmatmul.mubr.f32.gmra.mxu0 %v3743
  %v3745 = vpop.f32.mrf.mxu0
  %v3746 = vadd.f32 %v3617, %v3745
  %v3747 = vpop.f32.mrf.mxu0
  %3748 = vmatprep.mubr.f32.mxu0 0.0
  %v3749 = vand.u32 %v3226, 4294901760
  %v3750 = vsub.f32 %v3226, %v3749
  %v3751 = vand.u32 %v3750, 4294901760
  %3752 = vmatmul.mubr.f32.gmra.mxu0 %v3751
  %v3753 = vpop.f32.mrf.mxu0
  %v3754 = vadd.f32 %v3624, %v3753
  %v3755 = vpop.f32.mrf.mxu0
  %3756 = vmatprep.mubr.f32.mxu0 0.0
  %v3757 = vand.u32 %v3229, 4294901760
  %v3758 = vsub.f32 %v3229, %v3757
  %v3759 = vand.u32 %v3758, 4294901760
  %3760 = vmatmul.mubr.f32.gmra.mxu0 %v3759
  %v3761 = vpop.f32.mrf.mxu0
  %v3762 = vadd.f32 %v3631, %v3761
  %v3763 = vpop.f32.mrf.mxu0
  %3764 = vmatprep.mubr.f32.mxu0 0.0
  %v3765 = vand.u32 %v3232, 4294901760
  %v3766 = vsub.f32 %v3232, %v3765
  %v3767 = vand.u32 %v3766, 4294901760
  %3768 = vmatmul.mubr.f32.gmra.mxu0 %v3767
  %v3769 = vpop.f32.mrf.mxu0
  %v3770 = vadd.f32 %v3638, %v3769
  %v3771 = vpop.f32.mrf.mxu0
  %3772 = vmatprep.mubr.f32.mxu0 0.0
  %v3773 = vand.u32 %v3235, 4294901760
  %v3774 = vsub.f32 %v3235, %v3773
  %v3775 = vand.u32 %v3774, 4294901760
  %3776 = vmatmul.mubr.f32.gmra.mxu0 %v3775
  %v3777 = vpop.f32.mrf.mxu0
  %v3778 = vadd.f32 %v3645, %v3777
  %v3779 = vpop.f32.mrf.mxu0
  %3780 = vdwg.mxu0
  %3781 = vmatprep.subr.mxu0 0.0
  %3782 = vmatpush1.msra.mxu0 0.0
  %3783 = vmatprep.subr.mxu0 0.0
  %3784 = vmatpush1.msra.mxu0 0.0
  %3785 = vmatprep.subr.mxu0 0.0
  %3786 = vmatpush1.msra.mxu0 0.0
  %3787 = vmatprep.subr.mxu0 0.0
  %3788 = vmatpush1.msra.mxu0 0.0
  %3789 = vmatprep.subr.mxu0 0.0
  %3790 = vmatpush1.msra.mxu0 0.0
  %3791 = vmatprep.subr.mxu0 0.0
  %3792 = vmatpush1.msra.mxu0 0.0
  %3793 = vmatprep.subr.mxu0 0.0
  %3794 = vmatpush1.msra.mxu0 0.0
  %3795 = vmatprep.subr.mxu0 0.0
  %3796 = vmatpush1.msra.mxu0 0.0
  %3797 = vmatprep.subr.mxu0 0.0
  %3798 = vmatpush1.msra.mxu0 0.0
  %3799 = vmatprep.subr.mxu0 0.0
  %3800 = vmatpush1.msra.mxu0 0.0
  %3801 = vmatprep.subr.mxu0 0.0
  %3802 = vmatpush1.msra.mxu0 0.0
  %3803 = vmatprep.subr.mxu0 0.0
  %3804 = vmatpush1.msra.mxu0 0.0
  %3805 = vmatprep.subr.mxu0 0.0
  %v3806 = vand.u32 %v3156, 4294901760
  %v3807 = vsub.f32 %v3156, %v3806
  %v3808 = vand.u32 %v3807, 4294901760
  %3809 = vmatpush1.msra.mxu0 %v3808
  %3810 = vmatprep.subr.mxu0 0.0
  %v3811 = vand.u32 %v3154, 4294901760
  %v3812 = vsub.f32 %v3154, %v3811
  %v3813 = vand.u32 %v3812, 4294901760
  %3814 = vmatpush1.msra.mxu0 %v3813
  %3815 = vmatprep.subr.mxu0 0.0
  %v3816 = vand.u32 %v3152, 4294901760
  %v3817 = vsub.f32 %v3152, %v3816
  %v3818 = vand.u32 %v3817, 4294901760
  %3819 = vmatpush1.msra.mxu0 %v3818
  %3820 = vmatprep.subr.mxu0 0.0
  %v3821 = vand.u32 %v3150, 4294901760
  %v3822 = vsub.f32 %v3150, %v3821
  %v3823 = vand.u32 %v3822, 4294901760
  %3824 = vmatpush1.msra.mxu0 %v3823
  %3825 = vmatprep.subr.mxu0 0.0
  %3826 = vmatpush2.msra.mxu0 0.0
  %3827 = vmatprep.subr.mxu0 0.0
  %3828 = vmatpush2.msra.mxu0 0.0
  %3829 = vmatprep.subr.mxu0 0.0
  %3830 = vmatpush2.msra.mxu0 0.0
  %3831 = vmatprep.subr.mxu0 0.0
  %3832 = vmatpush2.msra.mxu0 0.0
  %3833 = vmatprep.subr.mxu0 0.0
  %3834 = vmatpush2.msra.mxu0 0.0
  %3835 = vmatprep.subr.mxu0 0.0
  %3836 = vmatpush2.msra.mxu0 0.0
  %3837 = vmatprep.subr.mxu0 0.0
  %3838 = vmatpush2.msra.mxu0 0.0
  %3839 = vmatprep.subr.mxu0 0.0
  %3840 = vmatpush2.msra.mxu0 0.0
  %3841 = vmatprep.subr.mxu0 0.0
  %3842 = vmatpush2.msra.mxu0 0.0
  %3843 = vmatprep.subr.mxu0 0.0
  %3844 = vmatpush2.msra.mxu0 0.0
  %3845 = vmatprep.subr.mxu0 0.0
  %3846 = vmatpush2.msra.mxu0 0.0
  %3847 = vmatprep.subr.mxu0 0.0
  %3848 = vmatpush2.msra.mxu0 0.0
  %3849 = vmatprep.subr.mxu0 0.0
  %3850 = vmatpush2.msra.mxu0 0.0
  %3851 = vmatprep.subr.mxu0 0.0
  %3852 = vmatpush2.msra.mxu0 0.0
  %3853 = vmatprep.subr.mxu0 0.0
  %3854 = vmatpush2.msra.mxu0 0.0
  %3855 = vmatprep.subr.mxu0 0.0
  %3856 = vmatpush2.msra.mxu0 0.0
  %3857 = vmatprep.mubr.f32.mxu0 0.0
  %v3858 = vand.u32 %v3214, 4294901760
  %3859 = vmatmul.mubr.f32.gmra.mxu0 %v3858
  %v3860 = vpop.f32.mrf.mxu0
  %v3861 = vadd.f32 %v3722, %v3860
  %v3862 = vpop.f32.mrf.mxu0
  %3863 = vmatprep.mubr.f32.mxu0 0.0
  %v3864 = vand.u32 %v3217, 4294901760
  %3865 = vmatmul.mubr.f32.gmra.mxu0 %v3864
  %v3866 = vpop.f32.mrf.mxu0
  %v3867 = vadd.f32 %v3730, %v3866
  %v3868 = vpop.f32.mrf.mxu0
  %3869 = vmatprep.mubr.f32.mxu0 0.0
  %v3870 = vand.u32 %v3220, 4294901760
  %3871 = vmatmul.mubr.f32.gmra.mxu0 %v3870
  %v3872 = vpop.f32.mrf.mxu0
  %v3873 = vadd.f32 %v3738, %v3872
  %v3874 = vpop.f32.mrf.mxu0
  %3875 = vmatprep.mubr.f32.mxu0 0.0
  %v3876 = vand.u32 %v3223, 4294901760
  %3877 = vmatmul.mubr.f32.gmra.mxu0 %v3876
  %v3878 = vpop.f32.mrf.mxu0
  %v3879 = vadd.f32 %v3746, %v3878
  %v3880 = vpop.f32.mrf.mxu0
  %3881 = vmatprep.mubr.f32.mxu0 0.0
  %v3882 = vand.u32 %v3226, 4294901760
  %3883 = vmatmul.mubr.f32.gmra.mxu0 %v3882
  %v3884 = vpop.f32.mrf.mxu0
  %v3885 = vadd.f32 %v3754, %v3884
  %v3886 = vpop.f32.mrf.mxu0
  %3887 = vmatprep.mubr.f32.mxu0 0.0
  %v3888 = vand.u32 %v3229, 4294901760
  %3889 = vmatmul.mubr.f32.gmra.mxu0 %v3888
  %v3890 = vpop.f32.mrf.mxu0
  %v3891 = vadd.f32 %v3762, %v3890
  %v3892 = vpop.f32.mrf.mxu0
  %3893 = vmatprep.mubr.f32.mxu0 0.0
  %v3894 = vand.u32 %v3232, 4294901760
  %3895 = vmatmul.mubr.f32.gmra.mxu0 %v3894
  %v3896 = vpop.f32.mrf.mxu0
  %v3897 = vadd.f32 %v3770, %v3896
  %v3898 = vpop.f32.mrf.mxu0
  %3899 = vmatprep.mubr.f32.mxu0 0.0
  %v3900 = vand.u32 %v3235, 4294901760
  %3901 = vmatmul.mubr.f32.gmra.mxu0 %v3900
  %v3902 = vpop.f32.mrf.mxu0
  %v3903 = vadd.f32 %v3778, %v3902
  %v3904 = vpop.f32.mrf.mxu0
  %3905 = vdwg.mxu0
  %3906 = vmatprep.subr.mxu0 0.0
  %3907 = vmatpush1.msra.mxu0 0.0
  %3908 = vmatprep.subr.mxu0 0.0
  %3909 = vmatpush1.msra.mxu0 0.0
  %3910 = vmatprep.subr.mxu0 0.0
  %3911 = vmatpush1.msra.mxu0 0.0
  %3912 = vmatprep.subr.mxu0 0.0
  %3913 = vmatpush1.msra.mxu0 0.0
  %3914 = vmatprep.subr.mxu0 0.0
  %3915 = vmatpush1.msra.mxu0 0.0
  %3916 = vmatprep.subr.mxu0 0.0
  %3917 = vmatpush1.msra.mxu0 0.0
  %3918 = vmatprep.subr.mxu0 0.0
  %3919 = vmatpush1.msra.mxu0 0.0
  %3920 = vmatprep.subr.mxu0 0.0
  %3921 = vmatpush1.msra.mxu0 0.0
  %3922 = vmatprep.subr.mxu0 0.0
  %3923 = vmatpush1.msra.mxu0 0.0
  %3924 = vmatprep.subr.mxu0 0.0
  %3925 = vmatpush1.msra.mxu0 0.0
  %3926 = vmatprep.subr.mxu0 0.0
  %3927 = vmatpush1.msra.mxu0 0.0
  %3928 = vmatprep.subr.mxu0 0.0
  %3929 = vmatpush1.msra.mxu0 0.0
  %3930 = vmatprep.subr.mxu0 0.0
  %v3931 = vand.u32 %v3156, 4294901760
  %3932 = vmatpush1.msra.mxu0 %v3931
  %3933 = vmatprep.subr.mxu0 0.0
  %v3934 = vand.u32 %v3154, 4294901760
  %3935 = vmatpush1.msra.mxu0 %v3934
  %3936 = vmatprep.subr.mxu0 0.0
  %v3937 = vand.u32 %v3152, 4294901760
  %3938 = vmatpush1.msra.mxu0 %v3937
  %3939 = vmatprep.subr.mxu0 0.0
  %v3940 = vand.u32 %v3150, 4294901760
  %3941 = vmatpush1.msra.mxu0 %v3940
  %3942 = vmatprep.subr.mxu0 0.0
  %3943 = vmatpush2.msra.mxu0 0.0
  %3944 = vmatprep.subr.mxu0 0.0
  %3945 = vmatpush2.msra.mxu0 0.0
  %3946 = vmatprep.subr.mxu0 0.0
  %3947 = vmatpush2.msra.mxu0 0.0
  %3948 = vmatprep.subr.mxu0 0.0
  %3949 = vmatpush2.msra.mxu0 0.0
  %3950 = vmatprep.subr.mxu0 0.0
  %3951 = vmatpush2.msra.mxu0 0.0
  %3952 = vmatprep.subr.mxu0 0.0
  %3953 = vmatpush2.msra.mxu0 0.0
  %3954 = vmatprep.subr.mxu0 0.0
  %3955 = vmatpush2.msra.mxu0 0.0
  %3956 = vmatprep.subr.mxu0 0.0
  %3957 = vmatpush2.msra.mxu0 0.0
  %3958 = vmatprep.subr.mxu0 0.0
  %3959 = vmatpush2.msra.mxu0 0.0
  %3960 = vmatprep.subr.mxu0 0.0
  %3961 = vmatpush2.msra.mxu0 0.0
  %3962 = vmatprep.subr.mxu0 0.0
  %3963 = vmatpush2.msra.mxu0 0.0
  %3964 = vmatprep.subr.mxu0 0.0
  %3965 = vmatpush2.msra.mxu0 0.0
  %3966 = vmatprep.subr.mxu0 0.0
  %3967 = vmatpush2.msra.mxu0 0.0
  %3968 = vmatprep.subr.mxu0 0.0
  %3969 = vmatpush2.msra.mxu0 0.0
  %3970 = vmatprep.subr.mxu0 0.0
  %3971 = vmatpush2.msra.mxu0 0.0
  %3972 = vmatprep.subr.mxu0 0.0
  %3973 = vmatpush2.msra.mxu0 0.0
  %3974 = vmatprep.mubr.f32.mxu0 0.0
  %v3975 = vand.u32 %v3214, 4294901760
  %3976 = vmatmul.mubr.f32.gmra.mxu0 %v3975
  %v3977 = vpop.f32.mrf.mxu0
  %v3978 = vadd.f32 %v3861, %v3977
  %v3979 = vpop.f32.mrf.mxu0
  %3980 = vmatprep.mubr.f32.mxu0 0.0
  %v3981 = vand.u32 %v3217, 4294901760
  %3982 = vmatmul.mubr.f32.gmra.mxu0 %v3981
  %v3983 = vpop.f32.mrf.mxu0
  %v3984 = vadd.f32 %v3867, %v3983
  %v3985 = vpop.f32.mrf.mxu0
  %3986 = vmatprep.mubr.f32.mxu0 0.0
  %v3987 = vand.u32 %v3220, 4294901760
  %3988 = vmatmul.mubr.f32.gmra.mxu0 %v3987
  %v3989 = vpop.f32.mrf.mxu0
  %v3990 = vadd.f32 %v3873, %v3989
  %v3991 = vpop.f32.mrf.mxu0
  %3992 = vmatprep.mubr.f32.mxu0 0.0
  %v3993 = vand.u32 %v3223, 4294901760
  %3994 = vmatmul.mubr.f32.gmra.mxu0 %v3993
  %v3995 = vpop.f32.mrf.mxu0
  %v3996 = vadd.f32 %v3879, %v3995
  %v3997 = vpop.f32.mrf.mxu0
  %3998 = vmatprep.mubr.f32.mxu0 0.0
  %v3999 = vand.u32 %v3226, 4294901760
  %4000 = vmatmul.mubr.f32.gmra.mxu0 %v3999
  %v4001 = vpop.f32.mrf.mxu0
  %v4002 = vadd.f32 %v3885, %v4001
  %v4003 = vpop.f32.mrf.mxu0
  %4004 = vmatprep.mubr.f32.mxu0 0.0
  %v4005 = vand.u32 %v3229, 4294901760
  %4006 = vmatmul.mubr.f32.gmra.mxu0 %v4005
  %v4007 = vpop.f32.mrf.mxu0
  %v4008 = vadd.f32 %v3891, %v4007
  %v4009 = vpop.f32.mrf.mxu0
  %4010 = vmatprep.mubr.f32.mxu0 0.0
  %v4011 = vand.u32 %v3232, 4294901760
  %4012 = vmatmul.mubr.f32.gmra.mxu0 %v4011
  %v4013 = vpop.f32.mrf.mxu0
  %v4014 = vadd.f32 %v3897, %v4013
  %v4015 = vpop.f32.mrf.mxu0
  %4016 = vmatprep.mubr.f32.mxu0 0.0
  %v4017 = vand.u32 %v3235, 4294901760
  %4018 = vmatmul.mubr.f32.gmra.mxu0 %v4017
  %v4019 = vpop.f32.mrf.mxu0
  %v4020 = vadd.f32 %v3903, %v4019
  %v4021 = vpop.f32.mrf.mxu0
  %4022 = vdwg.mxu0
  %v4023 = vxor.u32 %v3978, 2147483648
  %v4024 = vxor.u32 %v3984, 2147483648
  %v4025 = vxor.u32 %v3990, 2147483648
  %v4026 = vxor.u32 %v3996, 2147483648
  %v4027 = vxor.u32 %v4002, 2147483648
  %v4028 = vxor.u32 %v4008, 2147483648
  %v4029 = vxor.u32 %v4014, 2147483648
  %v4030 = vxor.u32 %v4020, 2147483648
  %v4031 = vmul.f32 %v4023, 1.442695
  %v4032 = vpow.pop %v4031
  %v4033 = vmul.f32 %v4024, 1.442695
  %v4034 = vpow.pop %v4033
  %v4035 = vmul.f32 %v4025, 1.442695
  %v4036 = vpow.pop %v4035
  %v4037 = vmul.f32 %v4026, 1.442695
  %v4038 = vpow.pop %v4037
  %v4039 = vmul.f32 %v4027, 1.442695
  %v4040 = vpow.pop %v4039
  %v4041 = vmul.f32 %v4028, 1.442695
  %v4042 = vpow.pop %v4041
  %v4043 = vmul.f32 %v4029, 1.442695
  %v4044 = vpow.pop %v4043
  %v4045 = vmul.f32 %v4030, 1.442695
  %v4046 = vpow.pop %v4045
  %v4047 = vadd.f32 %v4032, 1.0
  %v4048 = vadd.f32 %v4034, 1.0
  %v4049 = vadd.f32 %v4036, 1.0
  %v4050 = vadd.f32 %v4038, 1.0
  %v4051 = vadd.f32 %v4040, 1.0
  %v4052 = vadd.f32 %v4042, 1.0
  %v4053 = vadd.f32 %v4044, 1.0
  %v4054 = vadd.f32 %v4046, 1.0
  %v4055 = vrcp.pop %v4047
  %v4056 = vmul.f32 1.0, %v4055
  %v4057 = vrcp.pop %v4048
  %v4058 = vmul.f32 1.0, %v4057
  %v4059 = vrcp.pop %v4049
  %v4060 = vmul.f32 1.0, %v4059
  %v4061 = vrcp.pop %v4050
  %v4062 = vmul.f32 1.0, %v4061
  %v4063 = vrcp.pop %v4051
  %v4064 = vmul.f32 1.0, %v4063
  %v4065 = vrcp.pop %v4052
  %v4066 = vmul.f32 1.0, %v4065
  %v4067 = vrcp.pop %v4053
  %v4068 = vmul.f32 1.0, %v4067
  %v4069 = vrcp.pop %v4054
  %v4070 = vmul.f32 1.0, %v4069
  %4071 = vst [vmem:[%s13] sm:$0xff] %v4056
  %4072 = vst [vmem:[%s13 + $0x8] sm:$0xff] %v4058
  %4073 = vst [vmem:[%s13 + $0x10] sm:$0xff] %v4060
  %4074 = vst [vmem:[%s13 + $0x18] sm:$0xff] %v4062
  %4075 = vst [vmem:[%s13 + $0x20] sm:$0xff] %v4064
  %4076 = vst [vmem:[%s13 + $0x28] sm:$0xff] %v4066
  %4077 = vst [vmem:[%s13 + $0x30] sm:$0xff] %v4068
  %4078 = vst [vmem:[%s13 + $0x38] sm:$0xff] %v4070
  // Predicated region
  $region54: #{autoencoder_forward.1} parent=0 // pred_check
    _
  $region55: #{autoencoder_forward.1} parent=0 // pred_check_branch
    %4080 = sbr.rel (0) target = $region57
  $region56: #{autoencoder_forward.1} parent=0 // pred_region
    _
  $region57: #{autoencoder_forward.1} parent=0 // pred_fallthru
    _
  // Predicated region
  $region58: #{autoencoder_forward.1} parent=0 // pred_check
    _
  $region59: #{autoencoder_forward.1} parent=0 // pred_check_branch
    %4082 = sbr.rel (0) target = $region61
  $region60: #{autoencoder_forward.1} parent=0 // pred_region
    _
  $region61: #{autoencoder_forward.1} parent=0 // pred_fallthru
    _
  // Predicated region
  $region62: #{autoencoder_forward.1} parent=0 // pred_check
    _
  $region63: #{autoencoder_forward.1} parent=0 // pred_check_branch
    %4084 = sbr.rel (0) target = $region65
  $region64: #{autoencoder_forward.1} parent=0 // pred_region
    _
  $region65: #{autoencoder_forward.1} parent=0 // pred_fallthru
    _
  // Predicated region
  $region66: #{autoencoder_forward.1} parent=0 // pred_check
    _
  $region67: #{autoencoder_forward.1} parent=0 // pred_check_branch
    %4086 = sbr.rel (0) target = $region69
  $region68: #{autoencoder_forward.1} parent=0 // pred_region
    _
  $region69: #{autoencoder_forward.1} parent=0 // pred_fallthru
    _

</llo_original>
